<compile_context>
chip_gen: v7x
topology: tpu7x:2x2x1
jax: 0.10.0
libtpu: 0.0.40
codegen_flags: <defaults>
</compile_context>

<pallas_src>
import functools

import jax
import jax.numpy as jnp
from jax.experimental import pallas as pl
from jax.experimental.pallas import tpu as pltpu

NEG_SLOPE = 0.01          # F.leaky_relu default
BN_EPS = 1e-5             # nn.BatchNorm1d default


def _tpu_vmem_bytes():
    try:
        return int(pltpu.get_tpu_info().vmem_capacity_bytes)
    except Exception:
        return 64 * 1024 * 1024          # conservative (v7x-sized) fallback


_VMEM_BYTES = _tpu_vmem_bytes()
_SMALL_VMEM = _VMEM_BYTES < 100 * 1024 * 1024        # v7x: 64 MiB per TensorCore
_ROW_CAP = 512 if _SMALL_VMEM else 1024              # conv / matmul passes
_EW_ROW_CAP = 1024 if _SMALL_VMEM else 2048          # pure elementwise passes
_SPA_BUDGET = (4 if _SMALL_VMEM else 8) * 1024 * 1024
_VMEM_LIMIT = (32 if _SMALL_VMEM else 64) * 1024 * 1024


# ----------------------------------------------------------------------------
# tiling helpers
# ----------------------------------------------------------------------------
def _pick_div(n, cap, pred=None):
    """Largest divisor of n that is <= cap and satisfies pred, or None."""
    best = None
    for t in range(1, min(n, cap) + 1):
        if n % t == 0 and (pred is None or pred(t)):
            best = t
    return best


def _prefer_multi(n, cap, pred=None):
    """Largest valid divisor tile of n, preferring >= 2 grid steps (v7x megacore)."""
    if n > 1:
        t = _pick_div(n, min(cap, n // 2), pred)
        if t is not None:
            return t
    t = _pick_div(n, cap, pred)
    # Whole-array fallback is always layout-legal; only hit for awkward factorizations.
    return t if t is not None else n


def _conv_row_tile(rows_total, T, cap):
    # whole sequences per tile (rows % T == 0) and bf16-friendly sublane multiple
    return _prefer_multi(rows_total, cap, lambda v: v % T == 0 and v % 16 == 0)


def _row_tile(rows_total, cap):
    return _prefer_multi(rows_total, cap, lambda v: v % 16 == 0)


def _graph_tile(num_graphs, n_nodes, hidden, out_dim, cap_rows, budget_bytes):
    # constrain by the (G,N,N) adjacency working set, not just rows
    per_graph = (2 * n_nodes * n_nodes * 4            # adj + one live f32 temp
                 + 3 * n_nodes * hidden * 2           # x, hb, msg (bf16)
                 + n_nodes * (hidden + out_dim) * 4)  # f32 intermediates
    cap = max(1, min(cap_rows // max(n_nodes, 1), budget_bytes // max(per_graph, 1)))
    return _prefer_multi(num_graphs, cap)


def _bn_affine(stats, count, gamma, beta):
    """Fold global training-mode BN stats (per-tile [sum | sumsq]) into a per-channel affine."""
    # NOTE: single-pass sum/sumsq in f32 can cancel for very large counts / off-center data;
    # fine at these scales (review-acknowledged).
    C = stats.shape[-1] // 2
    tot = jnp.sum(stats[:, 0, :], axis=0, keepdims=True)        # (1, 2C)
    s, ss = tot[:, :C], tot[:, C:]
    mean = s / count
    var = jnp.maximum(ss / count - mean * mean, 0.0)
    scale = gamma * jax.lax.rsqrt(var + BN_EPS)
    shift = beta - mean * scale
    return scale, shift


# ----------------------------------------------------------------------------
# Kernel 1: (optional BN-affine + ReLU) -> Conv1d(k=3, pad=1, no bias) via one
#           im2col MXU matmul, plus per-tile BN partial statistics.
# Rows are (sequence, time) flattened; each tile holds whole sequences.
# ----------------------------------------------------------------------------
def _conv_stats_kernel(x_ref, sc_ref, sh_ref, w_ref, y_ref, st_ref, *, T, fuse_bn_relu):
    R, C = x_ref.shape
    H = w_ref.shape[1]

    x = x_ref[...].astype(jnp.float32)
    if fuse_bn_relu:
        x = jnp.maximum(x * sc_ref[...] + sh_ref[...], 0.0)      # BN(prev layer, global) + ReLU

    # Conv taps assembled in vregs (no VMEM scratch round trip): sublane rolls + a (R,1) row mask.
    # Tiles always hold whole sequences (R % T == 0), so roll wrap-around only lands on masked rows.
    tmod = jax.lax.broadcasted_iota(jnp.int32, (R, 1), 0) % T
    left = jnp.where(tmod == 0, 0.0, pltpu.roll(x, shift=1, axis=0))           # x[t-1]
    right = jnp.where(tmod == T - 1, 0.0, pltpu.roll(x, shift=R - 1, axis=0))  # x[t+1]
    xcat = jnp.concatenate([left, x, right], axis=1).astype(jnp.bfloat16)      # (R, 3C)

    acc = jnp.dot(xcat, w_ref[...], preferred_element_type=jnp.float32)        # (R, H) f32 accum
    y_ref[...] = acc.astype(y_ref.dtype)                                       # bf16 activation out

    # per-tile partial sums for the *global* BatchNorm statistics (one lane-concatenated store)
    s = jnp.sum(acc, axis=0, keepdims=True)
    ss = jnp.sum(acc * acc, axis=0, keepdims=True)
    st_ref[...] = jnp.concatenate([s, ss], axis=1).reshape(1, 1, 2 * H)


def temporal_conv_bn_stats(x2, w_packed, T, scale=None, shift=None):
    R, C = x2.shape
    H = w_packed.shape[1]
    rows = _conv_row_tile(R, T, _ROW_CAP)
    nt = R // rows

    fuse = scale is not None
    if not fuse:
        scale = jnp.ones((1, C), jnp.float32)
        shift = jnp.zeros((1, C), jnp.float32)

    kernel = functools.partial(_conv_stats_kernel, T=T, fuse_bn_relu=fuse)
    # TODO(synk): once DMA-bound, sweep pipeline_mode=pl.Buffered(3) on the x/y BlockSpecs.
    z, st = pl.pallas_call(
        kernel,
        out_shape=(jax.ShapeDtypeStruct((R, H), jnp.bfloat16),
                   jax.ShapeDtypeStruct((nt, 1, 2 * H), jnp.float32)),
        grid_spec=pltpu.PrefetchScalarGridSpec(
            num_scalar_prefetch=0,
            grid=(nt,),
            in_specs=[pl.BlockSpec((rows, C), lambda i: (i, 0)),
                      pl.BlockSpec((1, C), lambda i: (0, 0)),
                      pl.BlockSpec((1, C), lambda i: (0, 0)),
                      pl.BlockSpec((3 * C, H), lambda i: (0, 0))],
            out_specs=[pl.BlockSpec((rows, H), lambda i: (i, 0)),
                       pl.BlockSpec((1, 1, 2 * H), lambda i: (i, 0, 0))]),
        compiler_params=pltpu.CompilerParams(
            dimension_semantics=("parallel",),
            vmem_limit_bytes=_VMEM_LIMIT),
    )(x2, scale, shift, w_packed)
    return z, st


# ----------------------------------------------------------------------------
# Kernel 2: BN finalize (global affine) + ReLU / LeakyReLU, tiled elementwise.
# ----------------------------------------------------------------------------
def _affine_act_kernel(z_ref, sc_ref, sh_ref, y_ref, *, leaky):
    y = z_ref[...].astype(jnp.float32) * sc_ref[...] + sh_ref[...]
    if leaky:
        y = jnp.where(y > 0, y, NEG_SLOPE * y)
    else:
        y = jnp.maximum(y, 0.0)
    y_ref[...] = y.astype(y_ref.dtype)


def bn_act(z, scale, shift, *, leaky, out_dtype):
    R, C = z.shape
    rows = _row_tile(R, _EW_ROW_CAP)
    nt = R // rows
    kernel = functools.partial(_affine_act_kernel, leaky=leaky)
    return pl.pallas_call(
        kernel,
        out_shape=jax.ShapeDtypeStruct((R, C), out_dtype),
        grid_spec=pltpu.PrefetchScalarGridSpec(
            num_scalar_prefetch=0,
            grid=(nt,),
            in_specs=[pl.BlockSpec((rows, C), lambda i: (i, 0)),
                      pl.BlockSpec((1, C), lambda i: (0, 0)),
                      pl.BlockSpec((1, C), lambda i: (0, 0))],
            out_specs=pl.BlockSpec((rows, C), lambda i: (i, 0))),
        compiler_params=pltpu.CompilerParams(
            dimension_semantics=("parallel",),
            vmem_limit_bytes=_VMEM_LIMIT),
    )(z, scale, shift)


# ----------------------------------------------------------------------------
# Kernel 3: Dot_Graph_Construction_weights + MPNN_mk_v2 (k=1), many graphs per
#           grid step; Linear layers run as one big matmul over graphs*N rows.
#           Emits per-tile BN partial statistics for the final BatchNorm.
# ----------------------------------------------------------------------------
def _spatial_kernel(x_ref, wm_ref, bm_ref, wt_ref, bt_ref, y_ref, st_ref):
    G, N, H = x_ref.shape
    Od = wt_ref.shape[1]

    x = x_ref[...]                                               # bf16 (G, N, H)
    x2 = x.reshape(G * N, H)

    # graph construction: h = x @ Wm + bm  (single MXU matmul for the whole block)
    h = jnp.dot(x2, wm_ref[...], preferred_element_type=jnp.float32) + bm_ref[...]
    hb = h.astype(jnp.bfloat16).reshape(G, N, H)
    adj = jnp.einsum('gik,gjk->gij', hb, hb,
                     preferred_element_type=jnp.float32)         # (G, N, N) f32

    r = jax.lax.broadcasted_iota(jnp.int32, (N, N), 0)
    c = jax.lax.broadcasted_iota(jnp.int32, (N, N), 1)
    eye = (r == c).astype(jnp.float32).reshape(1, N, N)

    # mask diagonal + leaky_relu + softmax (adj reused in place to bound live VMEM/vregs)
    adj = adj - eye * 1e8
    adj = jnp.where(adj > 0, adj, NEG_SLOPE * adj)
    adj = jnp.exp(adj - jnp.max(adj, axis=-1, keepdims=True))
    A = adj * pl.reciprocal(jnp.sum(adj, axis=-1, keepdims=True), approx=True) + eye

    msg = jnp.einsum('gij,gjk->gik', A.astype(jnp.bfloat16), x,
                     preferred_element_type=jnp.float32)         # A @ X  (G, N, H)
    out = jnp.dot(msg.reshape(G * N, H).astype(jnp.bfloat16), wt_ref[...],
                  preferred_element_type=jnp.float32) + bt_ref[...]

    # TODO(synk): lane-pack (N, Od) into a single >=128-wide store for full lane density;
    # kept as the (G, N, Od) block (bf16 halves the masked-store traffic) to stay lowering-safe.
    y_ref[...] = out.reshape(G, N, Od).astype(y_ref.dtype)
    s = jnp.sum(out, axis=0, keepdims=True)
    ss = jnp.sum(out * out, axis=0, keepdims=True)
    st_ref[...] = jnp.concatenate([s, ss], axis=1).reshape(1, 1, 2 * Od)


def spatial_mpnn(x, w_map, b_map, w_theta, b_theta):
    B, N, H = x.shape
    Od = w_theta.shape[1]
    gpb = _graph_tile(B, N, H, Od, _ROW_CAP, _SPA_BUDGET)        # graphs per block
    nt = B // gpb
    y, st = pl.pallas_call(
        _spatial_kernel,
        out_shape=(jax.ShapeDtypeStruct((B, N, Od), jnp.bfloat16),
                   jax.ShapeDtypeStruct((nt, 1, 2 * Od), jnp.float32)),
        grid_spec=pltpu.PrefetchScalarGridSpec(
            num_scalar_prefetch=0,
            grid=(nt,),
            in_specs=[pl.BlockSpec((gpb, N, H), lambda i: (i, 0, 0)),
                      pl.BlockSpec((H, H), lambda i: (0, 0)),
                      pl.BlockSpec((1, H), lambda i: (0, 0)),
                      pl.BlockSpec((H, Od), lambda i: (0, 0)),
                      pl.BlockSpec((1, Od), lambda i: (0, 0))],
            out_specs=[pl.BlockSpec((gpb, N, Od), lambda i: (i, 0, 0)),
                       pl.BlockSpec((1, 1, 2 * Od), lambda i: (i, 0, 0))]),
        compiler_params=pltpu.CompilerParams(
            dimension_semantics=("parallel",),
            vmem_limit_bytes=_VMEM_LIMIT),
    )(x, w_map, b_map, w_theta, b_theta)
    return y, st


# ----------------------------------------------------------------------------
# MPNN_block_seperate.forward
# ----------------------------------------------------------------------------
def mpnn_block_separate_forward(x, params):
    bs, T, Nn, D = x.shape
    H = 2 * D
    Bp = bs * Nn
    # time_conv == T for Conv1d(k=3, stride=1, pad=1)

    # temporal input: [bs, T, Nn, D] -> [bs*Nn, T, D] -> rows (bs*Nn*T, D)
    # TODO(synk): could be folded into pass A's in_spec (4-D block + in-tile transpose); kept as a
    # cheap XLA copy since this is the smallest activation in the chain.
    tem_in = jnp.transpose(x, (0, 2, 1, 3)).reshape(Bp * T, D)

    # pass A: conv1 + global-BN partial stats
    z1, st1 = temporal_conv_bn_stats(tem_in, params["conv1_w_packed"], T)
    scale1, shift1 = _bn_affine(st1, Bp * T, params["bn1_g"], params["bn1_b"])

    # pass B: BN1 finalize + ReLU fused into conv2 + global-BN partial stats
    z2, st2 = temporal_conv_bn_stats(z1, params["conv2_w_packed"], T,
                                     scale=scale1, shift=shift1)
    scale2, shift2 = _bn_affine(st2, Bp * T, params["bn2_g"], params["bn2_b"])

    # pass C: BN2 finalize + ReLU; emit bf16 activations (matmul-only consumers downstream)
    h2 = bn_act(z2, scale2, shift2, leaky=False, out_dtype=jnp.bfloat16)

    # layout glue reproducing PyTorch's *raw* torch.reshape of the contiguous NCL conv output.
    # This element-level permutation ((H,T) memory viewed as (T,H)) cannot be expressed as a
    # block-granularity index_map, so it stays one fused XLA copy (bf16, half the bytes it was).
    tem_ncl = jnp.swapaxes(h2.reshape(Bp, T, H), 1, 2)           # (Bp, 2D, T)
    spa_in = jnp.swapaxes(tem_ncl.reshape(bs, Nn, T, H), 1, 2).reshape(bs * T, Nn, H)

    # pass D: graph construction + MPNN(k=1) + partial stats for the spatial BatchNorm
    pre_bn, st3 = spatial_mpnn(spa_in, params["map_w"], params["map_b"],
                               params["theta_w"], params["theta_b"])
    Od = pre_bn.shape[-1]
    scale3, shift3 = _bn_affine(st3, bs * T * Nn, params["spa_bn_g"], params["spa_bn_b"])

    # pass E: BN3 finalize + LeakyReLU on the lane-dense (bs*T, Nn*Od) view (free contiguous
    # reshape); per-channel affine tiled across nodes so it is per-lane.
    scale3_l = jnp.tile(scale3, (1, Nn))
    shift3_l = jnp.tile(shift3, (1, Nn))
    out = bn_act(pre_bn.reshape(bs * T, Nn * Od), scale3_l, shift3_l,
                 leaky=True, out_dtype=jnp.float32)
    return out.reshape(bs * T, Nn, Od)                           # [bs*time_conv, Nn, output_dim]


def init_params(key, input_dim, output_dim):
    D = input_dim
    H = 2 * D
    ks = jax.random.split(key, 6)
    # TODO(synk): pad packed contraction dims (3*D, 3*H, H) up to 128 for full MXU alignment at
    # production widths (zero rows in weights, zero columns in the im2col operand).
    return {
        # Conv1d weights pre-packed for the im2col matmul: row k*in+i, col o == PyTorch W[o, i, k].
        # MXU operands are stored in bf16; BN/bias params stay f32.
        "conv1_w_packed": (0.2 * jax.random.normal(ks[0], (3 * D, H), jnp.float32)).astype(jnp.bfloat16),
        "bn1_g": jnp.ones((1, H), jnp.float32),
        "bn1_b": jnp.zeros((1, H), jnp.float32),
        "conv2_w_packed": (0.2 * jax.random.normal(ks[1], (3 * H, H), jnp.float32)).astype(jnp.bfloat16),
        "bn2_g": jnp.ones((1, H), jnp.float32),
        "bn2_b": jnp.zeros((1, H), jnp.float32),
        # Dot_Graph_Construction_weights.mapping : Linear(2D, 2D), y = x @ W + b
        "map_w": (0.2 * jax.random.normal(ks[2], (H, H), jnp.float32)).astype(jnp.bfloat16),
        "map_b": 0.1 * jax.random.normal(ks[3], (1, H), jnp.float32),
        # MPNN_mk_v2.theta[0] : Linear(2D, output_dim)
        "theta_w": (0.2 * jax.random.normal(ks[4], (H, output_dim), jnp.float32)).astype(jnp.bfloat16),
        "theta_b": 0.1 * jax.random.normal(ks[5], (1, output_dim), jnp.float32),
        "spa_bn_g": jnp.ones((1, output_dim), jnp.float32),
        "spa_bn_b": jnp.zeros((1, output_dim), jnp.float32),
    }
    # TODO(synk): Mask_Matrix / self.pre_relation and self.BN are built in __init__ but never
    # used in forward -> intentionally skipped.


if __name__ == "__main__":
    key = jax.random.PRNGKey(0)
    k_in, k_par = jax.random.split(key)

    # small shapes: batch=2, time_window_size=8, num_sensors=4, input_dim=8, output_dim=8
    bs, T, Nn, D = 2, 8, 4, 8
    output_dim = 8

    x = jax.random.normal(k_in, (bs, T, Nn, D), jnp.float32)
    params = init_params(k_par, D, output_dim)

    fwd = jax.jit(mpnn_block_separate_forward)
    out = jax.block_until_ready(fwd(x, params))

    assert out.shape == (bs * T, Nn, output_dim), out.shape
    assert bool(jnp.all(jnp.isfinite(out)))
    print("KERNEL_OK")
</pallas_src>

<mosaic_0001>
module attributes {stable_mosaic.version = 11 : i64} {
  func.func @_conv_stats_kernel(%arg0: i32, %arg1: memref<32x8xf32, #tpu.memory_space<vmem>>, %arg2: memref<1x8xf32, #tpu.memory_space<vmem>>, %arg3: memref<1x8xf32, #tpu.memory_space<vmem>>, %arg4: memref<24x16xbf16, #tpu.memory_space<vmem>>, %arg5: memref<32x16xbf16, #tpu.memory_space<vmem>>, %arg6: memref<1x1x32xf32, #tpu.memory_space<vmem>>) attributes {dimension_semantics = [#tpu.dimension_semantics<parallel>], iteration_bounds = array<i64: 2>, scalar_prefetch = 0 : i64, scratch_operands = 0 : i64, tpu.core_type = #tpu.core_type<tc>, window_params = [{transform_indices = @transform_0, window_bounds = array<i64: 32, 8>}, {pipeline_mode = #tpu.pipeline_mode<synchronous>, transform_indices = @transform_1, window_bounds = array<i64: 1, 8>}, {pipeline_mode = #tpu.pipeline_mode<synchronous>, transform_indices = @transform_2, window_bounds = array<i64: 1, 8>}, {pipeline_mode = #tpu.pipeline_mode<synchronous>, transform_indices = @transform_3, window_bounds = array<i64: 24, 16>}, {transform_indices = @transform_4, window_bounds = array<i64: 32, 16>}, {transform_indices = @transform_5, window_bounds = array<i64: 1, 1, 32>}]} {
    %c0 = arith.constant 0 : index
    %c0_0 = arith.constant 0 : index
    %0 = vector.load %arg1[%c0, %c0_0] : memref<32x8xf32, #tpu.memory_space<vmem>>, vector<32x8xf32>
    %1 = tpu.iota {dimensions = array<i32: 0>} : vector<32x1xi32>
    %c8_i32 = arith.constant 8 : i32
    %c0_i32 = arith.constant 0 : i32
    %2 = arith.cmpi eq, %c8_i32, %c0_i32 : i32
    %c1_i32 = arith.constant 1 : i32
    %3 = arith.select %2, %c1_i32, %c8_i32 : i32
    %4 = vector.broadcast %3 : i32 to vector<32x1xi32>
    %5 = arith.remsi %1, %4 : vector<32x1xi32>
    %c0_i32_1 = arith.constant 0 : i32
    %6 = vector.broadcast %c0_i32_1 : i32 to vector<32x1xi32>
    %7 = arith.cmpi ne, %5, %6 : vector<32x1xi32>
    %c0_i32_2 = arith.constant 0 : i32
    %8 = vector.broadcast %c0_i32_2 : i32 to vector<32x1xi32>
    %9 = arith.cmpi slt, %5, %8 : vector<32x1xi32>
    %c0_i32_3 = arith.constant 0 : i32
    %10 = arith.cmpi slt, %3, %c0_i32_3 : i32
    %11 = vector.broadcast %10 : i1 to vector<32x1xi1>
    %12 = vector.broadcast %11 : vector<32x1xi1> to vector<32x1xi1>
    %13 = arith.xori %9, %12 : vector<32x1xi1>
    %14 = arith.andi %13, %7 : vector<32x1xi1>
    %15 = vector.broadcast %3 : i32 to vector<32x1xi32>
    %16 = arith.addi %5, %15 : vector<32x1xi32>
    %17 = arith.select %14, %16, %5 : vector<32x1xi1>, vector<32x1xi32>
    %c0_i32_4 = arith.constant 0 : i32
    %18 = vector.broadcast %c0_i32_4 : i32 to vector<32x1xi32>
    %19 = arith.cmpi eq, %17, %18 : vector<32x1xi32>
    %c1_i32_5 = arith.constant 1 : i32
    %20 = tpu.dynamic_rotate %0 by %c1_i32_5 dim 0 : vector<32x8xf32>, i32 -> vector<32x8xf32>
    %cst = arith.constant 0.000000e+00 : f32
    %21 = vector.shape_cast %19 : vector<32x1xi1> to vector<32x1xi1>
    %22 = vector.broadcast %21 : vector<32x1xi1> to vector<32x8xi1>
    %23 = vector.broadcast %cst : f32 to vector<32x8xf32>
    %24 = arith.select %22, %23, %20 : vector<32x8xi1>, vector<32x8xf32>
    %c7_i32 = arith.constant 7 : i32
    %25 = vector.broadcast %c7_i32 : i32 to vector<32x1xi32>
    %26 = arith.cmpi eq, %17, %25 : vector<32x1xi32>
    %c31_i32 = arith.constant 31 : i32
    %27 = tpu.dynamic_rotate %0 by %c31_i32 dim 0 : vector<32x8xf32>, i32 -> vector<32x8xf32>
    %cst_6 = arith.constant 0.000000e+00 : f32
    %28 = vector.shape_cast %26 : vector<32x1xi1> to vector<32x1xi1>
    %29 = vector.broadcast %28 : vector<32x1xi1> to vector<32x8xi1>
    %30 = vector.broadcast %cst_6 : f32 to vector<32x8xf32>
    %31 = arith.select %29, %30, %27 : vector<32x8xi1>, vector<32x8xf32>
    %32 = tpu.concatenate %24, %0, %31 in 1 : vector<32x8xf32>, vector<32x8xf32>, vector<32x8xf32> -> vector<32x24xf32>
    %33 = arith.truncf %32 : vector<32x24xf32> to vector<32x24xbf16>
    %c0_7 = arith.constant 0 : index
    %c0_8 = arith.constant 0 : index
    %34 = vector.load %arg4[%c0_7, %c0_8] : memref<24x16xbf16, #tpu.memory_space<vmem>>, vector<24x16xbf16>
    %cst_9 = arith.constant dense<0.000000e+00> : vector<32x16xf32>
    %35 = tpu.matmul %33, %34, %cst_9 {dimension_numbers = #tpu.dot_dimension_numbers<[1], [0], [0], [1], [0, 0, 1, 1], [], []>} : vector<32x24xbf16>, vector<24x16xbf16>, vector<32x16xf32> -> vector<32x16xf32>
    %36 = arith.truncf %35 : vector<32x16xf32> to vector<32x16xbf16>
    %c0_10 = arith.constant 0 : index
    %c0_11 = arith.constant 0 : index
    %37 = vector.load %arg5[%c0_10, %c0_11] : memref<32x16xbf16, #tpu.memory_space<vmem>>, vector<32x16xbf16>
    tpu.vector_store %arg5[%c0_10, %c0_11], %36 {strides = array<i32>} : memref<32x16xbf16, #tpu.memory_space<vmem>>, vector<32x16xbf16>,
    %cst_12 = arith.constant dense<0.000000e+00> : vector<16xf32>
    %38 = vector.multi_reduction <add>, %35, %cst_12 [0] : vector<32x16xf32> to vector<16xf32>
    %39 = vector.shape_cast %38 : vector<16xf32> to vector<1x16xf32>
    %40 = arith.mulf %35, %35 : vector<32x16xf32>
    %cst_13 = arith.constant dense<0.000000e+00> : vector<16xf32>
    %41 = vector.multi_reduction <add>, %40, %cst_13 [0] : vector<32x16xf32> to vector<16xf32>
    %42 = vector.shape_cast %41 : vector<16xf32> to vector<1x16xf32>
    %43 = tpu.concatenate %39, %42 in 1 : vector<1x16xf32>, vector<1x16xf32> -> vector<1x32xf32>
    %44 = vector.shape_cast %43 : vector<1x32xf32> to vector<1x1x32xf32>
    %c0_14 = arith.constant 0 : index
    %c0_15 = arith.constant 0 : index
    %c0_16 = arith.constant 0 : index
    %45 = vector.load %arg6[%c0_14, %c0_15, %c0_16] : memref<1x1x32xf32, #tpu.memory_space<vmem>>, vector<1x1x32xf32>
    tpu.vector_store %arg6[%c0_14, %c0_15, %c0_16], %44 {strides = array<i32>} : memref<1x1x32xf32, #tpu.memory_space<vmem>>, vector<1x1x32xf32>,
    return
  }
  func.func @transform_0(%arg0: i32) -> (i32, i32) {
    %c0_i32 = arith.constant 0 : i32
    %c0_i32_0 = arith.constant 0 : i32
    return %arg0, %c0_i32 : i32, i32
  }
  func.func @transform_1(%arg0: i32) -> (i32, i32) {
    %c0_i32 = arith.constant 0 : i32
    %c0_i32_0 = arith.constant 0 : i32
    %c0_i32_1 = arith.constant 0 : i32
    return %c0_i32, %c0_i32_0 : i32, i32
  }
  func.func @transform_2(%arg0: i32) -> (i32, i32) {
    %c0_i32 = arith.constant 0 : i32
    %c0_i32_0 = arith.constant 0 : i32
    %c0_i32_1 = arith.constant 0 : i32
    return %c0_i32, %c0_i32_0 : i32, i32
  }
  func.func @transform_3(%arg0: i32) -> (i32, i32) {
    %c0_i32 = arith.constant 0 : i32
    %c0_i32_0 = arith.constant 0 : i32
    %c0_i32_1 = arith.constant 0 : i32
    return %c0_i32, %c0_i32_0 : i32, i32
  }
  func.func @transform_4(%arg0: i32) -> (i32, i32) {
    %c0_i32 = arith.constant 0 : i32
    %c0_i32_0 = arith.constant 0 : i32
    return %arg0, %c0_i32 : i32, i32
  }
  func.func @transform_5(%arg0: i32) -> (i32, i32, i32) {
    %c0_i32 = arith.constant 0 : i32
    %c0_i32_0 = arith.constant 0 : i32
    %c0_i32_1 = arith.constant 0 : i32
    return %arg0, %c0_i32, %c0_i32_0 : i32, i32, i32
  }
}

module attributes {stable_mosaic.version = 11 : i64} {
  func.func @_conv_stats_kernel(%arg0: i32, %arg1: memref<32x16xbf16, #tpu.memory_space<vmem>>, %arg2: memref<1x16xf32, #tpu.memory_space<vmem>>, %arg3: memref<1x16xf32, #tpu.memory_space<vmem>>, %arg4: memref<48x16xbf16, #tpu.memory_space<vmem>>, %arg5: memref<32x16xbf16, #tpu.memory_space<vmem>>, %arg6: memref<1x1x32xf32, #tpu.memory_space<vmem>>) attributes {dimension_semantics = [#tpu.dimension_semantics<parallel>], iteration_bounds = array<i64: 2>, scalar_prefetch = 0 : i64, scratch_operands = 0 : i64, tpu.core_type = #tpu.core_type<tc>, window_params = [{transform_indices = @transform_0, window_bounds = array<i64: 32, 16>}, {pipeline_mode = #tpu.pipeline_mode<synchronous>, transform_indices = @transform_1, window_bounds = array<i64: 1, 16>}, {pipeline_mode = #tpu.pipeline_mode<synchronous>, transform_indices = @transform_2, window_bounds = array<i64: 1, 16>}, {pipeline_mode = #tpu.pipeline_mode<synchronous>, transform_indices = @transform_3, window_bounds = array<i64: 48, 16>}, {transform_indices = @transform_4, window_bounds = array<i64: 32, 16>}, {transform_indices = @transform_5, window_bounds = array<i64: 1, 1, 32>}]} {
    %c0 = arith.constant 0 : index
    %c0_0 = arith.constant 0 : index
    %0 = vector.load %arg1[%c0, %c0_0] : memref<32x16xbf16, #tpu.memory_space<vmem>>, vector<32x16xbf16>
    %1 = arith.extf %0 : vector<32x16xbf16> to vector<32x16xf32>
    %c0_1 = arith.constant 0 : index
    %c0_2 = arith.constant 0 : index
    %2 = vector.load %arg2[%c0_1, %c0_2] : memref<1x16xf32, #tpu.memory_space<vmem>>, vector<1x16xf32>
    %3 = vector.broadcast %2 : vector<1x16xf32> to vector<32x16xf32>
    %4 = arith.mulf %1, %3 : vector<32x16xf32>
    %c0_3 = arith.constant 0 : index
    %c0_4 = arith.constant 0 : index
    %5 = vector.load %arg3[%c0_3, %c0_4] : memref<1x16xf32, #tpu.memory_space<vmem>>, vector<1x16xf32>
    %6 = vector.broadcast %5 : vector<1x16xf32> to vector<32x16xf32>
    %7 = arith.addf %4, %6 : vector<32x16xf32>
    %cst = arith.constant 0.000000e+00 : f32
    %8 = vector.broadcast %cst : f32 to vector<32x16xf32>
    %9 = arith.maximumf %7, %8 : vector<32x16xf32>
    %10 = tpu.iota {dimensions = array<i32: 0>} : vector<32x1xi32>
    %c8_i32 = arith.constant 8 : i32
    %c0_i32 = arith.constant 0 : i32
    %11 = arith.cmpi eq, %c8_i32, %c0_i32 : i32
    %c1_i32 = arith.constant 1 : i32
    %12 = arith.select %11, %c1_i32, %c8_i32 : i32
    %13 = vector.broadcast %12 : i32 to vector<32x1xi32>
    %14 = arith.remsi %10, %13 : vector<32x1xi32>
    %c0_i32_5 = arith.constant 0 : i32
    %15 = vector.broadcast %c0_i32_5 : i32 to vector<32x1xi32>
    %16 = arith.cmpi ne, %14, %15 : vector<32x1xi32>
    %c0_i32_6 = arith.constant 0 : i32
    %17 = vector.broadcast %c0_i32_6 : i32 to vector<32x1xi32>
    %18 = arith.cmpi slt, %14, %17 : vector<32x1xi32>
    %c0_i32_7 = arith.constant 0 : i32
    %19 = arith.cmpi slt, %12, %c0_i32_7 : i32
    %20 = vector.broadcast %19 : i1 to vector<32x1xi1>
    %21 = vector.broadcast %20 : vector<32x1xi1> to vector<32x1xi1>
    %22 = arith.xori %18, %21 : vector<32x1xi1>
    %23 = arith.andi %22, %16 : vector<32x1xi1>
    %24 = vector.broadcast %12 : i32 to vector<32x1xi32>
    %25 = arith.addi %14, %24 : vector<32x1xi32>
    %26 = arith.select %23, %25, %14 : vector<32x1xi1>, vector<32x1xi32>
    %c0_i32_8 = arith.constant 0 : i32
    %27 = vector.broadcast %c0_i32_8 : i32 to vector<32x1xi32>
    %28 = arith.cmpi eq, %26, %27 : vector<32x1xi32>
    %c1_i32_9 = arith.constant 1 : i32
    %29 = tpu.dynamic_rotate %9 by %c1_i32_9 dim 0 : vector<32x16xf32>, i32 -> vector<32x16xf32>
    %cst_10 = arith.constant 0.000000e+00 : f32
    %30 = vector.shape_cast %28 : vector<32x1xi1> to vector<32x1xi1>
    %31 = vector.broadcast %30 : vector<32x1xi1> to vector<32x16xi1>
    %32 = vector.broadcast %cst_10 : f32 to vector<32x16xf32>
    %33 = arith.select %31, %32, %29 : vector<32x16xi1>, vector<32x16xf32>
    %c7_i32 = arith.constant 7 : i32
    %34 = vector.broadcast %c7_i32 : i32 to vector<32x1xi32>
    %35 = arith.cmpi eq, %26, %34 : vector<32x1xi32>
    %c31_i32 = arith.constant 31 : i32
    %36 = tpu.dynamic_rotate %9 by %c31_i32 dim 0 : vector<32x16xf32>, i32 -> vector<32x16xf32>
    %cst_11 = arith.constant 0.000000e+00 : f32
    %37 = vector.shape_cast %35 : vector<32x1xi1> to vector<32x1xi1>
    %38 = vector.broadcast %37 : vector<32x1xi1> to vector<32x16xi1>
    %39 = vector.broadcast %cst_11 : f32 to vector<32x16xf32>
    %40 = arith.select %38, %39, %36 : vector<32x16xi1>, vector<32x16xf32>
    %41 = tpu.concatenate %33, %9, %40 in 1 : vector<32x16xf32>, vector<32x16xf32>, vector<32x16xf32> -> vector<32x48xf32>
    %42 = arith.truncf %41 : vector<32x48xf32> to vector<32x48xbf16>
    %c0_12 = arith.constant 0 : index
    %c0_13 = arith.constant 0 : index
    %43 = vector.load %arg4[%c0_12, %c0_13] : memref<48x16xbf16, #tpu.memory_space<vmem>>, vector<48x16xbf16>
    %cst_14 = arith.constant dense<0.000000e+00> : vector<32x16xf32>
    %44 = tpu.matmul %42, %43, %cst_14 {dimension_numbers = #tpu.dot_dimension_numbers<[1], [0], [0], [1], [0, 0, 1, 1], [], []>} : vector<32x48xbf16>, vector<48x16xbf16>, vector<32x16xf32> -> vector<32x16xf32>
    %45 = arith.truncf %44 : vector<32x16xf32> to vector<32x16xbf16>
    %c0_15 = arith.constant 0 : index
    %c0_16 = arith.constant 0 : index
    %46 = vector.load %arg5[%c0_15, %c0_16] : memref<32x16xbf16, #tpu.memory_space<vmem>>, vector<32x16xbf16>
    tpu.vector_store %arg5[%c0_15, %c0_16], %45 {strides = array<i32>} : memref<32x16xbf16, #tpu.memory_space<vmem>>, vector<32x16xbf16>,
    %cst_17 = arith.constant dense<0.000000e+00> : vector<16xf32>
    %47 = vector.multi_reduction <add>, %44, %cst_17 [0] : vector<32x16xf32> to vector<16xf32>
    %48 = vector.shape_cast %47 : vector<16xf32> to vector<1x16xf32>
    %49 = arith.mulf %44, %44 : vector<32x16xf32>
    %cst_18 = arith.constant dense<0.000000e+00> : vector<16xf32>
    %50 = vector.multi_reduction <add>, %49, %cst_18 [0] : vector<32x16xf32> to vector<16xf32>
    %51 = vector.shape_cast %50 : vector<16xf32> to vector<1x16xf32>
    %52 = tpu.concatenate %48, %51 in 1 : vector<1x16xf32>, vector<1x16xf32> -> vector<1x32xf32>
    %53 = vector.shape_cast %52 : vector<1x32xf32> to vector<1x1x32xf32>
    %c0_19 = arith.constant 0 : index
    %c0_20 = arith.constant 0 : index
    %c0_21 = arith.constant 0 : index
    %54 = vector.load %arg6[%c0_19, %c0_20, %c0_21] : memref<1x1x32xf32, #tpu.memory_space<vmem>>, vector<1x1x32xf32>
    tpu.vector_store %arg6[%c0_19, %c0_20, %c0_21], %53 {strides = array<i32>} : memref<1x1x32xf32, #tpu.memory_space<vmem>>, vector<1x1x32xf32>,
    return
  }
  func.func @transform_0(%arg0: i32) -> (i32, i32) {
    %c0_i32 = arith.constant 0 : i32
    %c0_i32_0 = arith.constant 0 : i32
    return %arg0, %c0_i32 : i32, i32
  }
  func.func @transform_1(%arg0: i32) -> (i32, i32) {
    %c0_i32 = arith.constant 0 : i32
    %c0_i32_0 = arith.constant 0 : i32
    %c0_i32_1 = arith.constant 0 : i32
    return %c0_i32, %c0_i32_0 : i32, i32
  }
  func.func @transform_2(%arg0: i32) -> (i32, i32) {
    %c0_i32 = arith.constant 0 : i32
    %c0_i32_0 = arith.constant 0 : i32
    %c0_i32_1 = arith.constant 0 : i32
    return %c0_i32, %c0_i32_0 : i32, i32
  }
  func.func @transform_3(%arg0: i32) -> (i32, i32) {
    %c0_i32 = arith.constant 0 : i32
    %c0_i32_0 = arith.constant 0 : i32
    %c0_i32_1 = arith.constant 0 : i32
    return %c0_i32, %c0_i32_0 : i32, i32
  }
  func.func @transform_4(%arg0: i32) -> (i32, i32) {
    %c0_i32 = arith.constant 0 : i32
    %c0_i32_0 = arith.constant 0 : i32
    return %arg0, %c0_i32 : i32, i32
  }
  func.func @transform_5(%arg0: i32) -> (i32, i32, i32) {
    %c0_i32 = arith.constant 0 : i32
    %c0_i32_0 = arith.constant 0 : i32
    %c0_i32_1 = arith.constant 0 : i32
    return %arg0, %c0_i32, %c0_i32_0 : i32, i32, i32
  }
}

module attributes {stable_mosaic.version = 11 : i64} {
  func.func @_affine_act_kernel(%arg0: i32, %arg1: memref<32x16xbf16, #tpu.memory_space<vmem>>, %arg2: memref<1x16xf32, #tpu.memory_space<vmem>>, %arg3: memref<1x16xf32, #tpu.memory_space<vmem>>, %arg4: memref<32x16xbf16, #tpu.memory_space<vmem>>) attributes {dimension_semantics = [#tpu.dimension_semantics<parallel>], iteration_bounds = array<i64: 2>, scalar_prefetch = 0 : i64, scratch_operands = 0 : i64, tpu.core_type = #tpu.core_type<tc>, window_params = [{transform_indices = @transform_0, window_bounds = array<i64: 32, 16>}, {pipeline_mode = #tpu.pipeline_mode<synchronous>, transform_indices = @transform_1, window_bounds = array<i64: 1, 16>}, {pipeline_mode = #tpu.pipeline_mode<synchronous>, transform_indices = @transform_2, window_bounds = array<i64: 1, 16>}, {transform_indices = @transform_3, window_bounds = array<i64: 32, 16>}]} {
    %c0 = arith.constant 0 : index
    %c0_0 = arith.constant 0 : index
    %0 = vector.load %arg1[%c0, %c0_0] : memref<32x16xbf16, #tpu.memory_space<vmem>>, vector<32x16xbf16>
    %1 = arith.extf %0 : vector<32x16xbf16> to vector<32x16xf32>
    %c0_1 = arith.constant 0 : index
    %c0_2 = arith.constant 0 : index
    %2 = vector.load %arg2[%c0_1, %c0_2] : memref<1x16xf32, #tpu.memory_space<vmem>>, vector<1x16xf32>
    %3 = vector.broadcast %2 : vector<1x16xf32> to vector<32x16xf32>
    %4 = arith.mulf %1, %3 : vector<32x16xf32>
    %c0_3 = arith.constant 0 : index
    %c0_4 = arith.constant 0 : index
    %5 = vector.load %arg3[%c0_3, %c0_4] : memref<1x16xf32, #tpu.memory_space<vmem>>, vector<1x16xf32>
    %6 = vector.broadcast %5 : vector<1x16xf32> to vector<32x16xf32>
    %7 = arith.addf %4, %6 : vector<32x16xf32>
    %cst = arith.constant 0.000000e+00 : f32
    %8 = vector.broadcast %cst : f32 to vector<32x16xf32>
    %9 = arith.maximumf %7, %8 : vector<32x16xf32>
    %10 = arith.truncf %9 : vector<32x16xf32> to vector<32x16xbf16>
    %c0_5 = arith.constant 0 : index
    %c0_6 = arith.constant 0 : index
    %11 = vector.load %arg4[%c0_5, %c0_6] : memref<32x16xbf16, #tpu.memory_space<vmem>>, vector<32x16xbf16>
    tpu.vector_store %arg4[%c0_5, %c0_6], %10 {strides = array<i32>} : memref<32x16xbf16, #tpu.memory_space<vmem>>, vector<32x16xbf16>,
    return
  }
  func.func @transform_0(%arg0: i32) -> (i32, i32) {
    %c0_i32 = arith.constant 0 : i32
    %c0_i32_0 = arith.constant 0 : i32
    return %arg0, %c0_i32 : i32, i32
  }
  func.func @transform_1(%arg0: i32) -> (i32, i32) {
    %c0_i32 = arith.constant 0 : i32
    %c0_i32_0 = arith.constant 0 : i32
    %c0_i32_1 = arith.constant 0 : i32
    return %c0_i32, %c0_i32_0 : i32, i32
  }
  func.func @transform_2(%arg0: i32) -> (i32, i32) {
    %c0_i32 = arith.constant 0 : i32
    %c0_i32_0 = arith.constant 0 : i32
    %c0_i32_1 = arith.constant 0 : i32
    return %c0_i32, %c0_i32_0 : i32, i32
  }
  func.func @transform_3(%arg0: i32) -> (i32, i32) {
    %c0_i32 = arith.constant 0 : i32
    %c0_i32_0 = arith.constant 0 : i32
    return %arg0, %c0_i32 : i32, i32
  }
}

module attributes {stable_mosaic.version = 11 : i64} {
  func.func @_spatial_kernel(%arg0: i32, %arg1: memref<8x4x16xbf16, #tpu.memory_space<vmem>>, %arg2: memref<16x16xbf16, #tpu.memory_space<vmem>>, %arg3: memref<1x16xf32, #tpu.memory_space<vmem>>, %arg4: memref<16x8xbf16, #tpu.memory_space<vmem>>, %arg5: memref<1x8xf32, #tpu.memory_space<vmem>>, %arg6: memref<8x4x8xbf16, #tpu.memory_space<vmem>>, %arg7: memref<1x1x16xf32, #tpu.memory_space<vmem>>) attributes {dimension_semantics = [#tpu.dimension_semantics<parallel>], iteration_bounds = array<i64: 2>, scalar_prefetch = 0 : i64, scratch_operands = 0 : i64, tpu.core_type = #tpu.core_type<tc>, window_params = [{transform_indices = @transform_0, window_bounds = array<i64: 8, 4, 16>}, {pipeline_mode = #tpu.pipeline_mode<synchronous>, transform_indices = @transform_1, window_bounds = array<i64: 16, 16>}, {pipeline_mode = #tpu.pipeline_mode<synchronous>, transform_indices = @transform_2, window_bounds = array<i64: 1, 16>}, {pipeline_mode = #tpu.pipeline_mode<synchronous>, transform_indices = @transform_3, window_bounds = array<i64: 16, 8>}, {pipeline_mode = #tpu.pipeline_mode<synchronous>, transform_indices = @transform_4, window_bounds = array<i64: 1, 8>}, {transform_indices = @transform_5, window_bounds = array<i64: 8, 4, 8>}, {transform_indices = @transform_6, window_bounds = array<i64: 1, 1, 16>}]} {
    %c0 = arith.constant 0 : index
    %c0_0 = arith.constant 0 : index
    %c0_1 = arith.constant 0 : index
    %0 = vector.load %arg1[%c0, %c0_0, %c0_1] : memref<8x4x16xbf16, #tpu.memory_space<vmem>>, vector<8x4x16xbf16>
    %1 = vector.shape_cast %0 : vector<8x4x16xbf16> to vector<32x16xbf16>
    %c0_2 = arith.constant 0 : index
    %c0_3 = arith.constant 0 : index
    %2 = vector.load %arg2[%c0_2, %c0_3] : memref<16x16xbf16, #tpu.memory_space<vmem>>, vector<16x16xbf16>
    %cst = arith.constant dense<0.000000e+00> : vector<32x16xf32>
    %3 = tpu.matmul %1, %2, %cst {dimension_numbers = #tpu.dot_dimension_numbers<[1], [0], [0], [1], [0, 0, 1, 1], [], []>} : vector<32x16xbf16>, vector<16x16xbf16>, vector<32x16xf32> -> vector<32x16xf32>
    %c0_4 = arith.constant 0 : index
    %c0_5 = arith.constant 0 : index
    %4 = vector.load %arg3[%c0_4, %c0_5] : memref<1x16xf32, #tpu.memory_space<vmem>>, vector<1x16xf32>
    %5 = vector.broadcast %4 : vector<1x16xf32> to vector<32x16xf32>
    %6 = arith.addf %3, %5 : vector<32x16xf32>
    %7 = arith.truncf %6 : vector<32x16xf32> to vector<32x16xbf16>
    %8 = vector.shape_cast %7 : vector<32x16xbf16> to vector<8x4x16xbf16>
    "tpu.trace_start"() <{level = 10 : i32, message = "gik,gjk->gij"}> : () -> ()
    %cst_6 = arith.constant dense<0.000000e+00> : vector<8x4x4xf32>
    %9 = tpu.matmul %8, %8, %cst_6 {dimension_numbers = #tpu.dot_dimension_numbers<[2], [2], [1], [1], [0, 0, 0, 1, 1, 1], [0], [0]>} : vector<8x4x16xbf16>, vector<8x4x16xbf16>, vector<8x4x4xf32> -> vector<8x4x4xf32>
    "tpu.trace_stop"() : () -> ()
    %10 = tpu.iota {dimensions = array<i32: 0>} : vector<4x4xi32>
    %11 = tpu.iota {dimensions = array<i32: 1>} : vector<4x4xi32>
    %12 = arith.cmpi eq, %10, %11 : vector<4x4xi32>
    %13 = arith.extui %12 : vector<4x4xi1> to vector<4x4xi32>
    %14 = arith.sitofp %13 : vector<4x4xi32> to vector<4x4xf32>
    %15 = vector.shape_cast %14 : vector<4x4xf32> to vector<1x4x4xf32>
    %cst_7 = arith.constant 1.000000e+08 : f32
    %16 = vector.broadcast %cst_7 : f32 to vector<1x4x4xf32>
    %17 = arith.mulf %15, %16 : vector<1x4x4xf32>
    %18 = vector.broadcast %17 : vector<1x4x4xf32> to vector<8x4x4xf32>
    %19 = arith.subf %9, %18 : vector<8x4x4xf32>
    %cst_8 = arith.constant 0.000000e+00 : f32
    %20 = vector.broadcast %cst_8 : f32 to vector<8x4x4xf32>
    %21 = arith.cmpf ogt, %19, %20 : vector<8x4x4xf32>
    %cst_9 = arith.constant 0.00999999977 : f32
    %22 = vector.broadcast %cst_9 : f32 to vector<8x4x4xf32>
    %23 = arith.mulf %22, %19 : vector<8x4x4xf32>
    %24 = arith.select %21, %19, %23 : vector<8x4x4xi1>, vector<8x4x4xf32>
    %cst_10 = arith.constant dense<0xFF800000> : vector<8x4xf32>
    %25 = vector.multi_reduction <maximumf>, %24, %cst_10 [2] : vector<8x4x4xf32> to vector<8x4xf32>
    %26 = vector.shape_cast %25 : vector<8x4xf32> to vector<8x4x1xf32>
    %27 = vector.broadcast %26 : vector<8x4x1xf32> to vector<8x4x4xf32>
    %28 = arith.subf %24, %27 : vector<8x4x4xf32>
    %29 = math.exp %28 : vector<8x4x4xf32>
    %cst_11 = arith.constant dense<0.000000e+00> : vector<8x4xf32>
    %30 = vector.multi_reduction <add>, %29, %cst_11 [2] : vector<8x4x4xf32> to vector<8x4xf32>
    %31 = vector.shape_cast %30 : vector<8x4xf32> to vector<8x4x1xf32>
    %32 = tpu.reciprocal %31 {approx = true} : vector<8x4x1xf32> -> vector<8x4x1xf32>
    %33 = vector.broadcast %32 : vector<8x4x1xf32> to vector<8x4x4xf32>
    %34 = arith.mulf %29, %33 : vector<8x4x4xf32>
    %35 = vector.broadcast %15 : vector<1x4x4xf32> to vector<8x4x4xf32>
    %36 = arith.addf %34, %35 : vector<8x4x4xf32>
    %37 = arith.truncf %36 : vector<8x4x4xf32> to vector<8x4x4xbf16>
    "tpu.trace_start"() <{level = 10 : i32, message = "gij,gjk->gik"}> : () -> ()
    %cst_12 = arith.constant dense<0.000000e+00> : vector<8x4x16xf32>
    %38 = tpu.matmul %37, %0, %cst_12 {dimension_numbers = #tpu.dot_dimension_numbers<[2], [1], [1], [2], [0, 0, 0, 1, 1, 2], [0], [0]>} : vector<8x4x4xbf16>, vector<8x4x16xbf16>, vector<8x4x16xf32> -> vector<8x4x16xf32>
    "tpu.trace_stop"() : () -> ()
    %39 = vector.shape_cast %38 : vector<8x4x16xf32> to vector<32x16xf32>
    %40 = arith.truncf %39 : vector<32x16xf32> to vector<32x16xbf16>
    %c0_13 = arith.constant 0 : index
    %c0_14 = arith.constant 0 : index
    %41 = vector.load %arg4[%c0_13, %c0_14] : memref<16x8xbf16, #tpu.memory_space<vmem>>, vector<16x8xbf16>
    %cst_15 = arith.constant dense<0.000000e+00> : vector<32x8xf32>
    %42 = tpu.matmul %40, %41, %cst_15 {dimension_numbers = #tpu.dot_dimension_numbers<[1], [0], [0], [1], [0, 0, 1, 1], [], []>} : vector<32x16xbf16>, vector<16x8xbf16>, vector<32x8xf32> -> vector<32x8xf32>
    %c0_16 = arith.constant 0 : index
    %c0_17 = arith.constant 0 : index
    %43 = vector.load %arg5[%c0_16, %c0_17] : memref<1x8xf32, #tpu.memory_space<vmem>>, vector<1x8xf32>
    %44 = vector.broadcast %43 : vector<1x8xf32> to vector<32x8xf32>
    %45 = arith.addf %42, %44 : vector<32x8xf32>
    %46 = vector.shape_cast %45 : vector<32x8xf32> to vector<8x4x8xf32>
    %47 = arith.truncf %46 : vector<8x4x8xf32> to vector<8x4x8xbf16>
    %c0_18 = arith.constant 0 : index
    %c0_19 = arith.constant 0 : index
    %c0_20 = arith.constant 0 : index
    %48 = vector.load %arg6[%c0_18, %c0_19, %c0_20] : memref<8x4x8xbf16, #tpu.memory_space<vmem>>, vector<8x4x8xbf16>
    tpu.vector_store %arg6[%c0_18, %c0_19, %c0_20], %47 {strides = array<i32>} : memref<8x4x8xbf16, #tpu.memory_space<vmem>>, vector<8x4x8xbf16>,
    %cst_21 = arith.constant dense<0.000000e+00> : vector<8xf32>
    %49 = vector.multi_reduction <add>, %45, %cst_21 [0] : vector<32x8xf32> to vector<8xf32>
    %50 = vector.shape_cast %49 : vector<8xf32> to vector<1x8xf32>
    %51 = arith.mulf %45, %45 : vector<32x8xf32>
    %cst_22 = arith.constant dense<0.000000e+00> : vector<8xf32>
    %52 = vector.multi_reduction <add>, %51, %cst_22 [0] : vector<32x8xf32> to vector<8xf32>
    %53 = vector.shape_cast %52 : vector<8xf32> to vector<1x8xf32>
    %54 = tpu.concatenate %50, %53 in 1 : vector<1x8xf32>, vector<1x8xf32> -> vector<1x16xf32>
    %55 = vector.shape_cast %54 : vector<1x16xf32> to vector<1x1x16xf32>
    %c0_23 = arith.constant 0 : index
    %c0_24 = arith.constant 0 : index
    %c0_25 = arith.constant 0 : index
    %56 = vector.load %arg7[%c0_23, %c0_24, %c0_25] : memref<1x1x16xf32, #tpu.memory_space<vmem>>, vector<1x1x16xf32>
    tpu.vector_store %arg7[%c0_23, %c0_24, %c0_25], %55 {strides = array<i32>} : memref<1x1x16xf32, #tpu.memory_space<vmem>>, vector<1x1x16xf32>,
    return
  }
  func.func @transform_0(%arg0: i32) -> (i32, i32, i32) {
    %c0_i32 = arith.constant 0 : i32
    %c0_i32_0 = arith.constant 0 : i32
    %c0_i32_1 = arith.constant 0 : i32
    return %arg0, %c0_i32, %c0_i32_0 : i32, i32, i32
  }
  func.func @transform_1(%arg0: i32) -> (i32, i32) {
    %c0_i32 = arith.constant 0 : i32
    %c0_i32_0 = arith.constant 0 : i32
    %c0_i32_1 = arith.constant 0 : i32
    return %c0_i32, %c0_i32_0 : i32, i32
  }
  func.func @transform_2(%arg0: i32) -> (i32, i32) {
    %c0_i32 = arith.constant 0 : i32
    %c0_i32_0 = arith.constant 0 : i32
    %c0_i32_1 = arith.constant 0 : i32
    return %c0_i32, %c0_i32_0 : i32, i32
  }
  func.func @transform_3(%arg0: i32) -> (i32, i32) {
    %c0_i32 = arith.constant 0 : i32
    %c0_i32_0 = arith.constant 0 : i32
    %c0_i32_1 = arith.constant 0 : i32
    return %c0_i32, %c0_i32_0 : i32, i32
  }
  func.func @transform_4(%arg0: i32) -> (i32, i32) {
    %c0_i32 = arith.constant 0 : i32
    %c0_i32_0 = arith.constant 0 : i32
    %c0_i32_1 = arith.constant 0 : i32
    return %c0_i32, %c0_i32_0 : i32, i32
  }
  func.func @transform_5(%arg0: i32) -> (i32, i32, i32) {
    %c0_i32 = arith.constant 0 : i32
    %c0_i32_0 = arith.constant 0 : i32
    %c0_i32_1 = arith.constant 0 : i32
    return %arg0, %c0_i32, %c0_i32_0 : i32, i32, i32
  }
  func.func @transform_6(%arg0: i32) -> (i32, i32, i32) {
    %c0_i32 = arith.constant 0 : i32
    %c0_i32_0 = arith.constant 0 : i32
    %c0_i32_1 = arith.constant 0 : i32
    return %arg0, %c0_i32, %c0_i32_0 : i32, i32, i32
  }
}

module attributes {stable_mosaic.version = 11 : i64} {
  func.func @_affine_act_kernel(%arg0: i32, %arg1: memref<16x32xbf16, #tpu.memory_space<vmem>>, %arg2: memref<1x32xf32, #tpu.memory_space<vmem>>, %arg3: memref<1x32xf32, #tpu.memory_space<vmem>>, %arg4: memref<16x32xf32, #tpu.memory_space<vmem>>) attributes {dimension_semantics = [#tpu.dimension_semantics<parallel>], iteration_bounds = array<i64: 1>, scalar_prefetch = 0 : i64, scratch_operands = 0 : i64, tpu.core_type = #tpu.core_type<tc>, window_params = [{transform_indices = @transform_0, window_bounds = array<i64: 16, 32>}, {pipeline_mode = #tpu.pipeline_mode<synchronous>, transform_indices = @transform_1, window_bounds = array<i64: 1, 32>}, {pipeline_mode = #tpu.pipeline_mode<synchronous>, transform_indices = @transform_2, window_bounds = array<i64: 1, 32>}, {transform_indices = @transform_3, window_bounds = array<i64: 16, 32>}]} {
    %c0 = arith.constant 0 : index
    %c0_0 = arith.constant 0 : index
    %0 = vector.load %arg1[%c0, %c0_0] : memref<16x32xbf16, #tpu.memory_space<vmem>>, vector<16x32xbf16>
    %1 = arith.extf %0 : vector<16x32xbf16> to vector<16x32xf32>
    %c0_1 = arith.constant 0 : index
    %c0_2 = arith.constant 0 : index
    %2 = vector.load %arg2[%c0_1, %c0_2] : memref<1x32xf32, #tpu.memory_space<vmem>>, vector<1x32xf32>
    %3 = vector.broadcast %2 : vector<1x32xf32> to vector<16x32xf32>
    %4 = arith.mulf %1, %3 : vector<16x32xf32>
    %c0_3 = arith.constant 0 : index
    %c0_4 = arith.constant 0 : index
    %5 = vector.load %arg3[%c0_3, %c0_4] : memref<1x32xf32, #tpu.memory_space<vmem>>, vector<1x32xf32>
    %6 = vector.broadcast %5 : vector<1x32xf32> to vector<16x32xf32>
    %7 = arith.addf %4, %6 : vector<16x32xf32>
    %cst = arith.constant 0.000000e+00 : f32
    %8 = vector.broadcast %cst : f32 to vector<16x32xf32>
    %9 = arith.cmpf ogt, %7, %8 : vector<16x32xf32>
    %cst_5 = arith.constant 0.00999999977 : f32
    %10 = vector.broadcast %cst_5 : f32 to vector<16x32xf32>
    %11 = arith.mulf %10, %7 : vector<16x32xf32>
    %12 = arith.select %9, %7, %11 : vector<16x32xi1>, vector<16x32xf32>
    %c0_6 = arith.constant 0 : index
    %c0_7 = arith.constant 0 : index
    %13 = vector.load %arg4[%c0_6, %c0_7] : memref<16x32xf32, #tpu.memory_space<vmem>>, vector<16x32xf32>
    tpu.vector_store %arg4[%c0_6, %c0_7], %12 {strides = array<i32>} : memref<16x32xf32, #tpu.memory_space<vmem>>, vector<16x32xf32>,
    return
  }
  func.func @transform_0(%arg0: i32) -> (i32, i32) {
    %c0_i32 = arith.constant 0 : i32
    %c0_i32_0 = arith.constant 0 : i32
    return %arg0, %c0_i32 : i32, i32
  }
  func.func @transform_1(%arg0: i32) -> (i32, i32) {
    %c0_i32 = arith.constant 0 : i32
    %c0_i32_0 = arith.constant 0 : i32
    %c0_i32_1 = arith.constant 0 : i32
    return %c0_i32, %c0_i32_0 : i32, i32
  }
  func.func @transform_2(%arg0: i32) -> (i32, i32) {
    %c0_i32 = arith.constant 0 : i32
    %c0_i32_0 = arith.constant 0 : i32
    %c0_i32_1 = arith.constant 0 : i32
    return %c0_i32, %c0_i32_0 : i32, i32
  }
  func.func @transform_3(%arg0: i32) -> (i32, i32) {
    %c0_i32 = arith.constant 0 : i32
    %c0_i32_0 = arith.constant 0 : i32
    return %arg0, %c0_i32 : i32, i32
  }
}

</mosaic_0001>

<llo_original>
// kernel: mpnn_block_separate_forward.7
$region0: #{mpnn_block_separate_forward.7}
  #allocation0 [shape = 'u32[]', space=smem, size = 0x4, offset = 0x4, fixed_abs, tag = 'smem constant byte address 0x4 - core index']
  #allocation1 [shape = 'u32[144,128]{1,0:T(1,128)}', space=vmem, size = 0x12000, scoped, tag = 'internal scratch']
  %s0 = inlined_call_operand.vmem [shape: bf16[64,16], index: 0, kind: input, shape index: {}]
  %s1 = inlined_call_operand.vmem [shape: f32[1,16], index: 1, kind: input, shape index: {}]
  %s2 = inlined_call_operand.vmem [shape: f32[1,16], index: 2, kind: input, shape index: {}]
  %s3 = inlined_call_operand.vmem [shape: bf16[64,16], index: 3, kind: output, shape index: {}]
  %s4 = sld [smem:[#allocation0]]
  $region45: #{mpnn_block_separate_forward.7} parent=0
    _
  %s6 = ssub.s32 1, %s4
  %s7 = scalar_select 0, %s6, %s4
  loop: start=0, step=1, limit=4
  $region2: #{mpnn_block_separate_forward.7} parent=0 // loop_pre_header
    _
  $region3: #{mpnn_block_separate_forward.7} parent=0 // loop_header
    %s9 = sphi 0, %s13
    %p10 = scmp.ge.s32.totalorder %s9, 4
    %s19 = sphi 0, %s21
    %s22 = sphi 0, %s19
    %s23 = sphi 0, %s22
    %s39 = sphi 0, %s23
    %s43 = sphi 0, %s43
    %s45 = sphi 0, %s43
    %s46 = sphi 0, %s45
    %s60 = sphi 0, %s46
    %s64 = sphi 0, %s64
    %s66 = sphi 0, %s64
    %s67 = sphi 0, %s66
    %s81 = sphi 0, %s67
    %s87 = sphi 0, %s89
    %s90 = sphi 0, %s87
    %s91 = sphi 0, %s90
    %s107 = sphi 0, %s91
  $region4: #{mpnn_block_separate_forward.7} parent=0 // loop_header_branch
    %12 = sbr.rel (%p10) target = $region8
  $region5: #{mpnn_block_separate_forward.7} parent=0 // loop_body
    %s14 = ssub.s32 %s9, 1
    %s15 = ssub.s32 %s9, 2
    %s16 = sadd.s32 %s9, 1
    %s17 = ssub.s32 %s9, %s16
    %p18 = scmp.eq.s32.totalorder %s17, 0
    %s20 = sadd.s32 %s19, 1
    %s21 = scalar_select %p18, %s19, %s20
    %p24 = pneg %p18
    %p25 = scmp.eq.s32.totalorder %s9, 1
    %p26 = por %p24, %p25
    %p27 = scmp.ne.s32.totalorder %s19, %s22
    %p28 = scmp.eq.s32.totalorder %s9, 0
    %p29 = por %p27, %p28
    %p30 = scmp.ne.s32.totalorder %s19, %s22
    %p31 = scmp.eq.s32.totalorder %s14, 1
    %p32 = por %p30, %p31
    %p33 = scmp.ne.s32.totalorder %s22, %s23
    %p34 = scmp.eq.s32.totalorder %s14, 0
    %p35 = por %p33, %p34
    %p36 = scmp.ne.s32.totalorder %s22, %s23
    %p37 = scmp.eq.s32.totalorder %s15, 1
    %p38 = por %p36, %p37
    %p40 = scmp.ne.s32.totalorder %s23, %s39
    %p41 = scmp.eq.s32.totalorder %s15, 0
    %p42 = por %p40, %p41
    %s44 = sadd.s32 %s43, 1
    %p47 = scmp.eq.s32.totalorder %s9, 1
    %p48 = scmp.ne.s32.totalorder %s43, %s45
    %p49 = scmp.eq.s32.totalorder %s9, 0
    %p50 = por %p48, %p49
    %p51 = scmp.ne.s32.totalorder %s43, %s45
    %p52 = scmp.eq.s32.totalorder %s14, 1
    %p53 = por %p51, %p52
    %p54 = scmp.ne.s32.totalorder %s45, %s46
    %p55 = scmp.eq.s32.totalorder %s14, 0
    %p56 = por %p54, %p55
    %p57 = scmp.ne.s32.totalorder %s45, %s46
    %p58 = scmp.eq.s32.totalorder %s15, 1
    %p59 = por %p57, %p58
    %p61 = scmp.ne.s32.totalorder %s46, %s60
    %p62 = scmp.eq.s32.totalorder %s15, 0
    %p63 = por %p61, %p62
    %s65 = sadd.s32 %s64, 1
    %p68 = scmp.eq.s32.totalorder %s9, 1
    %p69 = scmp.ne.s32.totalorder %s64, %s66
    %p70 = scmp.eq.s32.totalorder %s9, 0
    %p71 = por %p69, %p70
    %p72 = scmp.ne.s32.totalorder %s64, %s66
    %p73 = scmp.eq.s32.totalorder %s14, 1
    %p74 = por %p72, %p73
    %p75 = scmp.ne.s32.totalorder %s66, %s67
    %p76 = scmp.eq.s32.totalorder %s14, 0
    %p77 = por %p75, %p76
    %p78 = scmp.ne.s32.totalorder %s66, %s67
    %p79 = scmp.eq.s32.totalorder %s15, 1
    %p80 = por %p78, %p79
    %p82 = scmp.ne.s32.totalorder %s67, %s81
    %p83 = scmp.eq.s32.totalorder %s15, 0
    %p84 = por %p82, %p83
    %s85 = ssub.s32 %s9, %s16
    %p86 = scmp.eq.s32.totalorder %s85, 0
    %s88 = sadd.s32 %s87, 1
    %s89 = scalar_select %p86, %s87, %s88
    %p92 = pneg %p86
    %p93 = scmp.eq.s32.totalorder %s9, 1
    %p94 = por %p92, %p93
    %p95 = scmp.ne.s32.totalorder %s87, %s90
    %p96 = scmp.eq.s32.totalorder %s9, 0
    %p97 = por %p95, %p96
    %p98 = scmp.ne.s32.totalorder %s87, %s90
    %p99 = scmp.eq.s32.totalorder %s14, 1
    %p100 = por %p98, %p99
    %p101 = scmp.ne.s32.totalorder %s90, %s91
    %p102 = scmp.eq.s32.totalorder %s14, 0
    %p103 = por %p101, %p102
    %p104 = scmp.ne.s32.totalorder %s90, %s91
    %p105 = scmp.eq.s32.totalorder %s15, 1
    %p106 = por %p104, %p105
    %p108 = scmp.ne.s32.totalorder %s91, %s107
    %p109 = scmp.eq.s32.totalorder %s15, 0
    %p110 = por %p108, %p109
    %p111 = scmp.le.s32.totalorder 1, %s9
    %p112 = scmp.lt.s32.totalorder %s9, 3
    %p113 = pnand %p111, %p112
    %p114 = pneg %p113
    // Predicated region
    $region9: #{mpnn_block_separate_forward.7} parent=5 // pred_check
      _
    $region10: #{mpnn_block_separate_forward.7} parent=5 // pred_check_branch
      %116 = sbr.rel (%p113) target = $region12
    $region11: #{mpnn_block_separate_forward.7} parent=5 // pred_region
      %s117 = ssub.s32 %s9, 1
      // Predicated region
      $region13: #{mpnn_block_separate_forward.7} parent=11 // pred_check
        %p118 = pneg %p56
      $region14: #{mpnn_block_separate_forward.7} parent=11 // pred_check_branch
        %120 = sbr.rel (%p118) target = $region16
      $region15: #{mpnn_block_separate_forward.7} parent=11 // pred_region
        _
      $region16: #{mpnn_block_separate_forward.7} parent=11 // pred_fallthru
        _
      // Predicated region
      $region17: #{mpnn_block_separate_forward.7} parent=11 // pred_check
        %p121 = pneg %p77
      $region18: #{mpnn_block_separate_forward.7} parent=11 // pred_check_branch
        %123 = sbr.rel (%p121) target = $region20
      $region19: #{mpnn_block_separate_forward.7} parent=11 // pred_region
        _
      $region20: #{mpnn_block_separate_forward.7} parent=11 // pred_fallthru
        _
    $region12: #{mpnn_block_separate_forward.7} parent=5 // pred_fallthru
      _
    %p124 = scmp.lt.s32.totalorder %s9, 2
    // Predicated region
    $region21: #{mpnn_block_separate_forward.7} parent=5 // pred_check
      %p125 = pneg %p124
    $region22: #{mpnn_block_separate_forward.7} parent=5 // pred_check_branch
      %127 = sbr.rel (%p125) target = $region24
    $region23: #{mpnn_block_separate_forward.7} parent=5 // pred_region
      // Predicated region
      $region25: #{mpnn_block_separate_forward.7} parent=23 // pred_check
        %p128 = pneg %p29
      $region26: #{mpnn_block_separate_forward.7} parent=23 // pred_check_branch
        %130 = sbr.rel (%p128) target = $region28
      $region27: #{mpnn_block_separate_forward.7} parent=23 // pred_region
        %s131 = smul.u32 4, %s9
        %p132 = scmp.lt.s32.totalorder %s131, 7
        %s133 = scalar_select %p132, %s131, 7
        %s134 = smul.addr %s133, 4
        %s135 = scalar_lea.vmem %s0, %s134
        %s136 = smul.u32 4, %s9
      $region28: #{mpnn_block_separate_forward.7} parent=23 // pred_fallthru
        _
    $region24: #{mpnn_block_separate_forward.7} parent=5 // pred_fallthru
      _
    %p137 = scmp.le.s32.totalorder 1, %s9
    %p138 = scmp.lt.s32.totalorder %s9, 3
    %p139 = pnand %p137, %p138
    %p140 = pneg %p139
    // Predicated region
    $region29: #{mpnn_block_separate_forward.7} parent=5 // pred_check
      _
    $region30: #{mpnn_block_separate_forward.7} parent=5 // pred_check_branch
      %142 = sbr.rel (%p139) target = $region32
    $region31: #{mpnn_block_separate_forward.7} parent=5 // pred_region
      %s143 = ssub.s32 %s9, 1
      %s144 = smul.u32 4, %s14
      %p145 = scmp.lt.s32.totalorder %s144, 7
      %s146 = scalar_select %p145, %s144, 7
      %s147 = smul.addr %s146, 4
      %s148 = scalar_lea.vmem %s0, %s147
      %p149 = pneg %p35
      %p150 = pneg %p32
      %p151 = pneg %p56
      %p152 = pneg %p53
      %p153 = pneg %p77
      %p154 = pneg %p74
      %p155 = pneg %p103
      %p156 = pneg %p100
      %s157 = smul.u32 4, %s14
      %p158 = scmp.lt.s32.totalorder %s157, 7
      %s159 = scalar_select %p158, %s157, 7
      %s160 = smul.addr %s159, 4
      %s161 = scalar_lea.vmem %s3, %s160
      %s162 = smul.u32 4, %s14
      %p163 = scmp.lt.s32.totalorder %s162, 7
      %s164 = scalar_select %p163, %s162, 7
      %s165 = smul.addr %s164, 4
      %s166 = scalar_lea.vmem %s0, %s165
      %s167 = smul.u32 4, %s14
      %s168 = smul.u32 4, %s14
      %p169 = scmp.lt.s32.totalorder %s168, 7
      %s170 = scalar_select %p169, %s168, 7
      %s171 = smul.addr %s170, 4
      %s172 = scalar_lea.vmem %s3, %s171
      %s173 = smul.u32 4, %s14
      %v174 = vld [vmem:[%s166] sm:$0xf]
      %v175 = vld [vmem:[%s166 + $0x4] sm:$0xf]
      %v176 = vld [vmem:[%s166 + $0x8] sm:$0xf]
      %v177 = vld [vmem:[%s166 + $0xc] sm:$0xf]
      %v178 = vunpack.c.l.bf16 %v174
      %v179 = vunpack.c.l.bf16 %v175
      %v180 = vunpack.c.l.bf16 %v176
      %v181 = vunpack.c.l.bf16 %v177
      %v182 = vld [vmem:[%s1] sm:$0x1]
      %v184 = vlaneseq
      %v185 = vshrl.u32 %v184, 7
      %v186 = vsub.s32 0, %v185
      %v187 = vrot.slane %v182, %v186
      %v189 = vmul.f32 %v178, %v187
      %v190 = vmul.f32 %v179, %v187
      %v191 = vmul.f32 %v180, %v187
      %v192 = vmul.f32 %v181, %v187
      %v193 = vld [vmem:[%s2] sm:$0x1]
      %v195 = vlaneseq
      %v196 = vshrl.u32 %v195, 7
      %v197 = vsub.s32 0, %v196
      %v198 = vrot.slane %v193, %v197
      %v200 = vadd.f32 %v189, %v198
      %v201 = vadd.f32 %v190, %v198
      %v202 = vadd.f32 %v191, %v198
      %v203 = vadd.f32 %v192, %v198
      %v204 = vmax.f32 %v200, 0.0
      %v205 = vmax.f32 %v201, 0.0
      %v206 = vmax.f32 %v202, 0.0
      %v207 = vmax.f32 %v203, 0.0
      %v208 = vpack.c.bf16 %v205, %v204
      %v209 = vpack.c.bf16 %v207, %v206
      %v212 = vunpack.c.l.b16 %v208
      %v213 = vunpack.c.h.b16 %v208
      %v214 = vunpack.c.l.b16 %v209
      %v215 = vunpack.c.h.b16 %v209
      %v216 = vpack.c.b16 %v212, %v212
      %v217 = vpack.c.b16 %v213, %v213
      %v218 = vpack.c.b16 %v214, %v214
      %v219 = vpack.c.b16 %v215, %v215
      %vm224 = vcmask 125952
      %225 = vst.msk [vmem:[%s172] sm:$0xf] %vm224, %v216
      %226 = vst.msk [vmem:[%s172 + $0x4] sm:$0xf] %vm224, %v217
      %227 = vst.msk [vmem:[%s172 + $0x8] sm:$0xf] %vm224, %v218
      %228 = vst.msk [vmem:[%s172 + $0xc] sm:$0xf] %vm224, %v219
      %s229 = smul.u32 4, %s14
      %p230 = scmp.lt.s32.totalorder %s229, 7
      %s231 = scalar_select %p230, %s229, 7
      %s232 = smul.addr %s231, 4
      %s233 = scalar_lea.vmem %s3, %s232
      // Predicated region
      $region33: #{mpnn_block_separate_forward.7} parent=31 // pred_check
        %p234 = pneg %p100
      $region34: #{mpnn_block_separate_forward.7} parent=31 // pred_check_branch
        %236 = sbr.rel (%p234) target = $region36
      $region35: #{mpnn_block_separate_forward.7} parent=31 // pred_region
        %s237 = smul.u32 4, %s14
      $region36: #{mpnn_block_separate_forward.7} parent=31 // pred_fallthru
        _
    $region32: #{mpnn_block_separate_forward.7} parent=5 // pred_fallthru
      _
    %p238 = scmp.le.s32.totalorder 2, %s9
    // Predicated region
    $region37: #{mpnn_block_separate_forward.7} parent=5 // pred_check
      %p239 = pneg %p238
    $region38: #{mpnn_block_separate_forward.7} parent=5 // pred_check_branch
      %241 = sbr.rel (%p239) target = $region40
    $region39: #{mpnn_block_separate_forward.7} parent=5 // pred_region
      %s242 = ssub.s32 %s9, 2
      // Predicated region
      $region41: #{mpnn_block_separate_forward.7} parent=39 // pred_check
        %p243 = pneg %p106
      $region42: #{mpnn_block_separate_forward.7} parent=39 // pred_check_branch
        %245 = sbr.rel (%p243) target = $region44
      $region43: #{mpnn_block_separate_forward.7} parent=39 // pred_region
        %s246 = smul.u32 4, %s15
        %p247 = scmp.lt.s32.totalorder %s246, 7
        %s248 = scalar_select %p247, %s246, 7
        %s249 = smul.addr %s248, 4
        %s250 = scalar_lea.vmem %s3, %s249
      $region44: #{mpnn_block_separate_forward.7} parent=39 // pred_fallthru
        _
    $region40: #{mpnn_block_separate_forward.7} parent=5 // pred_fallthru
      _
  $region6: #{mpnn_block_separate_forward.7} parent=0 // loop_footer
    %s13 = sadd.s32 1, %s9
  $region7: #{mpnn_block_separate_forward.7} parent=0 // loop_footer_branch
    %8 = sbr.rel target = $region3
  $region8: #{mpnn_block_separate_forward.7} parent=0 // loop_exit
    _

// kernel: mpnn_block_separate_forward.5
$region0: #{mpnn_block_separate_forward.5}
  #allocation0 [shape = 'u32[]', space=smem, size = 0x4, offset = 0x4, fixed_abs, tag = 'smem constant byte address 0x4 - core index']
  #allocation1 [shape = 'u32[144,128]{1,0:T(1,128)}', space=vmem, size = 0x12000, scoped, tag = 'internal scratch']
  %s0 = inlined_call_operand.vmem [shape: f32[64,8], index: 0, kind: input, shape index: {}]
  %s1 = inlined_call_operand.vmem [shape: f32[1,8], index: 1, kind: input, shape index: {}]
  %s2 = inlined_call_operand.vmem [shape: f32[1,8], index: 2, kind: input, shape index: {}]
  %s3 = inlined_call_operand.vmem [shape: bf16[24,16], index: 3, kind: input, shape index: {}]
  %s4 = inlined_call_operand.vmem [shape: bf16[64,16], index: 4, kind: output, shape index: {0}]
  %s5 = inlined_call_operand.vmem [shape: f32[2,1,32], index: 5, kind: output, shape index: {1}]
  %6 = xla_tuple %s4, %s5
  %s7 = sld [smem:[#allocation0]]
  $region57: #{mpnn_block_separate_forward.5} parent=0
    _
  %s9 = ssub.s32 1, %s7
  %s10 = scalar_select 0, %s9, %s7
  loop: start=0, step=1, limit=4
  $region2: #{mpnn_block_separate_forward.5} parent=0 // loop_pre_header
    _
  $region3: #{mpnn_block_separate_forward.5} parent=0 // loop_header
    %s12 = sphi 0, %s16
    %p13 = scmp.ge.s32.totalorder %s12, 4
    %s22 = sphi 0, %s24
    %s25 = sphi 0, %s22
    %s26 = sphi 0, %s25
    %s42 = sphi 0, %s26
    %s46 = sphi 0, %s46
    %s48 = sphi 0, %s46
    %s49 = sphi 0, %s48
    %s63 = sphi 0, %s49
    %s67 = sphi 0, %s67
    %s69 = sphi 0, %s67
    %s70 = sphi 0, %s69
    %s84 = sphi 0, %s70
    %s88 = sphi 0, %s88
    %s90 = sphi 0, %s88
    %s91 = sphi 0, %s90
    %s105 = sphi 0, %s91
    %s111 = sphi 0, %s113
    %s114 = sphi 0, %s111
    %s115 = sphi 0, %s114
    %s131 = sphi 0, %s115
    %s137 = sphi 0, %s139
    %s140 = sphi 0, %s137
    %s141 = sphi 0, %s140
    %s157 = sphi 0, %s141
  $region4: #{mpnn_block_separate_forward.5} parent=0 // loop_header_branch
    %15 = sbr.rel (%p13) target = $region8
  $region5: #{mpnn_block_separate_forward.5} parent=0 // loop_body
    %s17 = ssub.s32 %s12, 1
    %s18 = ssub.s32 %s12, 2
    %s19 = sadd.s32 %s12, 1
    %s20 = ssub.s32 %s12, %s19
    %p21 = scmp.eq.s32.totalorder %s20, 0
    %s23 = sadd.s32 %s22, 1
    %s24 = scalar_select %p21, %s22, %s23
    %p27 = pneg %p21
    %p28 = scmp.eq.s32.totalorder %s12, 1
    %p29 = por %p27, %p28
    %p30 = scmp.ne.s32.totalorder %s22, %s25
    %p31 = scmp.eq.s32.totalorder %s12, 0
    %p32 = por %p30, %p31
    %p33 = scmp.ne.s32.totalorder %s22, %s25
    %p34 = scmp.eq.s32.totalorder %s17, 1
    %p35 = por %p33, %p34
    %p36 = scmp.ne.s32.totalorder %s25, %s26
    %p37 = scmp.eq.s32.totalorder %s17, 0
    %p38 = por %p36, %p37
    %p39 = scmp.ne.s32.totalorder %s25, %s26
    %p40 = scmp.eq.s32.totalorder %s18, 1
    %p41 = por %p39, %p40
    %p43 = scmp.ne.s32.totalorder %s26, %s42
    %p44 = scmp.eq.s32.totalorder %s18, 0
    %p45 = por %p43, %p44
    %s47 = sadd.s32 %s46, 1
    %p50 = scmp.eq.s32.totalorder %s12, 1
    %p51 = scmp.ne.s32.totalorder %s46, %s48
    %p52 = scmp.eq.s32.totalorder %s12, 0
    %p53 = por %p51, %p52
    %p54 = scmp.ne.s32.totalorder %s46, %s48
    %p55 = scmp.eq.s32.totalorder %s17, 1
    %p56 = por %p54, %p55
    %p57 = scmp.ne.s32.totalorder %s48, %s49
    %p58 = scmp.eq.s32.totalorder %s17, 0
    %p59 = por %p57, %p58
    %p60 = scmp.ne.s32.totalorder %s48, %s49
    %p61 = scmp.eq.s32.totalorder %s18, 1
    %p62 = por %p60, %p61
    %p64 = scmp.ne.s32.totalorder %s49, %s63
    %p65 = scmp.eq.s32.totalorder %s18, 0
    %p66 = por %p64, %p65
    %s68 = sadd.s32 %s67, 1
    %p71 = scmp.eq.s32.totalorder %s12, 1
    %p72 = scmp.ne.s32.totalorder %s67, %s69
    %p73 = scmp.eq.s32.totalorder %s12, 0
    %p74 = por %p72, %p73
    %p75 = scmp.ne.s32.totalorder %s67, %s69
    %p76 = scmp.eq.s32.totalorder %s17, 1
    %p77 = por %p75, %p76
    %p78 = scmp.ne.s32.totalorder %s69, %s70
    %p79 = scmp.eq.s32.totalorder %s17, 0
    %p80 = por %p78, %p79
    %p81 = scmp.ne.s32.totalorder %s69, %s70
    %p82 = scmp.eq.s32.totalorder %s18, 1
    %p83 = por %p81, %p82
    %p85 = scmp.ne.s32.totalorder %s70, %s84
    %p86 = scmp.eq.s32.totalorder %s18, 0
    %p87 = por %p85, %p86
    %s89 = sadd.s32 %s88, 1
    %p92 = scmp.eq.s32.totalorder %s12, 1
    %p93 = scmp.ne.s32.totalorder %s88, %s90
    %p94 = scmp.eq.s32.totalorder %s12, 0
    %p95 = por %p93, %p94
    %p96 = scmp.ne.s32.totalorder %s88, %s90
    %p97 = scmp.eq.s32.totalorder %s17, 1
    %p98 = por %p96, %p97
    %p99 = scmp.ne.s32.totalorder %s90, %s91
    %p100 = scmp.eq.s32.totalorder %s17, 0
    %p101 = por %p99, %p100
    %p102 = scmp.ne.s32.totalorder %s90, %s91
    %p103 = scmp.eq.s32.totalorder %s18, 1
    %p104 = por %p102, %p103
    %p106 = scmp.ne.s32.totalorder %s91, %s105
    %p107 = scmp.eq.s32.totalorder %s18, 0
    %p108 = por %p106, %p107
    %s109 = ssub.s32 %s12, %s19
    %p110 = scmp.eq.s32.totalorder %s109, 0
    %s112 = sadd.s32 %s111, 1
    %s113 = scalar_select %p110, %s111, %s112
    %p116 = pneg %p110
    %p117 = scmp.eq.s32.totalorder %s12, 1
    %p118 = por %p116, %p117
    %p119 = scmp.ne.s32.totalorder %s111, %s114
    %p120 = scmp.eq.s32.totalorder %s12, 0
    %p121 = por %p119, %p120
    %p122 = scmp.ne.s32.totalorder %s111, %s114
    %p123 = scmp.eq.s32.totalorder %s17, 1
    %p124 = por %p122, %p123
    %p125 = scmp.ne.s32.totalorder %s114, %s115
    %p126 = scmp.eq.s32.totalorder %s17, 0
    %p127 = por %p125, %p126
    %p128 = scmp.ne.s32.totalorder %s114, %s115
    %p129 = scmp.eq.s32.totalorder %s18, 1
    %p130 = por %p128, %p129
    %p132 = scmp.ne.s32.totalorder %s115, %s131
    %p133 = scmp.eq.s32.totalorder %s18, 0
    %p134 = por %p132, %p133
    %s135 = ssub.s32 %s12, %s19
    %p136 = scmp.eq.s32.totalorder %s135, 0
    %s138 = sadd.s32 %s137, 1
    %s139 = scalar_select %p136, %s137, %s138
    %p142 = pneg %p136
    %p143 = scmp.eq.s32.totalorder %s12, 1
    %p144 = por %p142, %p143
    %p145 = scmp.ne.s32.totalorder %s137, %s140
    %p146 = scmp.eq.s32.totalorder %s12, 0
    %p147 = por %p145, %p146
    %p148 = scmp.ne.s32.totalorder %s137, %s140
    %p149 = scmp.eq.s32.totalorder %s17, 1
    %p150 = por %p148, %p149
    %p151 = scmp.ne.s32.totalorder %s140, %s141
    %p152 = scmp.eq.s32.totalorder %s17, 0
    %p153 = por %p151, %p152
    %p154 = scmp.ne.s32.totalorder %s140, %s141
    %p155 = scmp.eq.s32.totalorder %s18, 1
    %p156 = por %p154, %p155
    %p158 = scmp.ne.s32.totalorder %s141, %s157
    %p159 = scmp.eq.s32.totalorder %s18, 0
    %p160 = por %p158, %p159
    %p161 = scmp.le.s32.totalorder 1, %s12
    %p162 = scmp.lt.s32.totalorder %s12, 3
    %p163 = pnand %p161, %p162
    %p164 = pneg %p163
    // Predicated region
    $region9: #{mpnn_block_separate_forward.5} parent=5 // pred_check
      _
    $region10: #{mpnn_block_separate_forward.5} parent=5 // pred_check_branch
      %166 = sbr.rel (%p163) target = $region12
    $region11: #{mpnn_block_separate_forward.5} parent=5 // pred_region
      %s167 = ssub.s32 %s12, 1
      // Predicated region
      $region13: #{mpnn_block_separate_forward.5} parent=11 // pred_check
        %p168 = pneg %p59
      $region14: #{mpnn_block_separate_forward.5} parent=11 // pred_check_branch
        %170 = sbr.rel (%p168) target = $region16
      $region15: #{mpnn_block_separate_forward.5} parent=11 // pred_region
        _
      $region16: #{mpnn_block_separate_forward.5} parent=11 // pred_fallthru
        _
      // Predicated region
      $region17: #{mpnn_block_separate_forward.5} parent=11 // pred_check
        %p171 = pneg %p80
      $region18: #{mpnn_block_separate_forward.5} parent=11 // pred_check_branch
        %173 = sbr.rel (%p171) target = $region20
      $region19: #{mpnn_block_separate_forward.5} parent=11 // pred_region
        _
      $region20: #{mpnn_block_separate_forward.5} parent=11 // pred_fallthru
        _
      // Predicated region
      $region21: #{mpnn_block_separate_forward.5} parent=11 // pred_check
        %p174 = pneg %p101
      $region22: #{mpnn_block_separate_forward.5} parent=11 // pred_check_branch
        %176 = sbr.rel (%p174) target = $region24
      $region23: #{mpnn_block_separate_forward.5} parent=11 // pred_region
        _
      $region24: #{mpnn_block_separate_forward.5} parent=11 // pred_fallthru
        _
    $region12: #{mpnn_block_separate_forward.5} parent=5 // pred_fallthru
      _
    %p177 = scmp.lt.s32.totalorder %s12, 2
    // Predicated region
    $region25: #{mpnn_block_separate_forward.5} parent=5 // pred_check
      %p178 = pneg %p177
    $region26: #{mpnn_block_separate_forward.5} parent=5 // pred_check_branch
      %180 = sbr.rel (%p178) target = $region28
    $region27: #{mpnn_block_separate_forward.5} parent=5 // pred_region
      // Predicated region
      $region29: #{mpnn_block_separate_forward.5} parent=27 // pred_check
        %p181 = pneg %p32
      $region30: #{mpnn_block_separate_forward.5} parent=27 // pred_check_branch
        %183 = sbr.rel (%p181) target = $region32
      $region31: #{mpnn_block_separate_forward.5} parent=27 // pred_region
        %s184 = smul.u32 4, %s12
        %p185 = scmp.lt.s32.totalorder %s184, 7
        %s186 = scalar_select %p185, %s184, 7
        %s187 = smul.addr %s186, 8
        %s188 = scalar_lea.vmem %s0, %s187
        %s189 = smul.u32 4, %s12
      $region32: #{mpnn_block_separate_forward.5} parent=27 // pred_fallthru
        _
    $region28: #{mpnn_block_separate_forward.5} parent=5 // pred_fallthru
      _
    %p190 = scmp.le.s32.totalorder 1, %s12
    %p191 = scmp.lt.s32.totalorder %s12, 3
    %p192 = pnand %p190, %p191
    %p193 = pneg %p192
    // Predicated region
    $region33: #{mpnn_block_separate_forward.5} parent=5 // pred_check
      _
    $region34: #{mpnn_block_separate_forward.5} parent=5 // pred_check_branch
      %195 = sbr.rel (%p192) target = $region36
    $region35: #{mpnn_block_separate_forward.5} parent=5 // pred_region
      %s196 = ssub.s32 %s12, 1
      %s197 = smul.u32 4, %s17
      %p198 = scmp.lt.s32.totalorder %s197, 7
      %s199 = scalar_select %p198, %s197, 7
      %s200 = smul.addr %s199, 8
      %s201 = scalar_lea.vmem %s0, %s200
      %p202 = pneg %p38
      %p203 = pneg %p35
      %p204 = pneg %p59
      %p205 = pneg %p56
      %p206 = pneg %p80
      %p207 = pneg %p77
      %p208 = pneg %p101
      %p209 = pneg %p98
      %p210 = pneg %p127
      %p211 = pneg %p124
      %s212 = smul.u32 4, %s17
      %p213 = scmp.lt.s32.totalorder %s212, 7
      %s214 = scalar_select %p213, %s212, 7
      %s215 = smul.addr %s214, 4
      %s216 = scalar_lea.vmem %s4, %s215
      %p217 = pneg %p153
      %p218 = pneg %p150
      %p219 = scmp.lt.s32.totalorder %s17, 1
      %s220 = scalar_select %p219, %s17, 1
      %s221 = scalar_lea.vmem %s5, %s220
      %s222 = smul.u32 4, %s17
      %p223 = scmp.lt.s32.totalorder %s222, 7
      %s224 = scalar_select %p223, %s222, 7
      %s225 = smul.addr %s224, 8
      %s226 = scalar_lea.vmem %s0, %s225
      %s227 = smul.u32 4, %s17
      %s228 = smul.u32 4, %s17
      %p229 = scmp.lt.s32.totalorder %s228, 7
      %s230 = scalar_select %p229, %s228, 7
      %s231 = smul.addr %s230, 4
      %s232 = scalar_lea.vmem %s4, %s231
      %s233 = smul.u32 4, %s17
      %p234 = scmp.lt.s32.totalorder %s17, 1
      %s235 = scalar_select %p234, %s17, 1
      %s236 = scalar_lea.vmem %s5, %s235
      %v238 = vld [vmem:[%s226] sm:$0xff]
      %v239 = vld [vmem:[%s226 + $0x8] sm:$0xff]
      %v240 = vld [vmem:[%s226 + $0x10] sm:$0xff]
      %v241 = vld [vmem:[%s226 + $0x18] sm:$0xff]
      %v242 = vlaneseq
      %v243 = vshrl.u32 %v242, 7
      %v244 = vadd.s32 %v243, 8
      %v245 = vadd.s32 %v243, 16
      %v246 = vadd.s32 %v243, 24
      %vm247 = vcmp.lt.s32.totalorder %v243, 0
      %v248 = vsub.s32 0, %v243
      %v249 = vsel %vm247, %v248, %v243
      %v250 = vshrl.u32 %v249, 3
      %v251 = vand.u32 %v249, 7
      %v252 = vsub.s32 0, %v251
      %v253 = vsel %vm247, %v252, %v251
      %vm254 = vcmp.lt.s32.totalorder %v244, 0
      %v255 = vsub.s32 0, %v244
      %v256 = vsel %vm254, %v255, %v244
      %v257 = vshrl.u32 %v256, 3
      %v258 = vand.u32 %v256, 7
      %v259 = vsub.s32 0, %v258
      %v260 = vsel %vm254, %v259, %v258
      %vm261 = vcmp.lt.s32.totalorder %v245, 0
      %v262 = vsub.s32 0, %v245
      %v263 = vsel %vm261, %v262, %v245
      %v264 = vshrl.u32 %v263, 3
      %v265 = vand.u32 %v263, 7
      %v266 = vsub.s32 0, %v265
      %v267 = vsel %vm261, %v266, %v265
      %vm268 = vcmp.lt.s32.totalorder %v246, 0
      %v269 = vsub.s32 0, %v246
      %v270 = vsel %vm268, %v269, %v246
      %v271 = vshrl.u32 %v270, 3
      %v272 = vand.u32 %v270, 7
      %v273 = vsub.s32 0, %v272
      %v274 = vsel %vm268, %v273, %v272
      %vm275 = vcmp.ne.s32.totalorder %v253, 0
      %vm276 = vcmp.ne.s32.totalorder %v260, 0
      %vm277 = vcmp.ne.s32.totalorder %v267, 0
      %vm278 = vcmp.ne.s32.totalorder %v274, 0
      %vm279 = vcmp.lt.s32.totalorder %v253, 0
      %vm280 = vcmp.lt.s32.totalorder %v260, 0
      %vm281 = vcmp.lt.s32.totalorder %v267, 0
      %vm282 = vcmp.lt.s32.totalorder %v274, 0
      %vm283 = vmand %vm279, %vm275
      %vm284 = vmand %vm280, %vm276
      %vm285 = vmand %vm281, %vm277
      %vm286 = vmand %vm282, %vm278
      %v287 = vadd.s32 %v253, 8
      %v288 = vadd.s32 %v260, 8
      %v289 = vadd.s32 %v267, 8
      %v290 = vadd.s32 %v274, 8
      %v291 = vsel %vm283, %v287, %v253
      %v292 = vsel %vm284, %v288, %v260
      %v293 = vsel %vm285, %v289, %v267
      %v294 = vsel %vm286, %v290, %v274
      %vm295 = vcmp.eq.s32.totalorder %v291, 0
      %vm296 = vcmp.eq.s32.totalorder %v292, 0
      %vm297 = vcmp.eq.s32.totalorder %v293, 0
      %vm298 = vcmp.eq.s32.totalorder %v294, 0
      %v299 = vrot.slane %v238, 7
      %v300 = vrot.slane %v239, 7
      %v301 = vrot.slane %v240, 7
      %v302 = vrot.slane %v241, 7
      %vm303 = vcmp.lt.s32.totalorder %v243, 1
      %v304 = vsel %vm303, %v301, %v302
      %v305 = vsel %vm303, %v300, %v301
      %v306 = vsel %vm303, %v299, %v300
      %v307 = vsel %vm303, %v302, %v299
      %v308 = vsel %vm295, 1, 0
      %v309 = vsel %vm296, 1, 0
      %v310 = vsel %vm297, 1, 0
      %v311 = vsel %vm298, 1, 0
      %vm312 = vcmp.eq.s32.totalorder %v308, 1
      %vm313 = vcmp.eq.s32.totalorder %v309, 1
      %vm314 = vcmp.eq.s32.totalorder %v310, 1
      %vm315 = vcmp.eq.s32.totalorder %v311, 1
      %v316 = vsel %vm312, 0.0, %v307
      %v317 = vsel %vm313, 0.0, %v306
      %v318 = vsel %vm314, 0.0, %v305
      %v319 = vsel %vm315, 0.0, %v304
      %vm320 = vcmp.eq.s32.totalorder %v291, 7
      %vm321 = vcmp.eq.s32.totalorder %v292, 7
      %vm322 = vcmp.eq.s32.totalorder %v293, 7
      %vm323 = vcmp.eq.s32.totalorder %v294, 7
      %v324 = vrot.slane %v238, 1
      %v325 = vrot.slane %v239, 1
      %v326 = vrot.slane %v240, 1
      %v327 = vrot.slane %v241, 1
      %vm328 = vcmp.lt.s32.totalorder %v243, 7
      %v329 = vsel %vm328, %v326, %v327
      %v330 = vsel %vm328, %v325, %v326
      %v331 = vsel %vm328, %v324, %v325
      %v332 = vsel %vm328, %v327, %v324
      %v333 = vsel %vm320, 1, 0
      %v334 = vsel %vm321, 1, 0
      %v335 = vsel %vm322, 1, 0
      %v336 = vsel %vm323, 1, 0
      %vm337 = vcmp.eq.s32.totalorder %v333, 1
      %vm338 = vcmp.eq.s32.totalorder %v334, 1
      %vm339 = vcmp.eq.s32.totalorder %v335, 1
      %vm340 = vcmp.eq.s32.totalorder %v336, 1
      %v341 = vsel %vm337, 0.0, %v331
      %v342 = vsel %vm338, 0.0, %v330
      %v343 = vsel %vm339, 0.0, %v329
      %v344 = vsel %vm340, 0.0, %v332
      %349 = vrot.lane.b32.xlu0 %v238, 8
      %v350 = vpop.permute.xlu0 %349
      %351 = vrot.lane.b32.xlu0 %v239, 8
      %v352 = vpop.permute.xlu0 %351
      %353 = vrot.lane.b32.xlu0 %v240, 8
      %v354 = vpop.permute.xlu0 %353
      %355 = vrot.lane.b32.xlu0 %v241, 8
      %v356 = vpop.permute.xlu0 %355
      %365 = vrot.lane.b32.xlu0 %v341, 16
      %v366 = vpop.permute.xlu0 %365
      %367 = vrot.lane.b32.xlu0 %v342, 16
      %v368 = vpop.permute.xlu0 %367
      %369 = vrot.lane.b32.xlu0 %v343, 16
      %v370 = vpop.permute.xlu0 %369
      %371 = vrot.lane.b32.xlu0 %v344, 16
      %v372 = vpop.permute.xlu0 %371
      %vm377 = vcmask 64512
      %v378 = vsel %vm377, %v316, %v350
      %v379 = vsel %vm377, %v317, %v352
      %v380 = vsel %vm377, %v318, %v354
      %v381 = vsel %vm377, %v319, %v356
      %vm382 = vcmask 130048
      %v383 = vsel %vm382, %v378, %v366
      %v384 = vsel %vm382, %v379, %v368
      %v385 = vsel %vm382, %v380, %v370
      %v386 = vsel %vm382, %v381, %v372
      %v387 = vpack.c.bf16 %v384, %v383
      %v388 = vpack.c.bf16 %v386, %v385
      %v389 = vld [vmem:[%s3] sm:$0xf]
      %v390 = vld [vmem:[%s3 + $0x4] sm:$0xf]
      %v391 = vld [vmem:[%s3 + $0x8] sm:$0xf]
      %v395 = vunpack.c.l.b16 %v389
      %v396 = vunpack.c.l.b16 %v390
      %v397 = vunpack.c.l.b16 %v391
      %v398 = vpack.c.b16 %v396, %v395
      %v399 = vpack.c.b16 %v397, %v397
      %vm401 = vcmask 195584
      %v403 = vsel %vm401, %v387, 0
      %v406 = vsel %vm401, %v388, 0
      %vm408 = vcmask 1043456
      %v410 = vsel %vm408, %v399, 0
      %412 = vmatprep.subr.bf16.mxu0 0
      %413 = vmatpush1.bf16.msra.mxu0 %v398
      %414 = vmatprep.subr.bf16.mxu0 0
      %415 = vmatpush1.bf16.msra.mxu0 %v410
      %416 = vmatprep.subr.bf16.mxu0 0
      %417 = vmatpush1.bf16.msra.mxu0 0
      %418 = vmatprep.subr.bf16.mxu0 0
      %419 = vmatpush1.bf16.msra.mxu0 0
      %420 = vmatprep.subr.bf16.mxu0 0
      %421 = vmatpush1.bf16.msra.mxu0 0
      %422 = vmatprep.subr.bf16.mxu0 0
      %423 = vmatpush1.bf16.msra.mxu0 0
      %424 = vmatprep.subr.bf16.mxu0 0
      %425 = vmatpush1.bf16.msra.mxu0 0
      %426 = vmatprep.subr.bf16.mxu0 0
      %427 = vmatpush1.bf16.msra.mxu0 0
      %428 = vmatprep.subr.bf16.mxu0 0
      %429 = vmatpush1.bf16.msra.mxu0 0
      %430 = vmatprep.subr.bf16.mxu0 0
      %431 = vmatpush1.bf16.msra.mxu0 0
      %432 = vmatprep.subr.bf16.mxu0 0
      %433 = vmatpush1.bf16.msra.mxu0 0
      %434 = vmatprep.subr.bf16.mxu0 0
      %435 = vmatpush1.bf16.msra.mxu0 0
      %436 = vmatprep.subr.bf16.mxu0 0
      %437 = vmatpush1.bf16.msra.mxu0 0
      %438 = vmatprep.subr.bf16.mxu0 0
      %439 = vmatpush1.bf16.msra.mxu0 0
      %440 = vmatprep.subr.bf16.mxu0 0
      %441 = vmatpush1.bf16.msra.mxu0 0
      %442 = vmatprep.subr.bf16.mxu0 0
      %443 = vmatpush1.bf16.msra.mxu0 0
      %444 = vmatprep.mubr.bf16.mxu0 0
      %445 = vmatmul.mubr.bf16.gmra.mrb[0].mxu0 %v403
      %v446 = vpop.f32.mrb[0].mxu0
      %v447 = vadd.f32 0.0, %v446
      %v448 = vpop.f32.mrb[0].mxu0
      %v449 = vpop.f32.mrb[0].mxu0
      %v450 = vadd.f32 0.0, %v449
      %v451 = vpop.f32.mrb[0].mxu0
      %452 = vmatprep.mubr.bf16.mxu0 0
      %453 = vmatmul.mubr.bf16.gmra.mrb[0].mxu0 %v406
      %v454 = vpop.f32.mrb[0].mxu0
      %v455 = vadd.f32 0.0, %v454
      %v456 = vpop.f32.mrb[0].mxu0
      %v457 = vpop.f32.mrb[0].mxu0
      %v458 = vadd.f32 0.0, %v457
      %v459 = vpop.f32.mrb[0].mxu0
      %460 = vdwg.mxu0
      %v461 = vpack.c.bf16 %v450, %v447
      %v462 = vpack.c.bf16 %v458, %v455
      %v465 = vunpack.c.l.b16 %v461
      %v466 = vunpack.c.h.b16 %v461
      %v467 = vunpack.c.l.b16 %v462
      %v468 = vunpack.c.h.b16 %v462
      %v469 = vpack.c.b16 %v465, %v465
      %v470 = vpack.c.b16 %v466, %v466
      %v471 = vpack.c.b16 %v467, %v467
      %v472 = vpack.c.b16 %v468, %v468
      %vm477 = vcmask 125952
      %478 = vst.msk [vmem:[%s232] sm:$0xf] %vm477, %v469
      %479 = vst.msk [vmem:[%s232 + $0x4] sm:$0xf] %vm477, %v470
      %480 = vst.msk [vmem:[%s232 + $0x8] sm:$0xf] %vm477, %v471
      %481 = vst.msk [vmem:[%s232 + $0xc] sm:$0xf] %vm477, %v472
      %v482 = vsel %vm382, %v447, 0.0
      %v483 = vsel %vm382, %v450, 0.0
      %v484 = vadd.f32 %v482, %v483
      %v485 = vsel %vm382, %v455, 0.0
      %v486 = vadd.f32 %v484, %v485
      %v487 = vsel %vm382, %v458, 0.0
      %v488 = vadd.f32 %v486, %v487
      %v489 = vrot.slane %v488, 4
      %v490 = vadd.f32 %v488, %v489
      %v491 = vrot.slane %v490, 2
      %v492 = vadd.f32 %v490, %v491
      %v493 = vrot.slane %v492, 1
      %v494 = vadd.f32 %v492, %v493
      %v495 = vmul.f32 %v447, %v447
      %v496 = vmul.f32 %v450, %v450
      %v497 = vmul.f32 %v455, %v455
      %v498 = vmul.f32 %v458, %v458
      %v499 = vsel %vm382, %v495, 0.0
      %v500 = vsel %vm382, %v496, 0.0
      %v501 = vadd.f32 %v499, %v500
      %v502 = vsel %vm382, %v497, 0.0
      %v503 = vadd.f32 %v501, %v502
      %v504 = vsel %vm382, %v498, 0.0
      %v505 = vadd.f32 %v503, %v504
      %v506 = vrot.slane %v505, 4
      %v507 = vadd.f32 %v505, %v506
      %v508 = vrot.slane %v507, 2
      %v509 = vadd.f32 %v507, %v508
      %v510 = vrot.slane %v509, 1
      %v511 = vadd.f32 %v509, %v510
      %513 = vrot.lane.b32.xlu0 %v511, 16
      %v514 = vpop.permute.xlu0 %513
      %v516 = vsel %vm382, %v494, %v514
      %vm517 = vcmask 253952
      %518 = vst.msk [vmem:[%s236] sm:$0x1] %vm517, %v516
      %s519 = smul.u32 4, %s17
      %p520 = scmp.lt.s32.totalorder %s519, 7
      %s521 = scalar_select %p520, %s519, 7
      %s522 = smul.addr %s521, 4
      %s523 = scalar_lea.vmem %s4, %s522
      %p524 = scmp.lt.s32.totalorder %s17, 1
      %s525 = scalar_select %p524, %s17, 1
      %s526 = scalar_lea.vmem %s5, %s525
      // Predicated region
      $region37: #{mpnn_block_separate_forward.5} parent=35 // pred_check
        %p527 = pneg %p124
      $region38: #{mpnn_block_separate_forward.5} parent=35 // pred_check_branch
        %529 = sbr.rel (%p527) target = $region40
      $region39: #{mpnn_block_separate_forward.5} parent=35 // pred_region
        %s530 = smul.u32 4, %s17
      $region40: #{mpnn_block_separate_forward.5} parent=35 // pred_fallthru
        _
      // Predicated region
      $region41: #{mpnn_block_separate_forward.5} parent=35 // pred_check
        %p531 = pneg %p150
      $region42: #{mpnn_block_separate_forward.5} parent=35 // pred_check_branch
        %533 = sbr.rel (%p531) target = $region44
      $region43: #{mpnn_block_separate_forward.5} parent=35 // pred_region
        _
      $region44: #{mpnn_block_separate_forward.5} parent=35 // pred_fallthru
        _
    $region36: #{mpnn_block_separate_forward.5} parent=5 // pred_fallthru
      _
    %p534 = scmp.le.s32.totalorder 2, %s12
    // Predicated region
    $region45: #{mpnn_block_separate_forward.5} parent=5 // pred_check
      %p535 = pneg %p534
    $region46: #{mpnn_block_separate_forward.5} parent=5 // pred_check_branch
      %537 = sbr.rel (%p535) target = $region48
    $region47: #{mpnn_block_separate_forward.5} parent=5 // pred_region
      %s538 = ssub.s32 %s12, 2
      // Predicated region
      $region49: #{mpnn_block_separate_forward.5} parent=47 // pred_check
        %p539 = pneg %p130
      $region50: #{mpnn_block_separate_forward.5} parent=47 // pred_check_branch
        %541 = sbr.rel (%p539) target = $region52
      $region51: #{mpnn_block_separate_forward.5} parent=47 // pred_region
        %s542 = smul.u32 4, %s18
        %p543 = scmp.lt.s32.totalorder %s542, 7
        %s544 = scalar_select %p543, %s542, 7
        %s545 = smul.addr %s544, 4
        %s546 = scalar_lea.vmem %s4, %s545
      $region52: #{mpnn_block_separate_forward.5} parent=47 // pred_fallthru
        _
      // Predicated region
      $region53: #{mpnn_block_separate_forward.5} parent=47 // pred_check
        %p547 = pneg %p156
      $region54: #{mpnn_block_separate_forward.5} parent=47 // pred_check_branch
        %549 = sbr.rel (%p547) target = $region56
      $region55: #{mpnn_block_separate_forward.5} parent=47 // pred_region
        %p550 = scmp.lt.s32.totalorder %s18, 1
        %s551 = scalar_select %p550, %s18, 1
        %s552 = scalar_lea.vmem %s5, %s551
      $region56: #{mpnn_block_separate_forward.5} parent=47 // pred_fallthru
        _
    $region48: #{mpnn_block_separate_forward.5} parent=5 // pred_fallthru
      _
  $region6: #{mpnn_block_separate_forward.5} parent=0 // loop_footer
    %s16 = sadd.s32 1, %s12
  $region7: #{mpnn_block_separate_forward.5} parent=0 // loop_footer_branch
    %11 = sbr.rel target = $region3
  $region8: #{mpnn_block_separate_forward.5} parent=0 // loop_exit
    _

// kernel: mpnn_block_separate_forward.6
$region0: #{mpnn_block_separate_forward.6}
  #allocation0 [shape = 'u32[]', space=smem, size = 0x4, offset = 0x4, fixed_abs, tag = 'smem constant byte address 0x4 - core index']
  #allocation1 [shape = 'u32[144,128]{1,0:T(1,128)}', space=vmem, size = 0x12000, scoped, tag = 'internal scratch']
  %s0 = inlined_call_operand.vmem [shape: bf16[64,16], index: 0, kind: input, shape index: {}]
  %s1 = inlined_call_operand.vmem [shape: f32[1,16], index: 1, kind: input, shape index: {}]
  %s2 = inlined_call_operand.vmem [shape: f32[1,16], index: 2, kind: input, shape index: {}]
  %s3 = inlined_call_operand.vmem [shape: bf16[48,16], index: 3, kind: input, shape index: {}]
  %s4 = inlined_call_operand.vmem [shape: bf16[64,16], index: 4, kind: output, shape index: {0}]
  %s5 = inlined_call_operand.vmem [shape: f32[2,1,32], index: 5, kind: output, shape index: {1}]
  %6 = xla_tuple %s4, %s5
  %s7 = sld [smem:[#allocation0]]
  $region57: #{mpnn_block_separate_forward.6} parent=0
    _
  %s9 = ssub.s32 1, %s7
  %s10 = scalar_select 0, %s9, %s7
  loop: start=0, step=1, limit=4
  $region2: #{mpnn_block_separate_forward.6} parent=0 // loop_pre_header
    _
  $region3: #{mpnn_block_separate_forward.6} parent=0 // loop_header
    %s12 = sphi 0, %s16
    %p13 = scmp.ge.s32.totalorder %s12, 4
    %s22 = sphi 0, %s24
    %s25 = sphi 0, %s22
    %s26 = sphi 0, %s25
    %s42 = sphi 0, %s26
    %s46 = sphi 0, %s46
    %s48 = sphi 0, %s46
    %s49 = sphi 0, %s48
    %s63 = sphi 0, %s49
    %s67 = sphi 0, %s67
    %s69 = sphi 0, %s67
    %s70 = sphi 0, %s69
    %s84 = sphi 0, %s70
    %s88 = sphi 0, %s88
    %s90 = sphi 0, %s88
    %s91 = sphi 0, %s90
    %s105 = sphi 0, %s91
    %s111 = sphi 0, %s113
    %s114 = sphi 0, %s111
    %s115 = sphi 0, %s114
    %s131 = sphi 0, %s115
    %s137 = sphi 0, %s139
    %s140 = sphi 0, %s137
    %s141 = sphi 0, %s140
    %s157 = sphi 0, %s141
  $region4: #{mpnn_block_separate_forward.6} parent=0 // loop_header_branch
    %15 = sbr.rel (%p13) target = $region8
  $region5: #{mpnn_block_separate_forward.6} parent=0 // loop_body
    %s17 = ssub.s32 %s12, 1
    %s18 = ssub.s32 %s12, 2
    %s19 = sadd.s32 %s12, 1
    %s20 = ssub.s32 %s12, %s19
    %p21 = scmp.eq.s32.totalorder %s20, 0
    %s23 = sadd.s32 %s22, 1
    %s24 = scalar_select %p21, %s22, %s23
    %p27 = pneg %p21
    %p28 = scmp.eq.s32.totalorder %s12, 1
    %p29 = por %p27, %p28
    %p30 = scmp.ne.s32.totalorder %s22, %s25
    %p31 = scmp.eq.s32.totalorder %s12, 0
    %p32 = por %p30, %p31
    %p33 = scmp.ne.s32.totalorder %s22, %s25
    %p34 = scmp.eq.s32.totalorder %s17, 1
    %p35 = por %p33, %p34
    %p36 = scmp.ne.s32.totalorder %s25, %s26
    %p37 = scmp.eq.s32.totalorder %s17, 0
    %p38 = por %p36, %p37
    %p39 = scmp.ne.s32.totalorder %s25, %s26
    %p40 = scmp.eq.s32.totalorder %s18, 1
    %p41 = por %p39, %p40
    %p43 = scmp.ne.s32.totalorder %s26, %s42
    %p44 = scmp.eq.s32.totalorder %s18, 0
    %p45 = por %p43, %p44
    %s47 = sadd.s32 %s46, 1
    %p50 = scmp.eq.s32.totalorder %s12, 1
    %p51 = scmp.ne.s32.totalorder %s46, %s48
    %p52 = scmp.eq.s32.totalorder %s12, 0
    %p53 = por %p51, %p52
    %p54 = scmp.ne.s32.totalorder %s46, %s48
    %p55 = scmp.eq.s32.totalorder %s17, 1
    %p56 = por %p54, %p55
    %p57 = scmp.ne.s32.totalorder %s48, %s49
    %p58 = scmp.eq.s32.totalorder %s17, 0
    %p59 = por %p57, %p58
    %p60 = scmp.ne.s32.totalorder %s48, %s49
    %p61 = scmp.eq.s32.totalorder %s18, 1
    %p62 = por %p60, %p61
    %p64 = scmp.ne.s32.totalorder %s49, %s63
    %p65 = scmp.eq.s32.totalorder %s18, 0
    %p66 = por %p64, %p65
    %s68 = sadd.s32 %s67, 1
    %p71 = scmp.eq.s32.totalorder %s12, 1
    %p72 = scmp.ne.s32.totalorder %s67, %s69
    %p73 = scmp.eq.s32.totalorder %s12, 0
    %p74 = por %p72, %p73
    %p75 = scmp.ne.s32.totalorder %s67, %s69
    %p76 = scmp.eq.s32.totalorder %s17, 1
    %p77 = por %p75, %p76
    %p78 = scmp.ne.s32.totalorder %s69, %s70
    %p79 = scmp.eq.s32.totalorder %s17, 0
    %p80 = por %p78, %p79
    %p81 = scmp.ne.s32.totalorder %s69, %s70
    %p82 = scmp.eq.s32.totalorder %s18, 1
    %p83 = por %p81, %p82
    %p85 = scmp.ne.s32.totalorder %s70, %s84
    %p86 = scmp.eq.s32.totalorder %s18, 0
    %p87 = por %p85, %p86
    %s89 = sadd.s32 %s88, 1
    %p92 = scmp.eq.s32.totalorder %s12, 1
    %p93 = scmp.ne.s32.totalorder %s88, %s90
    %p94 = scmp.eq.s32.totalorder %s12, 0
    %p95 = por %p93, %p94
    %p96 = scmp.ne.s32.totalorder %s88, %s90
    %p97 = scmp.eq.s32.totalorder %s17, 1
    %p98 = por %p96, %p97
    %p99 = scmp.ne.s32.totalorder %s90, %s91
    %p100 = scmp.eq.s32.totalorder %s17, 0
    %p101 = por %p99, %p100
    %p102 = scmp.ne.s32.totalorder %s90, %s91
    %p103 = scmp.eq.s32.totalorder %s18, 1
    %p104 = por %p102, %p103
    %p106 = scmp.ne.s32.totalorder %s91, %s105
    %p107 = scmp.eq.s32.totalorder %s18, 0
    %p108 = por %p106, %p107
    %s109 = ssub.s32 %s12, %s19
    %p110 = scmp.eq.s32.totalorder %s109, 0
    %s112 = sadd.s32 %s111, 1
    %s113 = scalar_select %p110, %s111, %s112
    %p116 = pneg %p110
    %p117 = scmp.eq.s32.totalorder %s12, 1
    %p118 = por %p116, %p117
    %p119 = scmp.ne.s32.totalorder %s111, %s114
    %p120 = scmp.eq.s32.totalorder %s12, 0
    %p121 = por %p119, %p120
    %p122 = scmp.ne.s32.totalorder %s111, %s114
    %p123 = scmp.eq.s32.totalorder %s17, 1
    %p124 = por %p122, %p123
    %p125 = scmp.ne.s32.totalorder %s114, %s115
    %p126 = scmp.eq.s32.totalorder %s17, 0
    %p127 = por %p125, %p126
    %p128 = scmp.ne.s32.totalorder %s114, %s115
    %p129 = scmp.eq.s32.totalorder %s18, 1
    %p130 = por %p128, %p129
    %p132 = scmp.ne.s32.totalorder %s115, %s131
    %p133 = scmp.eq.s32.totalorder %s18, 0
    %p134 = por %p132, %p133
    %s135 = ssub.s32 %s12, %s19
    %p136 = scmp.eq.s32.totalorder %s135, 0
    %s138 = sadd.s32 %s137, 1
    %s139 = scalar_select %p136, %s137, %s138
    %p142 = pneg %p136
    %p143 = scmp.eq.s32.totalorder %s12, 1
    %p144 = por %p142, %p143
    %p145 = scmp.ne.s32.totalorder %s137, %s140
    %p146 = scmp.eq.s32.totalorder %s12, 0
    %p147 = por %p145, %p146
    %p148 = scmp.ne.s32.totalorder %s137, %s140
    %p149 = scmp.eq.s32.totalorder %s17, 1
    %p150 = por %p148, %p149
    %p151 = scmp.ne.s32.totalorder %s140, %s141
    %p152 = scmp.eq.s32.totalorder %s17, 0
    %p153 = por %p151, %p152
    %p154 = scmp.ne.s32.totalorder %s140, %s141
    %p155 = scmp.eq.s32.totalorder %s18, 1
    %p156 = por %p154, %p155
    %p158 = scmp.ne.s32.totalorder %s141, %s157
    %p159 = scmp.eq.s32.totalorder %s18, 0
    %p160 = por %p158, %p159
    %p161 = scmp.le.s32.totalorder 1, %s12
    %p162 = scmp.lt.s32.totalorder %s12, 3
    %p163 = pnand %p161, %p162
    %p164 = pneg %p163
    // Predicated region
    $region9: #{mpnn_block_separate_forward.6} parent=5 // pred_check
      _
    $region10: #{mpnn_block_separate_forward.6} parent=5 // pred_check_branch
      %166 = sbr.rel (%p163) target = $region12
    $region11: #{mpnn_block_separate_forward.6} parent=5 // pred_region
      %s167 = ssub.s32 %s12, 1
      // Predicated region
      $region13: #{mpnn_block_separate_forward.6} parent=11 // pred_check
        %p168 = pneg %p59
      $region14: #{mpnn_block_separate_forward.6} parent=11 // pred_check_branch
        %170 = sbr.rel (%p168) target = $region16
      $region15: #{mpnn_block_separate_forward.6} parent=11 // pred_region
        _
      $region16: #{mpnn_block_separate_forward.6} parent=11 // pred_fallthru
        _
      // Predicated region
      $region17: #{mpnn_block_separate_forward.6} parent=11 // pred_check
        %p171 = pneg %p80
      $region18: #{mpnn_block_separate_forward.6} parent=11 // pred_check_branch
        %173 = sbr.rel (%p171) target = $region20
      $region19: #{mpnn_block_separate_forward.6} parent=11 // pred_region
        _
      $region20: #{mpnn_block_separate_forward.6} parent=11 // pred_fallthru
        _
      // Predicated region
      $region21: #{mpnn_block_separate_forward.6} parent=11 // pred_check
        %p174 = pneg %p101
      $region22: #{mpnn_block_separate_forward.6} parent=11 // pred_check_branch
        %176 = sbr.rel (%p174) target = $region24
      $region23: #{mpnn_block_separate_forward.6} parent=11 // pred_region
        _
      $region24: #{mpnn_block_separate_forward.6} parent=11 // pred_fallthru
        _
    $region12: #{mpnn_block_separate_forward.6} parent=5 // pred_fallthru
      _
    %p177 = scmp.lt.s32.totalorder %s12, 2
    // Predicated region
    $region25: #{mpnn_block_separate_forward.6} parent=5 // pred_check
      %p178 = pneg %p177
    $region26: #{mpnn_block_separate_forward.6} parent=5 // pred_check_branch
      %180 = sbr.rel (%p178) target = $region28
    $region27: #{mpnn_block_separate_forward.6} parent=5 // pred_region
      // Predicated region
      $region29: #{mpnn_block_separate_forward.6} parent=27 // pred_check
        %p181 = pneg %p32
      $region30: #{mpnn_block_separate_forward.6} parent=27 // pred_check_branch
        %183 = sbr.rel (%p181) target = $region32
      $region31: #{mpnn_block_separate_forward.6} parent=27 // pred_region
        %s184 = smul.u32 4, %s12
        %p185 = scmp.lt.s32.totalorder %s184, 7
        %s186 = scalar_select %p185, %s184, 7
        %s187 = smul.addr %s186, 4
        %s188 = scalar_lea.vmem %s0, %s187
        %s189 = smul.u32 4, %s12
      $region32: #{mpnn_block_separate_forward.6} parent=27 // pred_fallthru
        _
    $region28: #{mpnn_block_separate_forward.6} parent=5 // pred_fallthru
      _
    %p190 = scmp.le.s32.totalorder 1, %s12
    %p191 = scmp.lt.s32.totalorder %s12, 3
    %p192 = pnand %p190, %p191
    %p193 = pneg %p192
    // Predicated region
    $region33: #{mpnn_block_separate_forward.6} parent=5 // pred_check
      _
    $region34: #{mpnn_block_separate_forward.6} parent=5 // pred_check_branch
      %195 = sbr.rel (%p192) target = $region36
    $region35: #{mpnn_block_separate_forward.6} parent=5 // pred_region
      %s196 = ssub.s32 %s12, 1
      %s197 = smul.u32 4, %s17
      %p198 = scmp.lt.s32.totalorder %s197, 7
      %s199 = scalar_select %p198, %s197, 7
      %s200 = smul.addr %s199, 4
      %s201 = scalar_lea.vmem %s0, %s200
      %p202 = pneg %p38
      %p203 = pneg %p35
      %p204 = pneg %p59
      %p205 = pneg %p56
      %p206 = pneg %p80
      %p207 = pneg %p77
      %p208 = pneg %p101
      %p209 = pneg %p98
      %p210 = pneg %p127
      %p211 = pneg %p124
      %s212 = smul.u32 4, %s17
      %p213 = scmp.lt.s32.totalorder %s212, 7
      %s214 = scalar_select %p213, %s212, 7
      %s215 = smul.addr %s214, 4
      %s216 = scalar_lea.vmem %s4, %s215
      %p217 = pneg %p153
      %p218 = pneg %p150
      %p219 = scmp.lt.s32.totalorder %s17, 1
      %s220 = scalar_select %p219, %s17, 1
      %s221 = scalar_lea.vmem %s5, %s220
      %s222 = smul.u32 4, %s17
      %p223 = scmp.lt.s32.totalorder %s222, 7
      %s224 = scalar_select %p223, %s222, 7
      %s225 = smul.addr %s224, 4
      %s226 = scalar_lea.vmem %s0, %s225
      %s227 = smul.u32 4, %s17
      %s228 = smul.u32 4, %s17
      %p229 = scmp.lt.s32.totalorder %s228, 7
      %s230 = scalar_select %p229, %s228, 7
      %s231 = smul.addr %s230, 4
      %s232 = scalar_lea.vmem %s4, %s231
      %s233 = smul.u32 4, %s17
      %p234 = scmp.lt.s32.totalorder %s17, 1
      %s235 = scalar_select %p234, %s17, 1
      %s236 = scalar_lea.vmem %s5, %s235
      %v238 = vld [vmem:[%s226] sm:$0xf]
      %v239 = vld [vmem:[%s226 + $0x4] sm:$0xf]
      %v240 = vld [vmem:[%s226 + $0x8] sm:$0xf]
      %v241 = vld [vmem:[%s226 + $0xc] sm:$0xf]
      %v242 = vunpack.c.l.bf16 %v238
      %v243 = vunpack.c.l.bf16 %v239
      %v244 = vunpack.c.l.bf16 %v240
      %v245 = vunpack.c.l.bf16 %v241
      %v246 = vld [vmem:[%s1] sm:$0x1]
      %v248 = vlaneseq
      %v249 = vshrl.u32 %v248, 7
      %v250 = vsub.s32 0, %v249
      %v251 = vrot.slane %v246, %v250
      %v253 = vmul.f32 %v242, %v251
      %v254 = vmul.f32 %v243, %v251
      %v255 = vmul.f32 %v244, %v251
      %v256 = vmul.f32 %v245, %v251
      %v257 = vld [vmem:[%s2] sm:$0x1]
      %v259 = vlaneseq
      %v260 = vshrl.u32 %v259, 7
      %v261 = vsub.s32 0, %v260
      %v262 = vrot.slane %v257, %v261
      %v264 = vadd.f32 %v253, %v262
      %v265 = vadd.f32 %v254, %v262
      %v266 = vadd.f32 %v255, %v262
      %v267 = vadd.f32 %v256, %v262
      %v268 = vmax.f32 %v264, 0.0
      %v269 = vmax.f32 %v265, 0.0
      %v270 = vmax.f32 %v266, 0.0
      %v271 = vmax.f32 %v267, 0.0
      %v272 = vlaneseq
      %v273 = vshrl.u32 %v272, 7
      %v274 = vadd.s32 %v273, 8
      %v275 = vadd.s32 %v273, 16
      %v276 = vadd.s32 %v273, 24
      %vm277 = vcmp.lt.s32.totalorder %v273, 0
      %v278 = vsub.s32 0, %v273
      %v279 = vsel %vm277, %v278, %v273
      %v280 = vshrl.u32 %v279, 3
      %v281 = vand.u32 %v279, 7
      %v282 = vsub.s32 0, %v281
      %v283 = vsel %vm277, %v282, %v281
      %vm284 = vcmp.lt.s32.totalorder %v274, 0
      %v285 = vsub.s32 0, %v274
      %v286 = vsel %vm284, %v285, %v274
      %v287 = vshrl.u32 %v286, 3
      %v288 = vand.u32 %v286, 7
      %v289 = vsub.s32 0, %v288
      %v290 = vsel %vm284, %v289, %v288
      %vm291 = vcmp.lt.s32.totalorder %v275, 0
      %v292 = vsub.s32 0, %v275
      %v293 = vsel %vm291, %v292, %v275
      %v294 = vshrl.u32 %v293, 3
      %v295 = vand.u32 %v293, 7
      %v296 = vsub.s32 0, %v295
      %v297 = vsel %vm291, %v296, %v295
      %vm298 = vcmp.lt.s32.totalorder %v276, 0
      %v299 = vsub.s32 0, %v276
      %v300 = vsel %vm298, %v299, %v276
      %v301 = vshrl.u32 %v300, 3
      %v302 = vand.u32 %v300, 7
      %v303 = vsub.s32 0, %v302
      %v304 = vsel %vm298, %v303, %v302
      %vm305 = vcmp.ne.s32.totalorder %v283, 0
      %vm306 = vcmp.ne.s32.totalorder %v290, 0
      %vm307 = vcmp.ne.s32.totalorder %v297, 0
      %vm308 = vcmp.ne.s32.totalorder %v304, 0
      %vm309 = vcmp.lt.s32.totalorder %v283, 0
      %vm310 = vcmp.lt.s32.totalorder %v290, 0
      %vm311 = vcmp.lt.s32.totalorder %v297, 0
      %vm312 = vcmp.lt.s32.totalorder %v304, 0
      %vm313 = vmand %vm309, %vm305
      %vm314 = vmand %vm310, %vm306
      %vm315 = vmand %vm311, %vm307
      %vm316 = vmand %vm312, %vm308
      %v317 = vadd.s32 %v283, 8
      %v318 = vadd.s32 %v290, 8
      %v319 = vadd.s32 %v297, 8
      %v320 = vadd.s32 %v304, 8
      %v321 = vsel %vm313, %v317, %v283
      %v322 = vsel %vm314, %v318, %v290
      %v323 = vsel %vm315, %v319, %v297
      %v324 = vsel %vm316, %v320, %v304
      %vm325 = vcmp.eq.s32.totalorder %v321, 0
      %vm326 = vcmp.eq.s32.totalorder %v322, 0
      %vm327 = vcmp.eq.s32.totalorder %v323, 0
      %vm328 = vcmp.eq.s32.totalorder %v324, 0
      %v329 = vrot.slane %v268, 7
      %v330 = vrot.slane %v269, 7
      %v331 = vrot.slane %v270, 7
      %v332 = vrot.slane %v271, 7
      %vm333 = vcmp.lt.s32.totalorder %v273, 1
      %v334 = vsel %vm333, %v331, %v332
      %v335 = vsel %vm333, %v330, %v331
      %v336 = vsel %vm333, %v329, %v330
      %v337 = vsel %vm333, %v332, %v329
      %v338 = vsel %vm325, 1, 0
      %v339 = vsel %vm326, 1, 0
      %v340 = vsel %vm327, 1, 0
      %v341 = vsel %vm328, 1, 0
      %vm342 = vcmp.eq.s32.totalorder %v338, 1
      %vm343 = vcmp.eq.s32.totalorder %v339, 1
      %vm344 = vcmp.eq.s32.totalorder %v340, 1
      %vm345 = vcmp.eq.s32.totalorder %v341, 1
      %v346 = vsel %vm342, 0.0, %v337
      %v347 = vsel %vm343, 0.0, %v336
      %v348 = vsel %vm344, 0.0, %v335
      %v349 = vsel %vm345, 0.0, %v334
      %vm350 = vcmp.eq.s32.totalorder %v321, 7
      %vm351 = vcmp.eq.s32.totalorder %v322, 7
      %vm352 = vcmp.eq.s32.totalorder %v323, 7
      %vm353 = vcmp.eq.s32.totalorder %v324, 7
      %v354 = vrot.slane %v268, 1
      %v355 = vrot.slane %v269, 1
      %v356 = vrot.slane %v270, 1
      %v357 = vrot.slane %v271, 1
      %vm358 = vcmp.lt.s32.totalorder %v273, 7
      %v359 = vsel %vm358, %v356, %v357
      %v360 = vsel %vm358, %v355, %v356
      %v361 = vsel %vm358, %v354, %v355
      %v362 = vsel %vm358, %v357, %v354
      %v363 = vsel %vm350, 1, 0
      %v364 = vsel %vm351, 1, 0
      %v365 = vsel %vm352, 1, 0
      %v366 = vsel %vm353, 1, 0
      %vm367 = vcmp.eq.s32.totalorder %v363, 1
      %vm368 = vcmp.eq.s32.totalorder %v364, 1
      %vm369 = vcmp.eq.s32.totalorder %v365, 1
      %vm370 = vcmp.eq.s32.totalorder %v366, 1
      %v371 = vsel %vm367, 0.0, %v361
      %v372 = vsel %vm368, 0.0, %v360
      %v373 = vsel %vm369, 0.0, %v359
      %v374 = vsel %vm370, 0.0, %v362
      %379 = vrot.lane.b32.xlu0 %v268, 16
      %v380 = vpop.permute.xlu0 %379
      %381 = vrot.lane.b32.xlu0 %v269, 16
      %v382 = vpop.permute.xlu0 %381
      %383 = vrot.lane.b32.xlu0 %v270, 16
      %v384 = vpop.permute.xlu0 %383
      %385 = vrot.lane.b32.xlu0 %v271, 16
      %v386 = vpop.permute.xlu0 %385
      %395 = vrot.lane.b32.xlu0 %v371, 32
      %v396 = vpop.permute.xlu0 %395
      %397 = vrot.lane.b32.xlu0 %v372, 32
      %v398 = vpop.permute.xlu0 %397
      %399 = vrot.lane.b32.xlu0 %v373, 32
      %v400 = vpop.permute.xlu0 %399
      %401 = vrot.lane.b32.xlu0 %v374, 32
      %v402 = vpop.permute.xlu0 %401
      %vm407 = vcmask 130048
      %v408 = vsel %vm407, %v346, %v380
      %v409 = vsel %vm407, %v347, %v382
      %v410 = vsel %vm407, %v348, %v384
      %v411 = vsel %vm407, %v349, %v386
      %vm412 = vcmask 261120
      %v413 = vsel %vm412, %v408, %v396
      %v414 = vsel %vm412, %v409, %v398
      %v415 = vsel %vm412, %v410, %v400
      %v416 = vsel %vm412, %v411, %v402
      %v417 = vpack.c.bf16 %v414, %v413
      %v418 = vpack.c.bf16 %v416, %v415
      %v419 = vld [vmem:[%s3] sm:$0xf]
      %v420 = vld [vmem:[%s3 + $0x4] sm:$0xf]
      %v421 = vld [vmem:[%s3 + $0x8] sm:$0xf]
      %v422 = vld [vmem:[%s3 + $0xc] sm:$0xf]
      %v423 = vld [vmem:[%s3 + $0x10] sm:$0xf]
      %v424 = vld [vmem:[%s3 + $0x14] sm:$0xf]
      %v431 = vunpack.c.l.b16 %v419
      %v432 = vunpack.c.l.b16 %v420
      %v433 = vunpack.c.l.b16 %v421
      %v434 = vunpack.c.l.b16 %v422
      %v435 = vunpack.c.l.b16 %v423
      %v436 = vunpack.c.l.b16 %v424
      %v437 = vpack.c.b16 %v432, %v431
      %v438 = vpack.c.b16 %v434, %v433
      %v439 = vpack.c.b16 %v436, %v435
      %vm443 = vcmask 392192
      %v445 = vsel %vm443, %v417, 0
      %v448 = vsel %vm443, %v418, 0
      %450 = vmatprep.subr.bf16.mxu0 0
      %451 = vmatpush1.bf16.msra.mxu0 %v437
      %452 = vmatprep.subr.bf16.mxu0 0
      %453 = vmatpush1.bf16.msra.mxu0 %v438
      %454 = vmatprep.subr.bf16.mxu0 0
      %455 = vmatpush1.bf16.msra.mxu0 %v439
      %456 = vmatprep.subr.bf16.mxu0 0
      %457 = vmatpush1.bf16.msra.mxu0 0
      %458 = vmatprep.subr.bf16.mxu0 0
      %459 = vmatpush1.bf16.msra.mxu0 0
      %460 = vmatprep.subr.bf16.mxu0 0
      %461 = vmatpush1.bf16.msra.mxu0 0
      %462 = vmatprep.subr.bf16.mxu0 0
      %463 = vmatpush1.bf16.msra.mxu0 0
      %464 = vmatprep.subr.bf16.mxu0 0
      %465 = vmatpush1.bf16.msra.mxu0 0
      %466 = vmatprep.subr.bf16.mxu0 0
      %467 = vmatpush1.bf16.msra.mxu0 0
      %468 = vmatprep.subr.bf16.mxu0 0
      %469 = vmatpush1.bf16.msra.mxu0 0
      %470 = vmatprep.subr.bf16.mxu0 0
      %471 = vmatpush1.bf16.msra.mxu0 0
      %472 = vmatprep.subr.bf16.mxu0 0
      %473 = vmatpush1.bf16.msra.mxu0 0
      %474 = vmatprep.subr.bf16.mxu0 0
      %475 = vmatpush1.bf16.msra.mxu0 0
      %476 = vmatprep.subr.bf16.mxu0 0
      %477 = vmatpush1.bf16.msra.mxu0 0
      %478 = vmatprep.subr.bf16.mxu0 0
      %479 = vmatpush1.bf16.msra.mxu0 0
      %480 = vmatprep.subr.bf16.mxu0 0
      %481 = vmatpush1.bf16.msra.mxu0 0
      %482 = vmatprep.mubr.bf16.mxu0 0
      %483 = vmatmul.mubr.bf16.gmra.mrb[0].mxu0 %v445
      %v484 = vpop.f32.mrb[0].mxu0
      %v485 = vadd.f32 0.0, %v484
      %v486 = vpop.f32.mrb[0].mxu0
      %v487 = vpop.f32.mrb[0].mxu0
      %v488 = vadd.f32 0.0, %v487
      %v489 = vpop.f32.mrb[0].mxu0
      %490 = vmatprep.mubr.bf16.mxu0 0
      %491 = vmatmul.mubr.bf16.gmra.mrb[0].mxu0 %v448
      %v492 = vpop.f32.mrb[0].mxu0
      %v493 = vadd.f32 0.0, %v492
      %v494 = vpop.f32.mrb[0].mxu0
      %v495 = vpop.f32.mrb[0].mxu0
      %v496 = vadd.f32 0.0, %v495
      %v497 = vpop.f32.mrb[0].mxu0
      %498 = vdwg.mxu0
      %v499 = vpack.c.bf16 %v488, %v485
      %v500 = vpack.c.bf16 %v496, %v493
      %v503 = vunpack.c.l.b16 %v499
      %v504 = vunpack.c.h.b16 %v499
      %v505 = vunpack.c.l.b16 %v500
      %v506 = vunpack.c.h.b16 %v500
      %v507 = vpack.c.b16 %v503, %v503
      %v508 = vpack.c.b16 %v504, %v504
      %v509 = vpack.c.b16 %v505, %v505
      %v510 = vpack.c.b16 %v506, %v506
      %vm515 = vcmask 125952
      %516 = vst.msk [vmem:[%s232] sm:$0xf] %vm515, %v507
      %517 = vst.msk [vmem:[%s232 + $0x4] sm:$0xf] %vm515, %v508
      %518 = vst.msk [vmem:[%s232 + $0x8] sm:$0xf] %vm515, %v509
      %519 = vst.msk [vmem:[%s232 + $0xc] sm:$0xf] %vm515, %v510
      %v520 = vsel %vm407, %v485, 0.0
      %v521 = vsel %vm407, %v488, 0.0
      %v522 = vadd.f32 %v520, %v521
      %v523 = vsel %vm407, %v493, 0.0
      %v524 = vadd.f32 %v522, %v523
      %v525 = vsel %vm407, %v496, 0.0
      %v526 = vadd.f32 %v524, %v525
      %v527 = vrot.slane %v526, 4
      %v528 = vadd.f32 %v526, %v527
      %v529 = vrot.slane %v528, 2
      %v530 = vadd.f32 %v528, %v529
      %v531 = vrot.slane %v530, 1
      %v532 = vadd.f32 %v530, %v531
      %v533 = vmul.f32 %v485, %v485
      %v534 = vmul.f32 %v488, %v488
      %v535 = vmul.f32 %v493, %v493
      %v536 = vmul.f32 %v496, %v496
      %v537 = vsel %vm407, %v533, 0.0
      %v538 = vsel %vm407, %v534, 0.0
      %v539 = vadd.f32 %v537, %v538
      %v540 = vsel %vm407, %v535, 0.0
      %v541 = vadd.f32 %v539, %v540
      %v542 = vsel %vm407, %v536, 0.0
      %v543 = vadd.f32 %v541, %v542
      %v544 = vrot.slane %v543, 4
      %v545 = vadd.f32 %v543, %v544
      %v546 = vrot.slane %v545, 2
      %v547 = vadd.f32 %v545, %v546
      %v548 = vrot.slane %v547, 1
      %v549 = vadd.f32 %v547, %v548
      %551 = vrot.lane.b32.xlu0 %v549, 16
      %v552 = vpop.permute.xlu0 %551
      %v554 = vsel %vm407, %v532, %v552
      %vm555 = vcmask 253952
      %556 = vst.msk [vmem:[%s236] sm:$0x1] %vm555, %v554
      %s557 = smul.u32 4, %s17
      %p558 = scmp.lt.s32.totalorder %s557, 7
      %s559 = scalar_select %p558, %s557, 7
      %s560 = smul.addr %s559, 4
      %s561 = scalar_lea.vmem %s4, %s560
      %p562 = scmp.lt.s32.totalorder %s17, 1
      %s563 = scalar_select %p562, %s17, 1
      %s564 = scalar_lea.vmem %s5, %s563
      // Predicated region
      $region37: #{mpnn_block_separate_forward.6} parent=35 // pred_check
        %p565 = pneg %p124
      $region38: #{mpnn_block_separate_forward.6} parent=35 // pred_check_branch
        %567 = sbr.rel (%p565) target = $region40
      $region39: #{mpnn_block_separate_forward.6} parent=35 // pred_region
        %s568 = smul.u32 4, %s17
      $region40: #{mpnn_block_separate_forward.6} parent=35 // pred_fallthru
        _
      // Predicated region
      $region41: #{mpnn_block_separate_forward.6} parent=35 // pred_check
        %p569 = pneg %p150
      $region42: #{mpnn_block_separate_forward.6} parent=35 // pred_check_branch
        %571 = sbr.rel (%p569) target = $region44
      $region43: #{mpnn_block_separate_forward.6} parent=35 // pred_region
        _
      $region44: #{mpnn_block_separate_forward.6} parent=35 // pred_fallthru
        _
    $region36: #{mpnn_block_separate_forward.6} parent=5 // pred_fallthru
      _
    %p572 = scmp.le.s32.totalorder 2, %s12
    // Predicated region
    $region45: #{mpnn_block_separate_forward.6} parent=5 // pred_check
      %p573 = pneg %p572
    $region46: #{mpnn_block_separate_forward.6} parent=5 // pred_check_branch
      %575 = sbr.rel (%p573) target = $region48
    $region47: #{mpnn_block_separate_forward.6} parent=5 // pred_region
      %s576 = ssub.s32 %s12, 2
      // Predicated region
      $region49: #{mpnn_block_separate_forward.6} parent=47 // pred_check
        %p577 = pneg %p130
      $region50: #{mpnn_block_separate_forward.6} parent=47 // pred_check_branch
        %579 = sbr.rel (%p577) target = $region52
      $region51: #{mpnn_block_separate_forward.6} parent=47 // pred_region
        %s580 = smul.u32 4, %s18
        %p581 = scmp.lt.s32.totalorder %s580, 7
        %s582 = scalar_select %p581, %s580, 7
        %s583 = smul.addr %s582, 4
        %s584 = scalar_lea.vmem %s4, %s583
      $region52: #{mpnn_block_separate_forward.6} parent=47 // pred_fallthru
        _
      // Predicated region
      $region53: #{mpnn_block_separate_forward.6} parent=47 // pred_check
        %p585 = pneg %p156
      $region54: #{mpnn_block_separate_forward.6} parent=47 // pred_check_branch
        %587 = sbr.rel (%p585) target = $region56
      $region55: #{mpnn_block_separate_forward.6} parent=47 // pred_region
        %p588 = scmp.lt.s32.totalorder %s18, 1
        %s589 = scalar_select %p588, %s18, 1
        %s590 = scalar_lea.vmem %s5, %s589
      $region56: #{mpnn_block_separate_forward.6} parent=47 // pred_fallthru
        _
    $region48: #{mpnn_block_separate_forward.6} parent=5 // pred_fallthru
      _
  $region6: #{mpnn_block_separate_forward.6} parent=0 // loop_footer
    %s16 = sadd.s32 1, %s12
  $region7: #{mpnn_block_separate_forward.6} parent=0 // loop_footer_branch
    %11 = sbr.rel target = $region3
  $region8: #{mpnn_block_separate_forward.6} parent=0 // loop_exit
    _

// kernel: mpnn_block_separate_forward.9
$region0: #{mpnn_block_separate_forward.9}
  #allocation0 [shape = 'u32[]', space=smem, size = 0x4, offset = 0x4, fixed_abs, tag = 'smem constant byte address 0x4 - core index']
  #allocation1 [shape = 'u32[144,128]{1,0:T(1,128)}', space=vmem, size = 0x12000, scoped, tag = 'internal scratch']
  %s0 = inlined_call_operand.vmem [shape: bf16[16,32], index: 0, kind: input, shape index: {}]
  %s1 = inlined_call_operand.vmem [shape: f32[1,32], index: 1, kind: input, shape index: {}]
  %s2 = inlined_call_operand.vmem [shape: f32[1,32], index: 2, kind: input, shape index: {}]
  %s3 = inlined_call_operand.vmem [shape: f32[16,32], index: 3, kind: output, shape index: {}]
  %s4 = sld [smem:[#allocation0]]
  $region22: #{mpnn_block_separate_forward.9} parent=0
    _
  %s6 = ssub.s32 1, %s4
  %s7 = scalar_select 0, %s6, %s4
  // Predicated region
  $region2: #{mpnn_block_separate_forward.9} parent=0 // pred_check
    _
  $region3: #{mpnn_block_separate_forward.9} parent=0 // pred_check_branch
    %9 = sbr.rel (0) target = $region5
  $region4: #{mpnn_block_separate_forward.9} parent=0 // pred_region
    _
  $region5: #{mpnn_block_separate_forward.9} parent=0 // pred_fallthru
    _
  // Predicated region
  $region6: #{mpnn_block_separate_forward.9} parent=0 // pred_check
    _
  $region7: #{mpnn_block_separate_forward.9} parent=0 // pred_check_branch
    %11 = sbr.rel (0) target = $region9
  $region8: #{mpnn_block_separate_forward.9} parent=0 // pred_region
    _
  $region9: #{mpnn_block_separate_forward.9} parent=0 // pred_fallthru
    _
  // Predicated region
  $region10: #{mpnn_block_separate_forward.9} parent=0 // pred_check
    _
  $region11: #{mpnn_block_separate_forward.9} parent=0 // pred_check_branch
    %13 = sbr.rel (0) target = $region13
  $region12: #{mpnn_block_separate_forward.9} parent=0 // pred_region
    _
  $region13: #{mpnn_block_separate_forward.9} parent=0 // pred_fallthru
    _
  %v14 = vld [vmem:[%s0] sm:$0xf]
  %v15 = vld [vmem:[%s0 + $0x4] sm:$0xf]
  %v16 = vunpack.c.l.bf16 %v14
  %v17 = vunpack.c.l.bf16 %v15
  %v18 = vld [vmem:[%s1] sm:$0x1]
  %v20 = vlaneseq
  %v21 = vshrl.u32 %v20, 7
  %v22 = vsub.s32 0, %v21
  %v23 = vrot.slane %v18, %v22
  %v25 = vmul.f32 %v16, %v23
  %v26 = vmul.f32 %v17, %v23
  %v27 = vld [vmem:[%s2] sm:$0x1]
  %v29 = vlaneseq
  %v30 = vshrl.u32 %v29, 7
  %v31 = vsub.s32 0, %v30
  %v32 = vrot.slane %v27, %v31
  %v34 = vadd.f32 %v25, %v32
  %v35 = vadd.f32 %v26, %v32
  %vm36 = vcmp.gt.f32.partialorder %v34, 0.0
  %vm37 = vcmp.gt.f32.partialorder %v35, 0.0
  %v38 = vmul.f32 %v34, 0.01
  %v39 = vmul.f32 %v35, 0.01
  %v40 = vsel %vm36, %v34, %v38
  %v41 = vsel %vm37, %v35, %v39
  %vm42 = vcmask 261120
  %43 = vst.msk [vmem:[%s3] sm:$0xff] %vm42, %v40
  %44 = vst.msk [vmem:[%s3 + $0x8] sm:$0xff] %vm42, %v41
  // Predicated region
  $region14: #{mpnn_block_separate_forward.9} parent=0 // pred_check
    _
  $region15: #{mpnn_block_separate_forward.9} parent=0 // pred_check_branch
    %46 = sbr.rel (0) target = $region17
  $region16: #{mpnn_block_separate_forward.9} parent=0 // pred_region
    _
  $region17: #{mpnn_block_separate_forward.9} parent=0 // pred_fallthru
    _
  // Predicated region
  $region18: #{mpnn_block_separate_forward.9} parent=0 // pred_check
    _
  $region19: #{mpnn_block_separate_forward.9} parent=0 // pred_check_branch
    %48 = sbr.rel (0) target = $region21
  $region20: #{mpnn_block_separate_forward.9} parent=0 // pred_region
    _
  $region21: #{mpnn_block_separate_forward.9} parent=0 // pred_fallthru
    _

// kernel: mpnn_block_separate_forward.8
$region0: #{mpnn_block_separate_forward.8}
  #allocation0 [shape = 'u32[]', space=smem, size = 0x4, offset = 0x4, fixed_abs, tag = 'smem constant byte address 0x4 - core index']
  #allocation1 [shape = 'u32[144,128]{1,0:T(1,128)}', space=vmem, size = 0x12000, scoped, tag = 'internal scratch']
  %s0 = inlined_call_operand.vmem [shape: bf16[16,4,16], index: 0, kind: input, shape index: {}]
  %s1 = inlined_call_operand.vmem [shape: bf16[16,16], index: 1, kind: input, shape index: {}]
  %s2 = inlined_call_operand.vmem [shape: f32[1,16], index: 2, kind: input, shape index: {}]
  %s3 = inlined_call_operand.vmem [shape: bf16[16,8], index: 3, kind: input, shape index: {}]
  %s4 = inlined_call_operand.vmem [shape: f32[1,8], index: 4, kind: input, shape index: {}]
  %s5 = inlined_call_operand.vmem [shape: bf16[16,4,8], index: 5, kind: output, shape index: {0}]
  %s6 = inlined_call_operand.vmem [shape: f32[2,1,16], index: 6, kind: output, shape index: {1}]
  %7 = xla_tuple %s5, %s6
  %s8 = sld [smem:[#allocation0]]
  $region61: #{mpnn_block_separate_forward.8} parent=0
    _
  %s10 = ssub.s32 1, %s8
  %s11 = scalar_select 0, %s10, %s8
  loop: start=0, step=1, limit=4
  $region2: #{mpnn_block_separate_forward.8} parent=0 // loop_pre_header
    _
  $region3: #{mpnn_block_separate_forward.8} parent=0 // loop_header
    %s13 = sphi 0, %s17
    %p14 = scmp.ge.s32.totalorder %s13, 4
    %s23 = sphi 0, %s25
    %s26 = sphi 0, %s23
    %s27 = sphi 0, %s26
    %s43 = sphi 0, %s27
    %s47 = sphi 0, %s47
    %s49 = sphi 0, %s47
    %s50 = sphi 0, %s49
    %s64 = sphi 0, %s50
    %s68 = sphi 0, %s68
    %s70 = sphi 0, %s68
    %s71 = sphi 0, %s70
    %s85 = sphi 0, %s71
    %s89 = sphi 0, %s89
    %s91 = sphi 0, %s89
    %s92 = sphi 0, %s91
    %s106 = sphi 0, %s92
    %s110 = sphi 0, %s110
    %s112 = sphi 0, %s110
    %s113 = sphi 0, %s112
    %s127 = sphi 0, %s113
    %s133 = sphi 0, %s135
    %s136 = sphi 0, %s133
    %s137 = sphi 0, %s136
    %s153 = sphi 0, %s137
    %s159 = sphi 0, %s161
    %s162 = sphi 0, %s159
    %s163 = sphi 0, %s162
    %s179 = sphi 0, %s163
  $region4: #{mpnn_block_separate_forward.8} parent=0 // loop_header_branch
    %16 = sbr.rel (%p14) target = $region8
  $region5: #{mpnn_block_separate_forward.8} parent=0 // loop_body
    %s18 = ssub.s32 %s13, 1
    %s19 = ssub.s32 %s13, 2
    %s20 = sadd.s32 %s13, 1
    %s21 = ssub.s32 %s13, %s20
    %p22 = scmp.eq.s32.totalorder %s21, 0
    %s24 = sadd.s32 %s23, 1
    %s25 = scalar_select %p22, %s23, %s24
    %p28 = pneg %p22
    %p29 = scmp.eq.s32.totalorder %s13, 1
    %p30 = por %p28, %p29
    %p31 = scmp.ne.s32.totalorder %s23, %s26
    %p32 = scmp.eq.s32.totalorder %s13, 0
    %p33 = por %p31, %p32
    %p34 = scmp.ne.s32.totalorder %s23, %s26
    %p35 = scmp.eq.s32.totalorder %s18, 1
    %p36 = por %p34, %p35
    %p37 = scmp.ne.s32.totalorder %s26, %s27
    %p38 = scmp.eq.s32.totalorder %s18, 0
    %p39 = por %p37, %p38
    %p40 = scmp.ne.s32.totalorder %s26, %s27
    %p41 = scmp.eq.s32.totalorder %s19, 1
    %p42 = por %p40, %p41
    %p44 = scmp.ne.s32.totalorder %s27, %s43
    %p45 = scmp.eq.s32.totalorder %s19, 0
    %p46 = por %p44, %p45
    %s48 = sadd.s32 %s47, 1
    %p51 = scmp.eq.s32.totalorder %s13, 1
    %p52 = scmp.ne.s32.totalorder %s47, %s49
    %p53 = scmp.eq.s32.totalorder %s13, 0
    %p54 = por %p52, %p53
    %p55 = scmp.ne.s32.totalorder %s47, %s49
    %p56 = scmp.eq.s32.totalorder %s18, 1
    %p57 = por %p55, %p56
    %p58 = scmp.ne.s32.totalorder %s49, %s50
    %p59 = scmp.eq.s32.totalorder %s18, 0
    %p60 = por %p58, %p59
    %p61 = scmp.ne.s32.totalorder %s49, %s50
    %p62 = scmp.eq.s32.totalorder %s19, 1
    %p63 = por %p61, %p62
    %p65 = scmp.ne.s32.totalorder %s50, %s64
    %p66 = scmp.eq.s32.totalorder %s19, 0
    %p67 = por %p65, %p66
    %s69 = sadd.s32 %s68, 1
    %p72 = scmp.eq.s32.totalorder %s13, 1
    %p73 = scmp.ne.s32.totalorder %s68, %s70
    %p74 = scmp.eq.s32.totalorder %s13, 0
    %p75 = por %p73, %p74
    %p76 = scmp.ne.s32.totalorder %s68, %s70
    %p77 = scmp.eq.s32.totalorder %s18, 1
    %p78 = por %p76, %p77
    %p79 = scmp.ne.s32.totalorder %s70, %s71
    %p80 = scmp.eq.s32.totalorder %s18, 0
    %p81 = por %p79, %p80
    %p82 = scmp.ne.s32.totalorder %s70, %s71
    %p83 = scmp.eq.s32.totalorder %s19, 1
    %p84 = por %p82, %p83
    %p86 = scmp.ne.s32.totalorder %s71, %s85
    %p87 = scmp.eq.s32.totalorder %s19, 0
    %p88 = por %p86, %p87
    %s90 = sadd.s32 %s89, 1
    %p93 = scmp.eq.s32.totalorder %s13, 1
    %p94 = scmp.ne.s32.totalorder %s89, %s91
    %p95 = scmp.eq.s32.totalorder %s13, 0
    %p96 = por %p94, %p95
    %p97 = scmp.ne.s32.totalorder %s89, %s91
    %p98 = scmp.eq.s32.totalorder %s18, 1
    %p99 = por %p97, %p98
    %p100 = scmp.ne.s32.totalorder %s91, %s92
    %p101 = scmp.eq.s32.totalorder %s18, 0
    %p102 = por %p100, %p101
    %p103 = scmp.ne.s32.totalorder %s91, %s92
    %p104 = scmp.eq.s32.totalorder %s19, 1
    %p105 = por %p103, %p104
    %p107 = scmp.ne.s32.totalorder %s92, %s106
    %p108 = scmp.eq.s32.totalorder %s19, 0
    %p109 = por %p107, %p108
    %s111 = sadd.s32 %s110, 1
    %p114 = scmp.eq.s32.totalorder %s13, 1
    %p115 = scmp.ne.s32.totalorder %s110, %s112
    %p116 = scmp.eq.s32.totalorder %s13, 0
    %p117 = por %p115, %p116
    %p118 = scmp.ne.s32.totalorder %s110, %s112
    %p119 = scmp.eq.s32.totalorder %s18, 1
    %p120 = por %p118, %p119
    %p121 = scmp.ne.s32.totalorder %s112, %s113
    %p122 = scmp.eq.s32.totalorder %s18, 0
    %p123 = por %p121, %p122
    %p124 = scmp.ne.s32.totalorder %s112, %s113
    %p125 = scmp.eq.s32.totalorder %s19, 1
    %p126 = por %p124, %p125
    %p128 = scmp.ne.s32.totalorder %s113, %s127
    %p129 = scmp.eq.s32.totalorder %s19, 0
    %p130 = por %p128, %p129
    %s131 = ssub.s32 %s13, %s20
    %p132 = scmp.eq.s32.totalorder %s131, 0
    %s134 = sadd.s32 %s133, 1
    %s135 = scalar_select %p132, %s133, %s134
    %p138 = pneg %p132
    %p139 = scmp.eq.s32.totalorder %s13, 1
    %p140 = por %p138, %p139
    %p141 = scmp.ne.s32.totalorder %s133, %s136
    %p142 = scmp.eq.s32.totalorder %s13, 0
    %p143 = por %p141, %p142
    %p144 = scmp.ne.s32.totalorder %s133, %s136
    %p145 = scmp.eq.s32.totalorder %s18, 1
    %p146 = por %p144, %p145
    %p147 = scmp.ne.s32.totalorder %s136, %s137
    %p148 = scmp.eq.s32.totalorder %s18, 0
    %p149 = por %p147, %p148
    %p150 = scmp.ne.s32.totalorder %s136, %s137
    %p151 = scmp.eq.s32.totalorder %s19, 1
    %p152 = por %p150, %p151
    %p154 = scmp.ne.s32.totalorder %s137, %s153
    %p155 = scmp.eq.s32.totalorder %s19, 0
    %p156 = por %p154, %p155
    %s157 = ssub.s32 %s13, %s20
    %p158 = scmp.eq.s32.totalorder %s157, 0
    %s160 = sadd.s32 %s159, 1
    %s161 = scalar_select %p158, %s159, %s160
    %p164 = pneg %p158
    %p165 = scmp.eq.s32.totalorder %s13, 1
    %p166 = por %p164, %p165
    %p167 = scmp.ne.s32.totalorder %s159, %s162
    %p168 = scmp.eq.s32.totalorder %s13, 0
    %p169 = por %p167, %p168
    %p170 = scmp.ne.s32.totalorder %s159, %s162
    %p171 = scmp.eq.s32.totalorder %s18, 1
    %p172 = por %p170, %p171
    %p173 = scmp.ne.s32.totalorder %s162, %s163
    %p174 = scmp.eq.s32.totalorder %s18, 0
    %p175 = por %p173, %p174
    %p176 = scmp.ne.s32.totalorder %s162, %s163
    %p177 = scmp.eq.s32.totalorder %s19, 1
    %p178 = por %p176, %p177
    %p180 = scmp.ne.s32.totalorder %s163, %s179
    %p181 = scmp.eq.s32.totalorder %s19, 0
    %p182 = por %p180, %p181
    %p183 = scmp.le.s32.totalorder 1, %s13
    %p184 = scmp.lt.s32.totalorder %s13, 3
    %p185 = pnand %p183, %p184
    %p186 = pneg %p185
    // Predicated region
    $region9: #{mpnn_block_separate_forward.8} parent=5 // pred_check
      _
    $region10: #{mpnn_block_separate_forward.8} parent=5 // pred_check_branch
      %188 = sbr.rel (%p185) target = $region12
    $region11: #{mpnn_block_separate_forward.8} parent=5 // pred_region
      %s189 = ssub.s32 %s13, 1
      // Predicated region
      $region13: #{mpnn_block_separate_forward.8} parent=11 // pred_check
        %p190 = pneg %p60
      $region14: #{mpnn_block_separate_forward.8} parent=11 // pred_check_branch
        %192 = sbr.rel (%p190) target = $region16
      $region15: #{mpnn_block_separate_forward.8} parent=11 // pred_region
        _
      $region16: #{mpnn_block_separate_forward.8} parent=11 // pred_fallthru
        _
      // Predicated region
      $region17: #{mpnn_block_separate_forward.8} parent=11 // pred_check
        %p193 = pneg %p81
      $region18: #{mpnn_block_separate_forward.8} parent=11 // pred_check_branch
        %195 = sbr.rel (%p193) target = $region20
      $region19: #{mpnn_block_separate_forward.8} parent=11 // pred_region
        _
      $region20: #{mpnn_block_separate_forward.8} parent=11 // pred_fallthru
        _
      // Predicated region
      $region21: #{mpnn_block_separate_forward.8} parent=11 // pred_check
        %p196 = pneg %p102
      $region22: #{mpnn_block_separate_forward.8} parent=11 // pred_check_branch
        %198 = sbr.rel (%p196) target = $region24
      $region23: #{mpnn_block_separate_forward.8} parent=11 // pred_region
        _
      $region24: #{mpnn_block_separate_forward.8} parent=11 // pred_fallthru
        _
      // Predicated region
      $region25: #{mpnn_block_separate_forward.8} parent=11 // pred_check
        %p199 = pneg %p123
      $region26: #{mpnn_block_separate_forward.8} parent=11 // pred_check_branch
        %201 = sbr.rel (%p199) target = $region28
      $region27: #{mpnn_block_separate_forward.8} parent=11 // pred_region
        _
      $region28: #{mpnn_block_separate_forward.8} parent=11 // pred_fallthru
        _
    $region12: #{mpnn_block_separate_forward.8} parent=5 // pred_fallthru
      _
    %p202 = scmp.lt.s32.totalorder %s13, 2
    // Predicated region
    $region29: #{mpnn_block_separate_forward.8} parent=5 // pred_check
      %p203 = pneg %p202
    $region30: #{mpnn_block_separate_forward.8} parent=5 // pred_check_branch
      %205 = sbr.rel (%p203) target = $region32
    $region31: #{mpnn_block_separate_forward.8} parent=5 // pred_region
      // Predicated region
      $region33: #{mpnn_block_separate_forward.8} parent=31 // pred_check
        %p206 = pneg %p33
      $region34: #{mpnn_block_separate_forward.8} parent=31 // pred_check_branch
        %208 = sbr.rel (%p206) target = $region36
      $region35: #{mpnn_block_separate_forward.8} parent=31 // pred_region
        %s209 = smul.u32 8, %s13
        %p210 = scmp.lt.s32.totalorder %s209, 15
        %s211 = scalar_select %p210, %s209, 15
        %s212 = smul.addr %s211, 2
        %s213 = scalar_lea.vmem %s0, %s212
        %s214 = smul.u32 8, %s13
      $region36: #{mpnn_block_separate_forward.8} parent=31 // pred_fallthru
        _
    $region32: #{mpnn_block_separate_forward.8} parent=5 // pred_fallthru
      _
    %p215 = scmp.le.s32.totalorder 1, %s13
    %p216 = scmp.lt.s32.totalorder %s13, 3
    %p217 = pnand %p215, %p216
    %p218 = pneg %p217
    // Predicated region
    $region37: #{mpnn_block_separate_forward.8} parent=5 // pred_check
      _
    $region38: #{mpnn_block_separate_forward.8} parent=5 // pred_check_branch
      %220 = sbr.rel (%p217) target = $region40
    $region39: #{mpnn_block_separate_forward.8} parent=5 // pred_region
      %s221 = ssub.s32 %s13, 1
      %s222 = smul.u32 8, %s18
      %p223 = scmp.lt.s32.totalorder %s222, 15
      %s224 = scalar_select %p223, %s222, 15
      %s225 = smul.addr %s224, 2
      %s226 = scalar_lea.vmem %s0, %s225
      %p227 = pneg %p39
      %p228 = pneg %p36
      %p229 = pneg %p60
      %p230 = pneg %p57
      %p231 = pneg %p81
      %p232 = pneg %p78
      %p233 = pneg %p102
      %p234 = pneg %p99
      %p235 = pneg %p123
      %p236 = pneg %p120
      %p237 = pneg %p149
      %p238 = pneg %p146
      %s239 = smul.u32 8, %s18
      %p240 = scmp.lt.s32.totalorder %s239, 15
      %s241 = scalar_select %p240, %s239, 15
      %s242 = smul.addr %s241, 2
      %s243 = scalar_lea.vmem %s5, %s242
      %p244 = pneg %p175
      %p245 = pneg %p172
      %p246 = scmp.lt.s32.totalorder %s18, 1
      %s247 = scalar_select %p246, %s18, 1
      %s248 = scalar_lea.vmem %s6, %s247
      %s249 = smul.u32 8, %s18
      %p250 = scmp.lt.s32.totalorder %s249, 15
      %s251 = scalar_select %p250, %s249, 15
      %s252 = smul.addr %s251, 2
      %s253 = scalar_lea.vmem %s0, %s252
      %s254 = smul.u32 8, %s18
      %s255 = smul.u32 8, %s18
      %p256 = scmp.lt.s32.totalorder %s255, 15
      %s257 = scalar_select %p256, %s255, 15
      %s258 = smul.addr %s257, 2
      %s259 = scalar_lea.vmem %s5, %s258
      %s260 = smul.u32 8, %s18
      %p261 = scmp.lt.s32.totalorder %s18, 1
      %s262 = scalar_select %p261, %s18, 1
      %s263 = scalar_lea.vmem %s6, %s262
      %v265 = vld [vmem:[%s253] sm:$0x3]
      %v266 = vld [vmem:[%s253 + $0x2] sm:$0x3]
      %v267 = vld [vmem:[%s253 + $0x4] sm:$0x3]
      %v268 = vld [vmem:[%s253 + $0x6] sm:$0x3]
      %v269 = vld [vmem:[%s253 + $0x8] sm:$0x3]
      %v270 = vld [vmem:[%s253 + $0xa] sm:$0x3]
      %v271 = vld [vmem:[%s253 + $0xc] sm:$0x3]
      %v272 = vld [vmem:[%s253 + $0xe] sm:$0x3]
      %v273 = vld [vmem:[%s1] sm:$0xf]
      %v274 = vld [vmem:[%s1 + $0x4] sm:$0xf]
      %v275 = vld [vmem:[%s2] sm:$0x1]
      %v277 = vlaneseq
      %v278 = vshrl.u32 %v277, 7
      %v279 = vsub.s32 0, %v278
      %v280 = vrot.slane %v275, %v279
      %v290 = vcombine.low %v265, %v266
      %v291 = vcombine.low %v267, %v268
      %v293 = vunpack.c.l.s4 1983009808
      %v294 = vunpack.c.0.s8 %v293
      %v295 = vlaneseq
      %v296 = vshrl.u32 %v295, 7
      %v297 = vsub.s32 %v294, %v296
      %v298 = vrot.slane %v290, %v297
      %v300 = vunpack.c.l.s4 1983009808
      %v301 = vunpack.c.0.s8 %v300
      %v302 = vlaneseq
      %v303 = vshrl.u32 %v302, 7
      %v304 = vsub.s32 %v301, %v303
      %v305 = vrot.slane %v291, %v304
      %v306 = vcombine.low %v298, %v305
      %v307 = vcombine.low %v269, %v270
      %v308 = vcombine.low %v271, %v272
      %v310 = vunpack.c.l.s4 1983009808
      %v311 = vunpack.c.0.s8 %v310
      %v312 = vlaneseq
      %v313 = vshrl.u32 %v312, 7
      %v314 = vsub.s32 %v311, %v313
      %v315 = vrot.slane %v307, %v314
      %v317 = vunpack.c.l.s4 1983009808
      %v318 = vunpack.c.0.s8 %v317
      %v319 = vlaneseq
      %v320 = vshrl.u32 %v319, 7
      %v321 = vsub.s32 %v318, %v320
      %v322 = vrot.slane %v308, %v321
      %v323 = vcombine.low %v315, %v322
      %v326 = vunpack.c.l.b16 %v273
      %v327 = vunpack.c.l.b16 %v274
      %v328 = vpack.c.b16 %v327, %v326
      %vm330 = vcmask 130048
      %v332 = vsel %vm330, %v306, 0
      %v335 = vsel %vm330, %v323, 0
      %337 = vmatprep.subr.bf16.mxu0 0
      %338 = vmatpush1.bf16.msra.mxu0 %v328
      %339 = vmatprep.subr.bf16.mxu0 0
      %340 = vmatpush1.bf16.msra.mxu0 0
      %341 = vmatprep.subr.bf16.mxu0 0
      %342 = vmatpush1.bf16.msra.mxu0 0
      %343 = vmatprep.subr.bf16.mxu0 0
      %344 = vmatpush1.bf16.msra.mxu0 0
      %345 = vmatprep.subr.bf16.mxu0 0
      %346 = vmatpush1.bf16.msra.mxu0 0
      %347 = vmatprep.subr.bf16.mxu0 0
      %348 = vmatpush1.bf16.msra.mxu0 0
      %349 = vmatprep.subr.bf16.mxu0 0
      %350 = vmatpush1.bf16.msra.mxu0 0
      %351 = vmatprep.subr.bf16.mxu0 0
      %352 = vmatpush1.bf16.msra.mxu0 0
      %353 = vmatprep.subr.bf16.mxu0 0
      %354 = vmatpush1.bf16.msra.mxu0 0
      %355 = vmatprep.subr.bf16.mxu0 0
      %356 = vmatpush1.bf16.msra.mxu0 0
      %357 = vmatprep.subr.bf16.mxu0 0
      %358 = vmatpush1.bf16.msra.mxu0 0
      %359 = vmatprep.subr.bf16.mxu0 0
      %360 = vmatpush1.bf16.msra.mxu0 0
      %361 = vmatprep.subr.bf16.mxu0 0
      %362 = vmatpush1.bf16.msra.mxu0 0
      %363 = vmatprep.subr.bf16.mxu0 0
      %364 = vmatpush1.bf16.msra.mxu0 0
      %365 = vmatprep.subr.bf16.mxu0 0
      %366 = vmatpush1.bf16.msra.mxu0 0
      %367 = vmatprep.subr.bf16.mxu0 0
      %368 = vmatpush1.bf16.msra.mxu0 0
      %369 = vmatprep.mubr.bf16.mxu0 0
      %370 = vmatmul.mubr.bf16.gmra.mrb[0].mxu0 %v332
      %v371 = vpop.f32.mrb[0].mxu0
      %v372 = vadd.f32 %v280, %v371
      %v373 = vpop.f32.mrb[0].mxu0
      %v374 = vpop.f32.mrb[0].mxu0
      %v375 = vadd.f32 %v280, %v374
      %v376 = vpop.f32.mrb[0].mxu0
      %377 = vmatprep.mubr.bf16.mxu0 0
      %378 = vmatmul.mubr.bf16.gmra.mrb[0].mxu0 %v335
      %v379 = vpop.f32.mrb[0].mxu0
      %v380 = vadd.f32 %v280, %v379
      %v381 = vpop.f32.mrb[0].mxu0
      %v382 = vpop.f32.mrb[0].mxu0
      %v383 = vadd.f32 %v280, %v382
      %v384 = vpop.f32.mrb[0].mxu0
      %385 = vdwg.mxu0
      %v386 = vpack.c.bf16 %v375, %v372
      %v387 = vpack.c.bf16 %v383, %v380
      %v390 = vcombine.high %v386, %v386
      %v392 = vunpack.c.l.s4 1983009808
      %v393 = vunpack.c.0.s8 %v392
      %v394 = vlaneseq
      %v395 = vshrl.u32 %v394, 7
      %v396 = vsub.s32 %v393, %v395
      %v397 = vrot.slane %v386, %v396
      %v399 = vunpack.c.l.s4 1983009808
      %v400 = vunpack.c.0.s8 %v399
      %v401 = vlaneseq
      %v402 = vshrl.u32 %v401, 7
      %v403 = vsub.s32 %v400, %v402
      %v404 = vrot.slane %v390, %v403
      %v405 = vcombine.high %v397, %v397
      %v406 = vcombine.high %v404, %v404
      %v407 = vcombine.high %v387, %v387
      %v409 = vunpack.c.l.s4 1983009808
      %v410 = vunpack.c.0.s8 %v409
      %v411 = vlaneseq
      %v412 = vshrl.u32 %v411, 7
      %v413 = vsub.s32 %v410, %v412
      %v414 = vrot.slane %v387, %v413
      %v416 = vunpack.c.l.s4 1983009808
      %v417 = vunpack.c.0.s8 %v416
      %v418 = vlaneseq
      %v419 = vshrl.u32 %v418, 7
      %v420 = vsub.s32 %v417, %v419
      %v421 = vrot.slane %v407, %v420
      %v422 = vcombine.high %v414, %v414
      %v423 = vcombine.high %v421, %v421
      %v425 = vsel %vm330, %v397, 0
      %427 = vmatprep.subr.bf16.mxu0 0
      %428 = vmatpush1.bf16.xpose.msra.mxu0 %v425
      %429 = vmatprep.subr.bf16.mxu0 0
      %430 = vmatpush1.bf16.xpose.msra.mxu0 0
      %431 = vmatprep.subr.bf16.mxu0 0
      %432 = vmatpush1.bf16.xpose.msra.mxu0 0
      %433 = vmatprep.subr.bf16.mxu0 0
      %434 = vmatpush1.bf16.xpose.msra.mxu0 0
      %435 = vmatprep.subr.bf16.mxu0 0
      %436 = vmatpush1.bf16.xpose.msra.mxu0 0
      %437 = vmatprep.subr.bf16.mxu0 0
      %438 = vmatpush1.bf16.xpose.msra.mxu0 0
      %439 = vmatprep.subr.bf16.mxu0 0
      %440 = vmatpush1.bf16.xpose.msra.mxu0 0
      %441 = vmatprep.subr.bf16.mxu0 0
      %442 = vmatpush1.bf16.xpose.msra.mxu0 0
      %443 = vmatprep.subr.bf16.mxu0 0
      %444 = vmatpush1.bf16.xpose.msra.mxu0 0
      %445 = vmatprep.subr.bf16.mxu0 0
      %446 = vmatpush1.bf16.xpose.msra.mxu0 0
      %447 = vmatprep.subr.bf16.mxu0 0
      %448 = vmatpush1.bf16.xpose.msra.mxu0 0
      %449 = vmatprep.subr.bf16.mxu0 0
      %450 = vmatpush1.bf16.xpose.msra.mxu0 0
      %451 = vmatprep.subr.bf16.mxu0 0
      %452 = vmatpush1.bf16.xpose.msra.mxu0 0
      %453 = vmatprep.subr.bf16.mxu0 0
      %454 = vmatpush1.bf16.xpose.msra.mxu0 0
      %455 = vmatprep.subr.bf16.mxu0 0
      %456 = vmatpush1.bf16.xpose.msra.mxu0 0
      %457 = vmatprep.subr.bf16.mxu0 0
      %458 = vmatpush1.bf16.xpose.msra.mxu0 0
      %459 = vmatprep.mubr.bf16.mxu0 0
      %460 = vmatmul.mubr.bf16.gmra.mrb[0].mxu0 %v425
      %v461 = vpop.f32.mrb[0].mxu0
      %v462 = vadd.f32 0.0, %v461
      %v463 = vpop.f32.mrb[0].mxu0
      %v464 = vpop.f32.mrb[0].mxu0
      %v465 = vpop.f32.mrb[0].mxu0
      %466 = vdwg.mxu0
      %v468 = vsel %vm330, %v405, 0
      %470 = vmatprep.subr.bf16.mxu0 0
      %471 = vmatpush1.bf16.xpose.msra.mxu0 %v468
      %472 = vmatprep.subr.bf16.mxu0 0
      %473 = vmatpush1.bf16.xpose.msra.mxu0 0
      %474 = vmatprep.subr.bf16.mxu0 0
      %475 = vmatpush1.bf16.xpose.msra.mxu0 0
      %476 = vmatprep.subr.bf16.mxu0 0
      %477 = vmatpush1.bf16.xpose.msra.mxu0 0
      %478 = vmatprep.subr.bf16.mxu0 0
      %479 = vmatpush1.bf16.xpose.msra.mxu0 0
      %480 = vmatprep.subr.bf16.mxu0 0
      %481 = vmatpush1.bf16.xpose.msra.mxu0 0
      %482 = vmatprep.subr.bf16.mxu0 0
      %483 = vmatpush1.bf16.xpose.msra.mxu0 0
      %484 = vmatprep.subr.bf16.mxu0 0
      %485 = vmatpush1.bf16.xpose.msra.mxu0 0
      %486 = vmatprep.subr.bf16.mxu0 0
      %487 = vmatpush1.bf16.xpose.msra.mxu0 0
      %488 = vmatprep.subr.bf16.mxu0 0
      %489 = vmatpush1.bf16.xpose.msra.mxu0 0
      %490 = vmatprep.subr.bf16.mxu0 0
      %491 = vmatpush1.bf16.xpose.msra.mxu0 0
      %492 = vmatprep.subr.bf16.mxu0 0
      %493 = vmatpush1.bf16.xpose.msra.mxu0 0
      %494 = vmatprep.subr.bf16.mxu0 0
      %495 = vmatpush1.bf16.xpose.msra.mxu0 0
      %496 = vmatprep.subr.bf16.mxu0 0
      %497 = vmatpush1.bf16.xpose.msra.mxu0 0
      %498 = vmatprep.subr.bf16.mxu0 0
      %499 = vmatpush1.bf16.xpose.msra.mxu0 0
      %500 = vmatprep.subr.bf16.mxu0 0
      %501 = vmatpush1.bf16.xpose.msra.mxu0 0
      %502 = vmatprep.mubr.bf16.mxu0 0
      %503 = vmatmul.mubr.bf16.gmra.mrb[0].mxu0 %v468
      %v504 = vpop.f32.mrb[0].mxu0
      %v505 = vadd.f32 0.0, %v504
      %v506 = vpop.f32.mrb[0].mxu0
      %v507 = vpop.f32.mrb[0].mxu0
      %v508 = vpop.f32.mrb[0].mxu0
      %509 = vdwg.mxu0
      %v511 = vsel %vm330, %v404, 0
      %513 = vmatprep.subr.bf16.mxu0 0
      %514 = vmatpush1.bf16.xpose.msra.mxu0 %v511
      %515 = vmatprep.subr.bf16.mxu0 0
      %516 = vmatpush1.bf16.xpose.msra.mxu0 0
      %517 = vmatprep.subr.bf16.mxu0 0
      %518 = vmatpush1.bf16.xpose.msra.mxu0 0
      %519 = vmatprep.subr.bf16.mxu0 0
      %520 = vmatpush1.bf16.xpose.msra.mxu0 0
      %521 = vmatprep.subr.bf16.mxu0 0
      %522 = vmatpush1.bf16.xpose.msra.mxu0 0
      %523 = vmatprep.subr.bf16.mxu0 0
      %524 = vmatpush1.bf16.xpose.msra.mxu0 0
      %525 = vmatprep.subr.bf16.mxu0 0
      %526 = vmatpush1.bf16.xpose.msra.mxu0 0
      %527 = vmatprep.subr.bf16.mxu0 0
      %528 = vmatpush1.bf16.xpose.msra.mxu0 0
      %529 = vmatprep.subr.bf16.mxu0 0
      %530 = vmatpush1.bf16.xpose.msra.mxu0 0
      %531 = vmatprep.subr.bf16.mxu0 0
      %532 = vmatpush1.bf16.xpose.msra.mxu0 0
      %533 = vmatprep.subr.bf16.mxu0 0
      %534 = vmatpush1.bf16.xpose.msra.mxu0 0
      %535 = vmatprep.subr.bf16.mxu0 0
      %536 = vmatpush1.bf16.xpose.msra.mxu0 0
      %537 = vmatprep.subr.bf16.mxu0 0
      %538 = vmatpush1.bf16.xpose.msra.mxu0 0
      %539 = vmatprep.subr.bf16.mxu0 0
      %540 = vmatpush1.bf16.xpose.msra.mxu0 0
      %541 = vmatprep.subr.bf16.mxu0 0
      %542 = vmatpush1.bf16.xpose.msra.mxu0 0
      %543 = vmatprep.subr.bf16.mxu0 0
      %544 = vmatpush1.bf16.xpose.msra.mxu0 0
      %545 = vmatprep.mubr.bf16.mxu0 0
      %546 = vmatmul.mubr.bf16.gmra.mrb[0].mxu0 %v511
      %v547 = vpop.f32.mrb[0].mxu0
      %v548 = vadd.f32 0.0, %v547
      %v549 = vpop.f32.mrb[0].mxu0
      %v550 = vpop.f32.mrb[0].mxu0
      %v551 = vpop.f32.mrb[0].mxu0
      %552 = vdwg.mxu0
      %v554 = vsel %vm330, %v406, 0
      %556 = vmatprep.subr.bf16.mxu0 0
      %557 = vmatpush1.bf16.xpose.msra.mxu0 %v554
      %558 = vmatprep.subr.bf16.mxu0 0
      %559 = vmatpush1.bf16.xpose.msra.mxu0 0
      %560 = vmatprep.subr.bf16.mxu0 0
      %561 = vmatpush1.bf16.xpose.msra.mxu0 0
      %562 = vmatprep.subr.bf16.mxu0 0
      %563 = vmatpush1.bf16.xpose.msra.mxu0 0
      %564 = vmatprep.subr.bf16.mxu0 0
      %565 = vmatpush1.bf16.xpose.msra.mxu0 0
      %566 = vmatprep.subr.bf16.mxu0 0
      %567 = vmatpush1.bf16.xpose.msra.mxu0 0
      %568 = vmatprep.subr.bf16.mxu0 0
      %569 = vmatpush1.bf16.xpose.msra.mxu0 0
      %570 = vmatprep.subr.bf16.mxu0 0
      %571 = vmatpush1.bf16.xpose.msra.mxu0 0
      %572 = vmatprep.subr.bf16.mxu0 0
      %573 = vmatpush1.bf16.xpose.msra.mxu0 0
      %574 = vmatprep.subr.bf16.mxu0 0
      %575 = vmatpush1.bf16.xpose.msra.mxu0 0
      %576 = vmatprep.subr.bf16.mxu0 0
      %577 = vmatpush1.bf16.xpose.msra.mxu0 0
      %578 = vmatprep.subr.bf16.mxu0 0
      %579 = vmatpush1.bf16.xpose.msra.mxu0 0
      %580 = vmatprep.subr.bf16.mxu0 0
      %581 = vmatpush1.bf16.xpose.msra.mxu0 0
      %582 = vmatprep.subr.bf16.mxu0 0
      %583 = vmatpush1.bf16.xpose.msra.mxu0 0
      %584 = vmatprep.subr.bf16.mxu0 0
      %585 = vmatpush1.bf16.xpose.msra.mxu0 0
      %586 = vmatprep.subr.bf16.mxu0 0
      %587 = vmatpush1.bf16.xpose.msra.mxu0 0
      %588 = vmatprep.mubr.bf16.mxu0 0
      %589 = vmatmul.mubr.bf16.gmra.mrb[0].mxu0 %v554
      %v590 = vpop.f32.mrb[0].mxu0
      %v591 = vadd.f32 0.0, %v590
      %v592 = vpop.f32.mrb[0].mxu0
      %v593 = vpop.f32.mrb[0].mxu0
      %v594 = vpop.f32.mrb[0].mxu0
      %595 = vdwg.mxu0
      %v597 = vsel %vm330, %v414, 0
      %599 = vmatprep.subr.bf16.mxu0 0
      %600 = vmatpush1.bf16.xpose.msra.mxu0 %v597
      %601 = vmatprep.subr.bf16.mxu0 0
      %602 = vmatpush1.bf16.xpose.msra.mxu0 0
      %603 = vmatprep.subr.bf16.mxu0 0
      %604 = vmatpush1.bf16.xpose.msra.mxu0 0
      %605 = vmatprep.subr.bf16.mxu0 0
      %606 = vmatpush1.bf16.xpose.msra.mxu0 0
      %607 = vmatprep.subr.bf16.mxu0 0
      %608 = vmatpush1.bf16.xpose.msra.mxu0 0
      %609 = vmatprep.subr.bf16.mxu0 0
      %610 = vmatpush1.bf16.xpose.msra.mxu0 0
      %611 = vmatprep.subr.bf16.mxu0 0
      %612 = vmatpush1.bf16.xpose.msra.mxu0 0
      %613 = vmatprep.subr.bf16.mxu0 0
      %614 = vmatpush1.bf16.xpose.msra.mxu0 0
      %615 = vmatprep.subr.bf16.mxu0 0
      %616 = vmatpush1.bf16.xpose.msra.mxu0 0
      %617 = vmatprep.subr.bf16.mxu0 0
      %618 = vmatpush1.bf16.xpose.msra.mxu0 0
      %619 = vmatprep.subr.bf16.mxu0 0
      %620 = vmatpush1.bf16.xpose.msra.mxu0 0
      %621 = vmatprep.subr.bf16.mxu0 0
      %622 = vmatpush1.bf16.xpose.msra.mxu0 0
      %623 = vmatprep.subr.bf16.mxu0 0
      %624 = vmatpush1.bf16.xpose.msra.mxu0 0
      %625 = vmatprep.subr.bf16.mxu0 0
      %626 = vmatpush1.bf16.xpose.msra.mxu0 0
      %627 = vmatprep.subr.bf16.mxu0 0
      %628 = vmatpush1.bf16.xpose.msra.mxu0 0
      %629 = vmatprep.subr.bf16.mxu0 0
      %630 = vmatpush1.bf16.xpose.msra.mxu0 0
      %631 = vmatprep.mubr.bf16.mxu0 0
      %632 = vmatmul.mubr.bf16.gmra.mrb[0].mxu0 %v597
      %v633 = vpop.f32.mrb[0].mxu0
      %v634 = vadd.f32 0.0, %v633
      %v635 = vpop.f32.mrb[0].mxu0
      %v636 = vpop.f32.mrb[0].mxu0
      %v637 = vpop.f32.mrb[0].mxu0
      %638 = vdwg.mxu0
      %v640 = vsel %vm330, %v422, 0
      %642 = vmatprep.subr.bf16.mxu0 0
      %643 = vmatpush1.bf16.xpose.msra.mxu0 %v640
      %644 = vmatprep.subr.bf16.mxu0 0
      %645 = vmatpush1.bf16.xpose.msra.mxu0 0
      %646 = vmatprep.subr.bf16.mxu0 0
      %647 = vmatpush1.bf16.xpose.msra.mxu0 0
      %648 = vmatprep.subr.bf16.mxu0 0
      %649 = vmatpush1.bf16.xpose.msra.mxu0 0
      %650 = vmatprep.subr.bf16.mxu0 0
      %651 = vmatpush1.bf16.xpose.msra.mxu0 0
      %652 = vmatprep.subr.bf16.mxu0 0
      %653 = vmatpush1.bf16.xpose.msra.mxu0 0
      %654 = vmatprep.subr.bf16.mxu0 0
      %655 = vmatpush1.bf16.xpose.msra.mxu0 0
      %656 = vmatprep.subr.bf16.mxu0 0
      %657 = vmatpush1.bf16.xpose.msra.mxu0 0
      %658 = vmatprep.subr.bf16.mxu0 0
      %659 = vmatpush1.bf16.xpose.msra.mxu0 0
      %660 = vmatprep.subr.bf16.mxu0 0
      %661 = vmatpush1.bf16.xpose.msra.mxu0 0
      %662 = vmatprep.subr.bf16.mxu0 0
      %663 = vmatpush1.bf16.xpose.msra.mxu0 0
      %664 = vmatprep.subr.bf16.mxu0 0
      %665 = vmatpush1.bf16.xpose.msra.mxu0 0
      %666 = vmatprep.subr.bf16.mxu0 0
      %667 = vmatpush1.bf16.xpose.msra.mxu0 0
      %668 = vmatprep.subr.bf16.mxu0 0
      %669 = vmatpush1.bf16.xpose.msra.mxu0 0
      %670 = vmatprep.subr.bf16.mxu0 0
      %671 = vmatpush1.bf16.xpose.msra.mxu0 0
      %672 = vmatprep.subr.bf16.mxu0 0
      %673 = vmatpush1.bf16.xpose.msra.mxu0 0
      %674 = vmatprep.mubr.bf16.mxu0 0
      %675 = vmatmul.mubr.bf16.gmra.mrb[0].mxu0 %v640
      %v676 = vpop.f32.mrb[0].mxu0
      %v677 = vadd.f32 0.0, %v676
      %v678 = vpop.f32.mrb[0].mxu0
      %v679 = vpop.f32.mrb[0].mxu0
      %v680 = vpop.f32.mrb[0].mxu0
      %681 = vdwg.mxu0
      %v683 = vsel %vm330, %v421, 0
      %685 = vmatprep.subr.bf16.mxu0 0
      %686 = vmatpush1.bf16.xpose.msra.mxu0 %v683
      %687 = vmatprep.subr.bf16.mxu0 0
      %688 = vmatpush1.bf16.xpose.msra.mxu0 0
      %689 = vmatprep.subr.bf16.mxu0 0
      %690 = vmatpush1.bf16.xpose.msra.mxu0 0
      %691 = vmatprep.subr.bf16.mxu0 0
      %692 = vmatpush1.bf16.xpose.msra.mxu0 0
      %693 = vmatprep.subr.bf16.mxu0 0
      %694 = vmatpush1.bf16.xpose.msra.mxu0 0
      %695 = vmatprep.subr.bf16.mxu0 0
      %696 = vmatpush1.bf16.xpose.msra.mxu0 0
      %697 = vmatprep.subr.bf16.mxu0 0
      %698 = vmatpush1.bf16.xpose.msra.mxu0 0
      %699 = vmatprep.subr.bf16.mxu0 0
      %700 = vmatpush1.bf16.xpose.msra.mxu0 0
      %701 = vmatprep.subr.bf16.mxu0 0
      %702 = vmatpush1.bf16.xpose.msra.mxu0 0
      %703 = vmatprep.subr.bf16.mxu0 0
      %704 = vmatpush1.bf16.xpose.msra.mxu0 0
      %705 = vmatprep.subr.bf16.mxu0 0
      %706 = vmatpush1.bf16.xpose.msra.mxu0 0
      %707 = vmatprep.subr.bf16.mxu0 0
      %708 = vmatpush1.bf16.xpose.msra.mxu0 0
      %709 = vmatprep.subr.bf16.mxu0 0
      %710 = vmatpush1.bf16.xpose.msra.mxu0 0
      %711 = vmatprep.subr.bf16.mxu0 0
      %712 = vmatpush1.bf16.xpose.msra.mxu0 0
      %713 = vmatprep.subr.bf16.mxu0 0
      %714 = vmatpush1.bf16.xpose.msra.mxu0 0
      %715 = vmatprep.subr.bf16.mxu0 0
      %716 = vmatpush1.bf16.xpose.msra.mxu0 0
      %717 = vmatprep.mubr.bf16.mxu0 0
      %718 = vmatmul.mubr.bf16.gmra.mrb[0].mxu0 %v683
      %v719 = vpop.f32.mrb[0].mxu0
      %v720 = vadd.f32 0.0, %v719
      %v721 = vpop.f32.mrb[0].mxu0
      %v722 = vpop.f32.mrb[0].mxu0
      %v723 = vpop.f32.mrb[0].mxu0
      %724 = vdwg.mxu0
      %v726 = vsel %vm330, %v423, 0
      %728 = vmatprep.subr.bf16.mxu0 0
      %729 = vmatpush1.bf16.xpose.msra.mxu0 %v726
      %730 = vmatprep.subr.bf16.mxu0 0
      %731 = vmatpush1.bf16.xpose.msra.mxu0 0
      %732 = vmatprep.subr.bf16.mxu0 0
      %733 = vmatpush1.bf16.xpose.msra.mxu0 0
      %734 = vmatprep.subr.bf16.mxu0 0
      %735 = vmatpush1.bf16.xpose.msra.mxu0 0
      %736 = vmatprep.subr.bf16.mxu0 0
      %737 = vmatpush1.bf16.xpose.msra.mxu0 0
      %738 = vmatprep.subr.bf16.mxu0 0
      %739 = vmatpush1.bf16.xpose.msra.mxu0 0
      %740 = vmatprep.subr.bf16.mxu0 0
      %741 = vmatpush1.bf16.xpose.msra.mxu0 0
      %742 = vmatprep.subr.bf16.mxu0 0
      %743 = vmatpush1.bf16.xpose.msra.mxu0 0
      %744 = vmatprep.subr.bf16.mxu0 0
      %745 = vmatpush1.bf16.xpose.msra.mxu0 0
      %746 = vmatprep.subr.bf16.mxu0 0
      %747 = vmatpush1.bf16.xpose.msra.mxu0 0
      %748 = vmatprep.subr.bf16.mxu0 0
      %749 = vmatpush1.bf16.xpose.msra.mxu0 0
      %750 = vmatprep.subr.bf16.mxu0 0
      %751 = vmatpush1.bf16.xpose.msra.mxu0 0
      %752 = vmatprep.subr.bf16.mxu0 0
      %753 = vmatpush1.bf16.xpose.msra.mxu0 0
      %754 = vmatprep.subr.bf16.mxu0 0
      %755 = vmatpush1.bf16.xpose.msra.mxu0 0
      %756 = vmatprep.subr.bf16.mxu0 0
      %757 = vmatpush1.bf16.xpose.msra.mxu0 0
      %758 = vmatprep.subr.bf16.mxu0 0
      %759 = vmatpush1.bf16.xpose.msra.mxu0 0
      %760 = vmatprep.mubr.bf16.mxu0 0
      %761 = vmatmul.mubr.bf16.gmra.mrb[0].mxu0 %v726
      %v762 = vpop.f32.mrb[0].mxu0
      %v763 = vadd.f32 0.0, %v762
      %v764 = vpop.f32.mrb[0].mxu0
      %v765 = vpop.f32.mrb[0].mxu0
      %v766 = vpop.f32.mrb[0].mxu0
      %767 = vdwg.mxu0
      %v768 = vlaneseq
      %v769 = vshrl.u32 %v768, 7
      %v770 = vlaneseq
      %v771 = vand.u32 %v770, 127
      %vm772 = vcmp.eq.s32.totalorder %v769, %v771
      %v773 = vsel %vm772, 1, 0
      %v774 = vcvt.s32.f32 %v773
      %v775 = vmul.f32 %v774, 1e+08
      %v776 = vsub.f32 %v462, %v775
      %v777 = vsub.f32 %v505, %v775
      %v778 = vsub.f32 %v548, %v775
      %v779 = vsub.f32 %v591, %v775
      %v780 = vsub.f32 %v634, %v775
      %v781 = vsub.f32 %v677, %v775
      %v782 = vsub.f32 %v720, %v775
      %v783 = vsub.f32 %v763, %v775
      %vm784 = vcmp.gt.f32.partialorder %v776, 0.0
      %vm785 = vcmp.gt.f32.partialorder %v777, 0.0
      %vm786 = vcmp.gt.f32.partialorder %v778, 0.0
      %vm787 = vcmp.gt.f32.partialorder %v779, 0.0
      %vm788 = vcmp.gt.f32.partialorder %v780, 0.0
      %vm789 = vcmp.gt.f32.partialorder %v781, 0.0
      %vm790 = vcmp.gt.f32.partialorder %v782, 0.0
      %vm791 = vcmp.gt.f32.partialorder %v783, 0.0
      %v792 = vmul.f32 %v776, 0.01
      %v793 = vmul.f32 %v777, 0.01
      %v794 = vmul.f32 %v778, 0.01
      %v795 = vmul.f32 %v779, 0.01
      %v796 = vmul.f32 %v780, 0.01
      %v797 = vmul.f32 %v781, 0.01
      %v798 = vmul.f32 %v782, 0.01
      %v799 = vmul.f32 %v783, 0.01
      %v800 = vsel %vm784, %v776, %v792
      %v801 = vsel %vm785, %v777, %v793
      %v802 = vsel %vm786, %v778, %v794
      %v803 = vsel %vm787, %v779, %v795
      %v804 = vsel %vm788, %v780, %v796
      %v805 = vsel %vm789, %v781, %v797
      %v806 = vsel %vm790, %v782, %v798
      %v807 = vsel %vm791, %v783, %v799
      %vm808 = vcmask 27648
      %v809 = vsel %vm808, %v800, -inf
      %810 = vmax.xlane.f32.xlu0 %v809
      %v811 = vpop.xlane.xlu0 %810
      %v812 = vsel %vm808, %v801, -inf
      %813 = vmax.xlane.f32.xlu0 %v812
      %v814 = vpop.xlane.xlu0 %813
      %v815 = vsel %vm808, %v802, -inf
      %816 = vmax.xlane.f32.xlu0 %v815
      %v817 = vpop.xlane.xlu0 %816
      %v818 = vsel %vm808, %v803, -inf
      %819 = vmax.xlane.f32.xlu0 %v818
      %v820 = vpop.xlane.xlu0 %819
      %v821 = vsel %vm808, %v804, -inf
      %822 = vmax.xlane.f32.xlu0 %v821
      %v823 = vpop.xlane.xlu0 %822
      %v824 = vsel %vm808, %v805, -inf
      %825 = vmax.xlane.f32.xlu0 %v824
      %v826 = vpop.xlane.xlu0 %825
      %v827 = vsel %vm808, %v806, -inf
      %828 = vmax.xlane.f32.xlu0 %v827
      %v829 = vpop.xlane.xlu0 %828
      %v830 = vsel %vm808, %v807, -inf
      %831 = vmax.xlane.f32.xlu0 %v830
      %v832 = vpop.xlane.xlu0 %831
      %v833 = vsub.f32 %v800, %v811
      %v834 = vsub.f32 %v801, %v814
      %v835 = vsub.f32 %v802, %v817
      %v836 = vsub.f32 %v803, %v820
      %v837 = vsub.f32 %v804, %v823
      %v838 = vsub.f32 %v805, %v826
      %v839 = vsub.f32 %v806, %v829
      %v840 = vsub.f32 %v807, %v832
      %v841 = vmul.f32 %v833, 1.442695
      %v842 = vpow.pop %v841
      %v843 = vmul.f32 %v834, 1.442695
      %v844 = vpow.pop %v843
      %v845 = vmul.f32 %v835, 1.442695
      %v846 = vpow.pop %v845
      %v847 = vmul.f32 %v836, 1.442695
      %v848 = vpow.pop %v847
      %v849 = vmul.f32 %v837, 1.442695
      %v850 = vpow.pop %v849
      %v851 = vmul.f32 %v838, 1.442695
      %v852 = vpow.pop %v851
      %v853 = vmul.f32 %v839, 1.442695
      %v854 = vpow.pop %v853
      %v855 = vmul.f32 %v840, 1.442695
      %v856 = vpow.pop %v855
      %v857 = vsel %vm808, %v842, 0.0
      %858 = vadd.xlane.f32.xlu0 %v857
      %v859 = vpop.xlane.xlu0 %858
      %v860 = vsel %vm808, %v844, 0.0
      %861 = vadd.xlane.f32.xlu0 %v860
      %v862 = vpop.xlane.xlu0 %861
      %v863 = vsel %vm808, %v846, 0.0
      %864 = vadd.xlane.f32.xlu0 %v863
      %v865 = vpop.xlane.xlu0 %864
      %v866 = vsel %vm808, %v848, 0.0
      %867 = vadd.xlane.f32.xlu0 %v866
      %v868 = vpop.xlane.xlu0 %867
      %v869 = vsel %vm808, %v850, 0.0
      %870 = vadd.xlane.f32.xlu0 %v869
      %v871 = vpop.xlane.xlu0 %870
      %v872 = vsel %vm808, %v852, 0.0
      %873 = vadd.xlane.f32.xlu0 %v872
      %v874 = vpop.xlane.xlu0 %873
      %v875 = vsel %vm808, %v854, 0.0
      %876 = vadd.xlane.f32.xlu0 %v875
      %v877 = vpop.xlane.xlu0 %876
      %v878 = vsel %vm808, %v856, 0.0
      %879 = vadd.xlane.f32.xlu0 %v878
      %v880 = vpop.xlane.xlu0 %879
      %v881 = vrcp.pop %v859
      %v882 = vrcp.pop %v862
      %v883 = vrcp.pop %v865
      %v884 = vrcp.pop %v868
      %v885 = vrcp.pop %v871
      %v886 = vrcp.pop %v874
      %v887 = vrcp.pop %v877
      %v888 = vrcp.pop %v880
      %v889 = vmul.f32 %v842, %v881
      %v890 = vmul.f32 %v844, %v882
      %v891 = vmul.f32 %v846, %v883
      %v892 = vmul.f32 %v848, %v884
      %v893 = vmul.f32 %v850, %v885
      %v894 = vmul.f32 %v852, %v886
      %v895 = vmul.f32 %v854, %v887
      %v896 = vmul.f32 %v856, %v888
      %v897 = vadd.f32 %v889, %v774
      %v898 = vadd.f32 %v890, %v774
      %v899 = vadd.f32 %v891, %v774
      %v900 = vadd.f32 %v892, %v774
      %v901 = vadd.f32 %v893, %v774
      %v902 = vadd.f32 %v894, %v774
      %v903 = vadd.f32 %v895, %v774
      %v904 = vadd.f32 %v896, %v774
      %v905 = vpack.c.bf16 %v897, %v897
      %v906 = vpack.c.bf16 %v898, %v898
      %v907 = vpack.c.bf16 %v899, %v899
      %v908 = vpack.c.bf16 %v900, %v900
      %v909 = vpack.c.bf16 %v901, %v901
      %v910 = vpack.c.bf16 %v902, %v902
      %v911 = vpack.c.bf16 %v903, %v903
      %v912 = vpack.c.bf16 %v904, %v904
      %vm913 = vcmask 31744
      %v915 = vsel %vm913, %v905, 0
      %vm917 = vcmask 1041408
      %v919 = vsel %vm917, %v265, 0
      %921 = vmatprep.subr.bf16.mxu0 0
      %922 = vmatpush1.bf16.msra.mxu0 %v919
      %923 = vmatprep.subr.bf16.mxu0 0
      %924 = vmatpush1.bf16.msra.mxu0 0
      %925 = vmatprep.subr.bf16.mxu0 0
      %926 = vmatpush1.bf16.msra.mxu0 0
      %927 = vmatprep.subr.bf16.mxu0 0
      %928 = vmatpush1.bf16.msra.mxu0 0
      %929 = vmatprep.subr.bf16.mxu0 0
      %930 = vmatpush1.bf16.msra.mxu0 0
      %931 = vmatprep.subr.bf16.mxu0 0
      %932 = vmatpush1.bf16.msra.mxu0 0
      %933 = vmatprep.subr.bf16.mxu0 0
      %934 = vmatpush1.bf16.msra.mxu0 0
      %935 = vmatprep.subr.bf16.mxu0 0
      %936 = vmatpush1.bf16.msra.mxu0 0
      %937 = vmatprep.subr.bf16.mxu0 0
      %938 = vmatpush1.bf16.msra.mxu0 0
      %939 = vmatprep.subr.bf16.mxu0 0
      %940 = vmatpush1.bf16.msra.mxu0 0
      %941 = vmatprep.subr.bf16.mxu0 0
      %942 = vmatpush1.bf16.msra.mxu0 0
      %943 = vmatprep.subr.bf16.mxu0 0
      %944 = vmatpush1.bf16.msra.mxu0 0
      %945 = vmatprep.subr.bf16.mxu0 0
      %946 = vmatpush1.bf16.msra.mxu0 0
      %947 = vmatprep.subr.bf16.mxu0 0
      %948 = vmatpush1.bf16.msra.mxu0 0
      %949 = vmatprep.subr.bf16.mxu0 0
      %950 = vmatpush1.bf16.msra.mxu0 0
      %951 = vmatprep.subr.bf16.mxu0 0
      %952 = vmatpush1.bf16.msra.mxu0 0
      %953 = vmatprep.mubr.bf16.mxu0 0
      %954 = vmatmul.mubr.bf16.gmra.mrb[0].mxu0 %v915
      %v955 = vpop.f32.mrb[0].mxu0
      %v956 = vadd.f32 0.0, %v955
      %v957 = vpop.f32.mrb[0].mxu0
      %v958 = vpop.f32.mrb[0].mxu0
      %v959 = vpop.f32.mrb[0].mxu0
      %960 = vdwg.mxu0
      %v962 = vsel %vm913, %v906, 0
      %v965 = vsel %vm917, %v266, 0
      %967 = vmatprep.subr.bf16.mxu0 0
      %968 = vmatpush1.bf16.msra.mxu0 %v965
      %969 = vmatprep.subr.bf16.mxu0 0
      %970 = vmatpush1.bf16.msra.mxu0 0
      %971 = vmatprep.subr.bf16.mxu0 0
      %972 = vmatpush1.bf16.msra.mxu0 0
      %973 = vmatprep.subr.bf16.mxu0 0
      %974 = vmatpush1.bf16.msra.mxu0 0
      %975 = vmatprep.subr.bf16.mxu0 0
      %976 = vmatpush1.bf16.msra.mxu0 0
      %977 = vmatprep.subr.bf16.mxu0 0
      %978 = vmatpush1.bf16.msra.mxu0 0
      %979 = vmatprep.subr.bf16.mxu0 0
      %980 = vmatpush1.bf16.msra.mxu0 0
      %981 = vmatprep.subr.bf16.mxu0 0
      %982 = vmatpush1.bf16.msra.mxu0 0
      %983 = vmatprep.subr.bf16.mxu0 0
      %984 = vmatpush1.bf16.msra.mxu0 0
      %985 = vmatprep.subr.bf16.mxu0 0
      %986 = vmatpush1.bf16.msra.mxu0 0
      %987 = vmatprep.subr.bf16.mxu0 0
      %988 = vmatpush1.bf16.msra.mxu0 0
      %989 = vmatprep.subr.bf16.mxu0 0
      %990 = vmatpush1.bf16.msra.mxu0 0
      %991 = vmatprep.subr.bf16.mxu0 0
      %992 = vmatpush1.bf16.msra.mxu0 0
      %993 = vmatprep.subr.bf16.mxu0 0
      %994 = vmatpush1.bf16.msra.mxu0 0
      %995 = vmatprep.subr.bf16.mxu0 0
      %996 = vmatpush1.bf16.msra.mxu0 0
      %997 = vmatprep.subr.bf16.mxu0 0
      %998 = vmatpush1.bf16.msra.mxu0 0
      %999 = vmatprep.mubr.bf16.mxu0 0
      %1000 = vmatmul.mubr.bf16.gmra.mrb[0].mxu0 %v962
      %v1001 = vpop.f32.mrb[0].mxu0
      %v1002 = vadd.f32 0.0, %v1001
      %v1003 = vpop.f32.mrb[0].mxu0
      %v1004 = vpop.f32.mrb[0].mxu0
      %v1005 = vpop.f32.mrb[0].mxu0
      %1006 = vdwg.mxu0
      %v1008 = vsel %vm913, %v907, 0
      %v1011 = vsel %vm917, %v267, 0
      %1013 = vmatprep.subr.bf16.mxu0 0
      %1014 = vmatpush1.bf16.msra.mxu0 %v1011
      %1015 = vmatprep.subr.bf16.mxu0 0
      %1016 = vmatpush1.bf16.msra.mxu0 0
      %1017 = vmatprep.subr.bf16.mxu0 0
      %1018 = vmatpush1.bf16.msra.mxu0 0
      %1019 = vmatprep.subr.bf16.mxu0 0
      %1020 = vmatpush1.bf16.msra.mxu0 0
      %1021 = vmatprep.subr.bf16.mxu0 0
      %1022 = vmatpush1.bf16.msra.mxu0 0
      %1023 = vmatprep.subr.bf16.mxu0 0
      %1024 = vmatpush1.bf16.msra.mxu0 0
      %1025 = vmatprep.subr.bf16.mxu0 0
      %1026 = vmatpush1.bf16.msra.mxu0 0
      %1027 = vmatprep.subr.bf16.mxu0 0
      %1028 = vmatpush1.bf16.msra.mxu0 0
      %1029 = vmatprep.subr.bf16.mxu0 0
      %1030 = vmatpush1.bf16.msra.mxu0 0
      %1031 = vmatprep.subr.bf16.mxu0 0
      %1032 = vmatpush1.bf16.msra.mxu0 0
      %1033 = vmatprep.subr.bf16.mxu0 0
      %1034 = vmatpush1.bf16.msra.mxu0 0
      %1035 = vmatprep.subr.bf16.mxu0 0
      %1036 = vmatpush1.bf16.msra.mxu0 0
      %1037 = vmatprep.subr.bf16.mxu0 0
      %1038 = vmatpush1.bf16.msra.mxu0 0
      %1039 = vmatprep.subr.bf16.mxu0 0
      %1040 = vmatpush1.bf16.msra.mxu0 0
      %1041 = vmatprep.subr.bf16.mxu0 0
      %1042 = vmatpush1.bf16.msra.mxu0 0
      %1043 = vmatprep.subr.bf16.mxu0 0
      %1044 = vmatpush1.bf16.msra.mxu0 0
      %1045 = vmatprep.mubr.bf16.mxu0 0
      %1046 = vmatmul.mubr.bf16.gmra.mrb[0].mxu0 %v1008
      %v1047 = vpop.f32.mrb[0].mxu0
      %v1048 = vadd.f32 0.0, %v1047
      %v1049 = vpop.f32.mrb[0].mxu0
      %v1050 = vpop.f32.mrb[0].mxu0
      %v1051 = vpop.f32.mrb[0].mxu0
      %1052 = vdwg.mxu0
      %v1054 = vsel %vm913, %v908, 0
      %v1057 = vsel %vm917, %v268, 0
      %1059 = vmatprep.subr.bf16.mxu0 0
      %1060 = vmatpush1.bf16.msra.mxu0 %v1057
      %1061 = vmatprep.subr.bf16.mxu0 0
      %1062 = vmatpush1.bf16.msra.mxu0 0
      %1063 = vmatprep.subr.bf16.mxu0 0
      %1064 = vmatpush1.bf16.msra.mxu0 0
      %1065 = vmatprep.subr.bf16.mxu0 0
      %1066 = vmatpush1.bf16.msra.mxu0 0
      %1067 = vmatprep.subr.bf16.mxu0 0
      %1068 = vmatpush1.bf16.msra.mxu0 0
      %1069 = vmatprep.subr.bf16.mxu0 0
      %1070 = vmatpush1.bf16.msra.mxu0 0
      %1071 = vmatprep.subr.bf16.mxu0 0
      %1072 = vmatpush1.bf16.msra.mxu0 0
      %1073 = vmatprep.subr.bf16.mxu0 0
      %1074 = vmatpush1.bf16.msra.mxu0 0
      %1075 = vmatprep.subr.bf16.mxu0 0
      %1076 = vmatpush1.bf16.msra.mxu0 0
      %1077 = vmatprep.subr.bf16.mxu0 0
      %1078 = vmatpush1.bf16.msra.mxu0 0
      %1079 = vmatprep.subr.bf16.mxu0 0
      %1080 = vmatpush1.bf16.msra.mxu0 0
      %1081 = vmatprep.subr.bf16.mxu0 0
      %1082 = vmatpush1.bf16.msra.mxu0 0
      %1083 = vmatprep.subr.bf16.mxu0 0
      %1084 = vmatpush1.bf16.msra.mxu0 0
      %1085 = vmatprep.subr.bf16.mxu0 0
      %1086 = vmatpush1.bf16.msra.mxu0 0
      %1087 = vmatprep.subr.bf16.mxu0 0
      %1088 = vmatpush1.bf16.msra.mxu0 0
      %1089 = vmatprep.subr.bf16.mxu0 0
      %1090 = vmatpush1.bf16.msra.mxu0 0
      %1091 = vmatprep.mubr.bf16.mxu0 0
      %1092 = vmatmul.mubr.bf16.gmra.mrb[0].mxu0 %v1054
      %v1093 = vpop.f32.mrb[0].mxu0
      %v1094 = vadd.f32 0.0, %v1093
      %v1095 = vpop.f32.mrb[0].mxu0
      %v1096 = vpop.f32.mrb[0].mxu0
      %v1097 = vpop.f32.mrb[0].mxu0
      %1098 = vdwg.mxu0
      %v1100 = vsel %vm913, %v909, 0
      %v1103 = vsel %vm917, %v269, 0
      %1105 = vmatprep.subr.bf16.mxu0 0
      %1106 = vmatpush1.bf16.msra.mxu0 %v1103
      %1107 = vmatprep.subr.bf16.mxu0 0
      %1108 = vmatpush1.bf16.msra.mxu0 0
      %1109 = vmatprep.subr.bf16.mxu0 0
      %1110 = vmatpush1.bf16.msra.mxu0 0
      %1111 = vmatprep.subr.bf16.mxu0 0
      %1112 = vmatpush1.bf16.msra.mxu0 0
      %1113 = vmatprep.subr.bf16.mxu0 0
      %1114 = vmatpush1.bf16.msra.mxu0 0
      %1115 = vmatprep.subr.bf16.mxu0 0
      %1116 = vmatpush1.bf16.msra.mxu0 0
      %1117 = vmatprep.subr.bf16.mxu0 0
      %1118 = vmatpush1.bf16.msra.mxu0 0
      %1119 = vmatprep.subr.bf16.mxu0 0
      %1120 = vmatpush1.bf16.msra.mxu0 0
      %1121 = vmatprep.subr.bf16.mxu0 0
      %1122 = vmatpush1.bf16.msra.mxu0 0
      %1123 = vmatprep.subr.bf16.mxu0 0
      %1124 = vmatpush1.bf16.msra.mxu0 0
      %1125 = vmatprep.subr.bf16.mxu0 0
      %1126 = vmatpush1.bf16.msra.mxu0 0
      %1127 = vmatprep.subr.bf16.mxu0 0
      %1128 = vmatpush1.bf16.msra.mxu0 0
      %1129 = vmatprep.subr.bf16.mxu0 0
      %1130 = vmatpush1.bf16.msra.mxu0 0
      %1131 = vmatprep.subr.bf16.mxu0 0
      %1132 = vmatpush1.bf16.msra.mxu0 0
      %1133 = vmatprep.subr.bf16.mxu0 0
      %1134 = vmatpush1.bf16.msra.mxu0 0
      %1135 = vmatprep.subr.bf16.mxu0 0
      %1136 = vmatpush1.bf16.msra.mxu0 0
      %1137 = vmatprep.mubr.bf16.mxu0 0
      %1138 = vmatmul.mubr.bf16.gmra.mrb[0].mxu0 %v1100
      %v1139 = vpop.f32.mrb[0].mxu0
      %v1140 = vadd.f32 0.0, %v1139
      %v1141 = vpop.f32.mrb[0].mxu0
      %v1142 = vpop.f32.mrb[0].mxu0
      %v1143 = vpop.f32.mrb[0].mxu0
      %1144 = vdwg.mxu0
      %v1146 = vsel %vm913, %v910, 0
      %v1149 = vsel %vm917, %v270, 0
      %1151 = vmatprep.subr.bf16.mxu0 0
      %1152 = vmatpush1.bf16.msra.mxu0 %v1149
      %1153 = vmatprep.subr.bf16.mxu0 0
      %1154 = vmatpush1.bf16.msra.mxu0 0
      %1155 = vmatprep.subr.bf16.mxu0 0
      %1156 = vmatpush1.bf16.msra.mxu0 0
      %1157 = vmatprep.subr.bf16.mxu0 0
      %1158 = vmatpush1.bf16.msra.mxu0 0
      %1159 = vmatprep.subr.bf16.mxu0 0
      %1160 = vmatpush1.bf16.msra.mxu0 0
      %1161 = vmatprep.subr.bf16.mxu0 0
      %1162 = vmatpush1.bf16.msra.mxu0 0
      %1163 = vmatprep.subr.bf16.mxu0 0
      %1164 = vmatpush1.bf16.msra.mxu0 0
      %1165 = vmatprep.subr.bf16.mxu0 0
      %1166 = vmatpush1.bf16.msra.mxu0 0
      %1167 = vmatprep.subr.bf16.mxu0 0
      %1168 = vmatpush1.bf16.msra.mxu0 0
      %1169 = vmatprep.subr.bf16.mxu0 0
      %1170 = vmatpush1.bf16.msra.mxu0 0
      %1171 = vmatprep.subr.bf16.mxu0 0
      %1172 = vmatpush1.bf16.msra.mxu0 0
      %1173 = vmatprep.subr.bf16.mxu0 0
      %1174 = vmatpush1.bf16.msra.mxu0 0
      %1175 = vmatprep.subr.bf16.mxu0 0
      %1176 = vmatpush1.bf16.msra.mxu0 0
      %1177 = vmatprep.subr.bf16.mxu0 0
      %1178 = vmatpush1.bf16.msra.mxu0 0
      %1179 = vmatprep.subr.bf16.mxu0 0
      %1180 = vmatpush1.bf16.msra.mxu0 0
      %1181 = vmatprep.subr.bf16.mxu0 0
      %1182 = vmatpush1.bf16.msra.mxu0 0
      %1183 = vmatprep.mubr.bf16.mxu0 0
      %1184 = vmatmul.mubr.bf16.gmra.mrb[0].mxu0 %v1146
      %v1185 = vpop.f32.mrb[0].mxu0
      %v1186 = vadd.f32 0.0, %v1185
      %v1187 = vpop.f32.mrb[0].mxu0
      %v1188 = vpop.f32.mrb[0].mxu0
      %v1189 = vpop.f32.mrb[0].mxu0
      %1190 = vdwg.mxu0
      %v1192 = vsel %vm913, %v911, 0
      %v1195 = vsel %vm917, %v271, 0
      %1197 = vmatprep.subr.bf16.mxu0 0
      %1198 = vmatpush1.bf16.msra.mxu0 %v1195
      %1199 = vmatprep.subr.bf16.mxu0 0
      %1200 = vmatpush1.bf16.msra.mxu0 0
      %1201 = vmatprep.subr.bf16.mxu0 0
      %1202 = vmatpush1.bf16.msra.mxu0 0
      %1203 = vmatprep.subr.bf16.mxu0 0
      %1204 = vmatpush1.bf16.msra.mxu0 0
      %1205 = vmatprep.subr.bf16.mxu0 0
      %1206 = vmatpush1.bf16.msra.mxu0 0
      %1207 = vmatprep.subr.bf16.mxu0 0
      %1208 = vmatpush1.bf16.msra.mxu0 0
      %1209 = vmatprep.subr.bf16.mxu0 0
      %1210 = vmatpush1.bf16.msra.mxu0 0
      %1211 = vmatprep.subr.bf16.mxu0 0
      %1212 = vmatpush1.bf16.msra.mxu0 0
      %1213 = vmatprep.subr.bf16.mxu0 0
      %1214 = vmatpush1.bf16.msra.mxu0 0
      %1215 = vmatprep.subr.bf16.mxu0 0
      %1216 = vmatpush1.bf16.msra.mxu0 0
      %1217 = vmatprep.subr.bf16.mxu0 0
      %1218 = vmatpush1.bf16.msra.mxu0 0
      %1219 = vmatprep.subr.bf16.mxu0 0
      %1220 = vmatpush1.bf16.msra.mxu0 0
      %1221 = vmatprep.subr.bf16.mxu0 0
      %1222 = vmatpush1.bf16.msra.mxu0 0
      %1223 = vmatprep.subr.bf16.mxu0 0
      %1224 = vmatpush1.bf16.msra.mxu0 0
      %1225 = vmatprep.subr.bf16.mxu0 0
      %1226 = vmatpush1.bf16.msra.mxu0 0
      %1227 = vmatprep.subr.bf16.mxu0 0
      %1228 = vmatpush1.bf16.msra.mxu0 0
      %1229 = vmatprep.mubr.bf16.mxu0 0
      %1230 = vmatmul.mubr.bf16.gmra.mrb[0].mxu0 %v1192
      %v1231 = vpop.f32.mrb[0].mxu0
      %v1232 = vadd.f32 0.0, %v1231
      %v1233 = vpop.f32.mrb[0].mxu0
      %v1234 = vpop.f32.mrb[0].mxu0
      %v1235 = vpop.f32.mrb[0].mxu0
      %1236 = vdwg.mxu0
      %v1238 = vsel %vm913, %v912, 0
      %v1241 = vsel %vm917, %v272, 0
      %1243 = vmatprep.subr.bf16.mxu0 0
      %1244 = vmatpush1.bf16.msra.mxu0 %v1241
      %1245 = vmatprep.subr.bf16.mxu0 0
      %1246 = vmatpush1.bf16.msra.mxu0 0
      %1247 = vmatprep.subr.bf16.mxu0 0
      %1248 = vmatpush1.bf16.msra.mxu0 0
      %1249 = vmatprep.subr.bf16.mxu0 0
      %1250 = vmatpush1.bf16.msra.mxu0 0
      %1251 = vmatprep.subr.bf16.mxu0 0
      %1252 = vmatpush1.bf16.msra.mxu0 0
      %1253 = vmatprep.subr.bf16.mxu0 0
      %1254 = vmatpush1.bf16.msra.mxu0 0
      %1255 = vmatprep.subr.bf16.mxu0 0
      %1256 = vmatpush1.bf16.msra.mxu0 0
      %1257 = vmatprep.subr.bf16.mxu0 0
      %1258 = vmatpush1.bf16.msra.mxu0 0
      %1259 = vmatprep.subr.bf16.mxu0 0
      %1260 = vmatpush1.bf16.msra.mxu0 0
      %1261 = vmatprep.subr.bf16.mxu0 0
      %1262 = vmatpush1.bf16.msra.mxu0 0
      %1263 = vmatprep.subr.bf16.mxu0 0
      %1264 = vmatpush1.bf16.msra.mxu0 0
      %1265 = vmatprep.subr.bf16.mxu0 0
      %1266 = vmatpush1.bf16.msra.mxu0 0
      %1267 = vmatprep.subr.bf16.mxu0 0
      %1268 = vmatpush1.bf16.msra.mxu0 0
      %1269 = vmatprep.subr.bf16.mxu0 0
      %1270 = vmatpush1.bf16.msra.mxu0 0
      %1271 = vmatprep.subr.bf16.mxu0 0
      %1272 = vmatpush1.bf16.msra.mxu0 0
      %1273 = vmatprep.subr.bf16.mxu0 0
      %1274 = vmatpush1.bf16.msra.mxu0 0
      %1275 = vmatprep.mubr.bf16.mxu0 0
      %1276 = vmatmul.mubr.bf16.gmra.mrb[0].mxu0 %v1238
      %v1277 = vpop.f32.mrb[0].mxu0
      %v1278 = vadd.f32 0.0, %v1277
      %v1279 = vpop.f32.mrb[0].mxu0
      %v1280 = vpop.f32.mrb[0].mxu0
      %v1281 = vpop.f32.mrb[0].mxu0
      %1282 = vdwg.mxu0
      %v1291 = vcombine.low %v956, %v1002
      %v1292 = vcombine.low %v1048, %v1094
      %v1293 = vcombine.low %v1140, %v1186
      %v1294 = vcombine.low %v1232, %v1278
      %v1299 = vpack.c.bf16 %v1292, %v1291
      %v1300 = vpack.c.bf16 %v1294, %v1293
      %v1301 = vld [vmem:[%s3] sm:$0xf]
      %v1302 = vld [vmem:[%s3 + $0x4] sm:$0xf]
      %v1303 = vld [vmem:[%s4] sm:$0x1]
      %v1305 = vlaneseq
      %v1306 = vshrl.u32 %v1305, 7
      %v1307 = vsub.s32 0, %v1306
      %v1308 = vrot.slane %v1303, %v1307
      %v1312 = vunpack.c.l.b16 %v1301
      %v1313 = vunpack.c.l.b16 %v1302
      %v1314 = vpack.c.b16 %v1313, %v1312
      %v1317 = vsel %vm330, %v1299, 0
      %v1320 = vsel %vm330, %v1300, 0
      %1322 = vmatprep.subr.bf16.mxu0 0
      %1323 = vmatpush1.bf16.msra.mxu0 %v1314
      %1324 = vmatprep.subr.bf16.mxu0 0
      %1325 = vmatpush1.bf16.msra.mxu0 0
      %1326 = vmatprep.subr.bf16.mxu0 0
      %1327 = vmatpush1.bf16.msra.mxu0 0
      %1328 = vmatprep.subr.bf16.mxu0 0
      %1329 = vmatpush1.bf16.msra.mxu0 0
      %1330 = vmatprep.subr.bf16.mxu0 0
      %1331 = vmatpush1.bf16.msra.mxu0 0
      %1332 = vmatprep.subr.bf16.mxu0 0
      %1333 = vmatpush1.bf16.msra.mxu0 0
      %1334 = vmatprep.subr.bf16.mxu0 0
      %1335 = vmatpush1.bf16.msra.mxu0 0
      %1336 = vmatprep.subr.bf16.mxu0 0
      %1337 = vmatpush1.bf16.msra.mxu0 0
      %1338 = vmatprep.subr.bf16.mxu0 0
      %1339 = vmatpush1.bf16.msra.mxu0 0
      %1340 = vmatprep.subr.bf16.mxu0 0
      %1341 = vmatpush1.bf16.msra.mxu0 0
      %1342 = vmatprep.subr.bf16.mxu0 0
      %1343 = vmatpush1.bf16.msra.mxu0 0
      %1344 = vmatprep.subr.bf16.mxu0 0
      %1345 = vmatpush1.bf16.msra.mxu0 0
      %1346 = vmatprep.subr.bf16.mxu0 0
      %1347 = vmatpush1.bf16.msra.mxu0 0
      %1348 = vmatprep.subr.bf16.mxu0 0
      %1349 = vmatpush1.bf16.msra.mxu0 0
      %1350 = vmatprep.subr.bf16.mxu0 0
      %1351 = vmatpush1.bf16.msra.mxu0 0
      %1352 = vmatprep.subr.bf16.mxu0 0
      %1353 = vmatpush1.bf16.msra.mxu0 0
      %1354 = vmatprep.mubr.bf16.mxu0 0
      %1355 = vmatmul.mubr.bf16.gmra.mrb[0].mxu0 %v1317
      %v1356 = vpop.f32.mrb[0].mxu0
      %v1357 = vadd.f32 %v1308, %v1356
      %v1358 = vpop.f32.mrb[0].mxu0
      %v1359 = vpop.f32.mrb[0].mxu0
      %v1360 = vadd.f32 %v1308, %v1359
      %v1361 = vpop.f32.mrb[0].mxu0
      %1362 = vmatprep.mubr.bf16.mxu0 0
      %1363 = vmatmul.mubr.bf16.gmra.mrb[0].mxu0 %v1320
      %v1364 = vpop.f32.mrb[0].mxu0
      %v1365 = vadd.f32 %v1308, %v1364
      %v1366 = vpop.f32.mrb[0].mxu0
      %v1367 = vpop.f32.mrb[0].mxu0
      %v1368 = vadd.f32 %v1308, %v1367
      %v1369 = vpop.f32.mrb[0].mxu0
      %1370 = vdwg.mxu0
      %v1375 = vcombine.high %v1357, %v1357
      %v1376 = vcombine.high %v1360, %v1360
      %v1377 = vcombine.high %v1365, %v1365
      %v1378 = vcombine.high %v1368, %v1368
      %v1383 = vpack.c.bf16 %v1357, %v1357
      %v1384 = vpack.c.bf16 %v1375, %v1375
      %v1385 = vpack.c.bf16 %v1360, %v1360
      %v1386 = vpack.c.bf16 %v1376, %v1376
      %v1387 = vpack.c.bf16 %v1365, %v1365
      %v1388 = vpack.c.bf16 %v1377, %v1377
      %v1389 = vpack.c.bf16 %v1368, %v1368
      %v1390 = vpack.c.bf16 %v1378, %v1378
      %vm1391 = vcmask 58368
      %1392 = vst.msk [vmem:[%s259] sm:$0x3] %vm1391, %v1383
      %1393 = vst.msk [vmem:[%s259 + $0x2] sm:$0x3] %vm1391, %v1384
      %1394 = vst.msk [vmem:[%s259 + $0x4] sm:$0x3] %vm1391, %v1385
      %1395 = vst.msk [vmem:[%s259 + $0x6] sm:$0x3] %vm1391, %v1386
      %1396 = vst.msk [vmem:[%s259 + $0x8] sm:$0x3] %vm1391, %v1387
      %1397 = vst.msk [vmem:[%s259 + $0xa] sm:$0x3] %vm1391, %v1388
      %1398 = vst.msk [vmem:[%s259 + $0xc] sm:$0x3] %vm1391, %v1389
      %1399 = vst.msk [vmem:[%s259 + $0xe] sm:$0x3] %vm1391, %v1390
      %vm1400 = vcmask 64512
      %v1401 = vsel %vm1400, %v1357, 0.0
      %v1402 = vsel %vm1400, %v1360, 0.0
      %v1403 = vadd.f32 %v1401, %v1402
      %v1404 = vsel %vm1400, %v1365, 0.0
      %v1405 = vadd.f32 %v1403, %v1404
      %v1406 = vsel %vm1400, %v1368, 0.0
      %v1407 = vadd.f32 %v1405, %v1406
      %v1408 = vrot.slane %v1407, 4
      %v1409 = vadd.f32 %v1407, %v1408
      %v1410 = vrot.slane %v1409, 2
      %v1411 = vadd.f32 %v1409, %v1410
      %v1412 = vrot.slane %v1411, 1
      %v1413 = vadd.f32 %v1411, %v1412
      %v1414 = vmul.f32 %v1357, %v1357
      %v1415 = vmul.f32 %v1360, %v1360
      %v1416 = vmul.f32 %v1365, %v1365
      %v1417 = vmul.f32 %v1368, %v1368
      %v1418 = vsel %vm1400, %v1414, 0.0
      %v1419 = vsel %vm1400, %v1415, 0.0
      %v1420 = vadd.f32 %v1418, %v1419
      %v1421 = vsel %vm1400, %v1416, 0.0
      %v1422 = vadd.f32 %v1420, %v1421
      %v1423 = vsel %vm1400, %v1417, 0.0
      %v1424 = vadd.f32 %v1422, %v1423
      %v1425 = vrot.slane %v1424, 4
      %v1426 = vadd.f32 %v1424, %v1425
      %v1427 = vrot.slane %v1426, 2
      %v1428 = vadd.f32 %v1426, %v1427
      %v1429 = vrot.slane %v1428, 1
      %v1430 = vadd.f32 %v1428, %v1429
      %1432 = vrot.lane.b32.xlu0 %v1430, 8
      %v1433 = vpop.permute.xlu0 %1432
      %v1435 = vsel %vm1400, %v1413, %v1433
      %vm1436 = vcmask 122880
      %1437 = vst.msk [vmem:[%s263] sm:$0x1] %vm1436, %v1435
      %s1438 = smul.u32 8, %s18
      %p1439 = scmp.lt.s32.totalorder %s1438, 15
      %s1440 = scalar_select %p1439, %s1438, 15
      %s1441 = smul.addr %s1440, 2
      %s1442 = scalar_lea.vmem %s5, %s1441
      %p1443 = scmp.lt.s32.totalorder %s18, 1
      %s1444 = scalar_select %p1443, %s18, 1
      %s1445 = scalar_lea.vmem %s6, %s1444
      // Predicated region
      $region41: #{mpnn_block_separate_forward.8} parent=39 // pred_check
        %p1446 = pneg %p146
      $region42: #{mpnn_block_separate_forward.8} parent=39 // pred_check_branch
        %1448 = sbr.rel (%p1446) target = $region44
      $region43: #{mpnn_block_separate_forward.8} parent=39 // pred_region
        %s1449 = smul.u32 8, %s18
      $region44: #{mpnn_block_separate_forward.8} parent=39 // pred_fallthru
        _
      // Predicated region
      $region45: #{mpnn_block_separate_forward.8} parent=39 // pred_check
        %p1450 = pneg %p172
      $region46: #{mpnn_block_separate_forward.8} parent=39 // pred_check_branch
        %1452 = sbr.rel (%p1450) target = $region48
      $region47: #{mpnn_block_separate_forward.8} parent=39 // pred_region
        _
      $region48: #{mpnn_block_separate_forward.8} parent=39 // pred_fallthru
        _
    $region40: #{mpnn_block_separate_forward.8} parent=5 // pred_fallthru
      _
    %p1453 = scmp.le.s32.totalorder 2, %s13
    // Predicated region
    $region49: #{mpnn_block_separate_forward.8} parent=5 // pred_check
      %p1454 = pneg %p1453
    $region50: #{mpnn_block_separate_forward.8} parent=5 // pred_check_branch
      %1456 = sbr.rel (%p1454) target = $region52
    $region51: #{mpnn_block_separate_forward.8} parent=5 // pred_region
      %s1457 = ssub.s32 %s13, 2
      // Predicated region
      $region53: #{mpnn_block_separate_forward.8} parent=51 // pred_check
        %p1458 = pneg %p152
      $region54: #{mpnn_block_separate_forward.8} parent=51 // pred_check_branch
        %1460 = sbr.rel (%p1458) target = $region56
      $region55: #{mpnn_block_separate_forward.8} parent=51 // pred_region
        %s1461 = smul.u32 8, %s19
        %p1462 = scmp.lt.s32.totalorder %s1461, 15
        %s1463 = scalar_select %p1462, %s1461, 15
        %s1464 = smul.addr %s1463, 2
        %s1465 = scalar_lea.vmem %s5, %s1464
      $region56: #{mpnn_block_separate_forward.8} parent=51 // pred_fallthru
        _
      // Predicated region
      $region57: #{mpnn_block_separate_forward.8} parent=51 // pred_check
        %p1466 = pneg %p178
      $region58: #{mpnn_block_separate_forward.8} parent=51 // pred_check_branch
        %1468 = sbr.rel (%p1466) target = $region60
      $region59: #{mpnn_block_separate_forward.8} parent=51 // pred_region
        %p1469 = scmp.lt.s32.totalorder %s19, 1
        %s1470 = scalar_select %p1469, %s19, 1
        %s1471 = scalar_lea.vmem %s6, %s1470
      $region60: #{mpnn_block_separate_forward.8} parent=51 // pred_fallthru
        _
    $region52: #{mpnn_block_separate_forward.8} parent=5 // pred_fallthru
      _
  $region6: #{mpnn_block_separate_forward.8} parent=0 // loop_footer
    %s17 = sadd.s32 1, %s13
  $region7: #{mpnn_block_separate_forward.8} parent=0 // loop_footer_branch
    %12 = sbr.rel target = $region3
  $region8: #{mpnn_block_separate_forward.8} parent=0 // loop_exit
    _

</llo_original>
